<compile_context>
chip_gen: v7x
topology: tpu7x:2x2x1
jax: 0.10.0
libtpu: 0.0.40
codegen_flags: <defaults>
</compile_context>

<pallas_src>
import functools

import jax
import jax.numpy as jnp
from jax import lax
from jax.experimental import pallas as pl
from jax.experimental.pallas import tpu as pltpu


def _cross_attn_kernel(x_ref, wq_ref, wkv_ref, wp_ref, bp_ref,
                       sel_ch_ref, sel_hc_ref, o_ref,
                       *, num_heads, scale, compute_dtype):
    TB, N, C = x_ref.shape            # C here is the padded channel count
    H = num_heads
    f32 = jnp.float32

    # ---- Q projection from the CLS rows only (read straight from the ref).
    x_cls = x_ref[:, 0, :]                                             # (TB, C)
    q = jnp.dot(x_cls, wq_ref[...], preferred_element_type=f32) * f32(scale)
    q = q.astype(compute_dtype)                                        # (TB, C)

    # ---- K/V projection: one fused (TB*N, C) @ (C, 2C) MXU matmul.
    x_flat = x_ref[...].reshape(TB * N, C)
    kv = jnp.dot(x_flat, wkv_ref[...], preferred_element_type=f32)     # (TB*N, 2C) f32
    k = kv[:, :C].astype(compute_dtype).reshape(TB, N, C)              # (TB, N, C)
    v = kv[:, C:].astype(compute_dtype).reshape(TB, N, C)              # (TB, N, C)

    # ---- Per-head logits without per-head matmuls:
    #      logits[b, n, h] = sum_c q[b, c] * k[b, n, c] * sel_ch[c, h]
    qk = k * q[:, None, :]                                             # VPU, compute dtype
    logits = jnp.dot(qk.reshape(TB * N, C), sel_ch_ref[...],
                     preferred_element_type=f32).reshape(TB, N, H)     # (TB, N, H) f32

    # ---- Softmax over tokens (axis=1), per sample & head, in f32.
    m = jnp.max(logits, axis=1, keepdims=True)                         # (TB, 1, H)
    p = jnp.exp(logits - m)                                            # (TB, N, H)
    denom = jnp.sum(p, axis=1, keepdims=True)                          # (TB, 1, H)
    attn = p * pl.reciprocal(denom, approx=True)                       # (TB, N, H)
    # attn_drop is identity (p=0.0 / eval mode).

    # ---- Expand attention back to channel lanes, reduce over tokens.
    #      out[b, c] = sum_n attn[b, n, head(c)] * v[b, n, c]
    attn_c = jnp.dot(attn.astype(compute_dtype).reshape(TB * N, H),
                     sel_hc_ref[...],
                     preferred_element_type=f32).reshape(TB, N, C)     # (TB, N, C) f32
    ctx = jnp.sum(attn_c * v, axis=1)                                  # (TB, C) f32

    # ---- Output projection (+ bias).  proj_drop is identity.
    y = jnp.dot(ctx.astype(compute_dtype), wp_ref[...], preferred_element_type=f32)
    o_ref[...] = (y + bp_ref[...]).astype(o_ref.dtype)                 # lane-dense slab


def _round_up(x, m):
    return ((x + m - 1) // m) * m


def _tpu_config():
    """Return (vmem_limit_bytes, tensorcores_per_chip), conservatively."""
    kind = ""
    try:
        kind = jax.devices()[0].device_kind.lower()
    except Exception:
        pass
    num_cores = 2 if "v7" in kind else 1            # v7x: 2 TensorCores / chip
    vmem_phys = None
    try:
        vmem_phys = int(pltpu.get_tpu_info().vmem_capacity_bytes)
    except Exception:
        vmem_phys = None
    if vmem_phys is None:
        # v5e / v6e have 128 MiB per TC, v7x 64 MiB; unknown -> safe lower bound.
        vmem_phys = 64 * 1024 * 1024 if ("v7" in kind or not kind) else 128 * 1024 * 1024
    if vmem_phys <= 64 * 1024 * 1024:               # v7x: leave headroom for Mosaic scratch
        vmem_limit = int(vmem_phys * 0.80)          # ~51 MiB
    else:                                           # v5e / v6e: raise the scoped limit
        vmem_limit = min(int(vmem_phys * 0.85), 112 * 1024 * 1024)
    return vmem_limit, num_cores


def _choose_batch_tile(B, N, C_pad, H, itemsize, out_itemsize, vmem_limit, num_cores):
    """Budget-derived per-step batch tile, rounded to a multiple of 8."""
    per_sample = (
        2 * N * C_pad * itemsize        # x block, double-buffered, compute dtype
        + N * 2 * C_pad * 4             # kv projection result (f32 accumulation)
        + 2 * N * C_pad * itemsize      # k, v in compute dtype
        + N * C_pad * itemsize          # qk
        + N * C_pad * 4                 # attn_c (f32)
        + 4 * N * H * 4                 # logits / softmax temporaries (f32)
        + 2 * C_pad * out_itemsize      # output block, double-buffered
        + 8 * C_pad * 4                 # q / ctx / y rows (f32)
    )
    weight_bytes = (4 * C_pad * C_pad + 2 * C_pad * H) * itemsize + C_pad * 4
    margin = 2 * 1024 * 1024            # Mosaic internal scratch headroom
    budget = max(vmem_limit - weight_bytes - margin, per_sample * 8)
    tb = max(8, (budget // per_sample) // 8 * 8)
    if num_cores >= 2:
        # Keep >= 2 grid steps so both TensorCores get work (v7x).
        tb = min(tb, max(8, _round_up(pl.cdiv(B, 2), 8)))
    if tb >= B:
        return B                        # single big step on 1-TC chips / tiny batches
    return int(tb)


def cross_attention(x, wq, wk, wv, wp, bp, *, num_heads,
                    compute_dtype=jnp.bfloat16):
    """x: (B, N, C); wq/wk/wv/wp: (C, C) stored as (in, out); bp: (1, C)."""
    B, N, C = x.shape
    head_dim = C // num_heads
    scale = head_dim ** (-0.5)
    out_dtype = x.dtype

    # ---- Pad channels to a multiple of 128 (lane-dense stores, aligned slices).
    C_pad = max(128, _round_up(C, 128))
    pc = C_pad - C

    vmem_limit, num_cores = _tpu_config()
    TB = _choose_batch_tile(B, N, C_pad, num_heads,
                            jnp.dtype(compute_dtype).itemsize,
                            jnp.dtype(out_dtype).itemsize,
                            vmem_limit, num_cores)
    num_tiles = pl.cdiv(B, TB)
    B_pad = num_tiles * TB

    # ---- Host-side padding & operand prep (padded channels are exact zeros).
    x_p = jnp.pad(x, ((0, B_pad - B), (0, 0), (0, pc)))
    wq_p = jnp.pad(wq, ((0, pc), (0, pc)))
    wk_p = jnp.pad(wk, ((0, pc), (0, pc)))
    wv_p = jnp.pad(wv, ((0, pc), (0, pc)))
    wp_p = jnp.pad(wp, ((0, pc), (0, pc)))
    bp_p = jnp.pad(bp, ((0, 0), (0, pc)))

    x_c = x_p.astype(compute_dtype)
    wq_c = wq_p.astype(compute_dtype)
    wkv_c = jnp.concatenate([wk_p, wv_p], axis=1).astype(compute_dtype)   # (C_pad, 2*C_pad)
    wp_c = wp_p.astype(compute_dtype)
    bp_f = bp_p.astype(jnp.float32)

    # 0/1 head-selection matrices, built once on the host (zero rows/cols for padding).
    head_of_c = jnp.arange(C) // head_dim                                  # (C,)
    sel = (head_of_c[:, None] == jnp.arange(num_heads)[None, :])           # (C, H) bool
    sel_ch = jnp.pad(sel.astype(compute_dtype), ((0, pc), (0, 0)))         # (C_pad, H)
    sel_hc = sel_ch.T                                                      # (H, C_pad)

    kernel = functools.partial(_cross_attn_kernel, num_heads=num_heads,
                               scale=scale, compute_dtype=compute_dtype)
    args = (x_c, wq_c, wkv_c, wp_c, bp_f, sel_ch, sel_hc)

    def build(const_spec):
        return pl.pallas_call(
            kernel,
            out_shape=jax.ShapeDtypeStruct((B_pad, C_pad), out_dtype),
            grid_spec=pltpu.PrefetchScalarGridSpec(
                num_scalar_prefetch=0,
                grid=(num_tiles,),
                in_specs=[
                    pl.BlockSpec((TB, N, C_pad), lambda b: (b, 0, 0)),     # x (batch tile)
                    const_spec((C_pad, C_pad)),                            # wq
                    const_spec((C_pad, 2 * C_pad)),                        # fused wk|wv
                    const_spec((C_pad, C_pad)),                            # proj weight
                    const_spec((1, C_pad)),                                # proj bias (f32)
                    const_spec((C_pad, num_heads)),                        # head select (C->H)
                    const_spec((num_heads, C_pad)),                        # head expand (H->C)
                ],
                out_specs=pl.BlockSpec((TB, C_pad), lambda b: (b, 0)),     # lane-dense slab
            ),
            compiler_params=pltpu.CompilerParams(
                dimension_semantics=("parallel",),
                vmem_limit_bytes=int(vmem_limit),
            ),
        )

    try:
        # Constants fully resident in VMEM: single buffer, no per-step re-DMA.
        out = build(lambda shape: pl.BlockSpec(memory_space=pltpu.MemorySpace.VMEM))(*args)
    except Exception:
        # Fallback for jax versions without whole-array VMEM operand support:
        # constant-index blocked specs (Pallas skips re-DMA but double-buffers).
        out = build(lambda shape: pl.BlockSpec(shape, lambda b: (0,) * len(shape)))(*args)

    return out[:B, :C].reshape(B, 1, C)


def _reference(x, wq, wk, wv, wp, bp, num_heads):
    """Pure-JAX (f32) replica of the PyTorch forward for verification."""
    B, N, C = x.shape
    hd = C // num_heads
    scale = hd ** (-0.5)
    q = (x[:, 0:1] @ wq).reshape(B, 1, num_heads, hd).transpose(0, 2, 1, 3)
    k = (x @ wk).reshape(B, N, num_heads, hd).transpose(0, 2, 1, 3)
    v = (x @ wv).reshape(B, N, num_heads, hd).transpose(0, 2, 1, 3)
    attn = (q @ jnp.swapaxes(k, -2, -1)) * scale
    attn = jax.nn.softmax(attn, axis=-1)
    out = (attn @ v).transpose(0, 2, 1, 3).reshape(B, 1, C)
    return out @ wp + bp


if __name__ == "__main__":
    B, N, C = 16, 8, 32
    num_heads = 8

    key = jax.random.PRNGKey(0)
    kx, kq, kk, kv, kp, kb = jax.random.split(key, 6)

    x = jax.random.normal(kx, (B, N, C), dtype=jnp.float32)
    # Linear weights stored as (in, out); qkv_bias=False, proj has bias.
    wq = jax.random.normal(kq, (C, C), dtype=jnp.float32) * 0.05
    wk = jax.random.normal(kk, (C, C), dtype=jnp.float32) * 0.05
    wv = jax.random.normal(kv, (C, C), dtype=jnp.float32) * 0.05
    wp = jax.random.normal(kp, (C, C), dtype=jnp.float32) * 0.05
    bp = jax.random.normal(kb, (1, C), dtype=jnp.float32) * 0.05

    ref = _reference(x, wq, wk, wv, wp, bp, num_heads)

    # f32 compute path (tight tolerance; only the approx reciprocal differs).
    out_f32 = cross_attention(x, wq, wk, wv, wp, bp, num_heads=num_heads,
                              compute_dtype=jnp.float32)
    out_f32 = jax.block_until_ready(out_f32)
    assert out_f32.shape == (B, 1, C)
    assert jnp.allclose(out_f32, ref, atol=5e-3, rtol=5e-3), "f32 mismatch vs reference"

    # Default bf16 compute path (f32 accumulation + f32 softmax).
    out_bf16 = cross_attention(x, wq, wk, wv, wp, bp, num_heads=num_heads)
    out_bf16 = jax.block_until_ready(out_bf16)
    assert out_bf16.shape == (B, 1, C)
    assert jnp.allclose(out_bf16, ref, atol=5e-2, rtol=5e-2), "bf16 mismatch vs reference"

    print("KERNEL_OK")
</pallas_src>

<mosaic_0001>
module attributes {stable_mosaic.version = 11 : i64} {
  func.func @_cross_attn_kernel(%arg0: i32, %arg1: memref<16x8x128xf32, #tpu.memory_space<vmem>>, %arg2: memref<128x128xf32, #tpu.memory_space<vmem>>, %arg3: memref<128x256xf32, #tpu.memory_space<vmem>>, %arg4: memref<128x128xf32, #tpu.memory_space<vmem>>, %arg5: memref<1x128xf32, #tpu.memory_space<vmem>>, %arg6: memref<128x8xf32, #tpu.memory_space<vmem>>, %arg7: memref<8x128xf32, #tpu.memory_space<vmem>>, %arg8: memref<16x128xf32, #tpu.memory_space<vmem>>) attributes {dimension_semantics = [#tpu.dimension_semantics<parallel>], iteration_bounds = array<i64: 1>, scalar_prefetch = 0 : i64, scratch_operands = 0 : i64, tpu.core_type = #tpu.core_type<tc>, window_params = [{transform_indices = @transform_0, window_bounds = array<i64: 16, 8, 128>}, {pipeline_mode = #tpu.pipeline_mode<synchronous>, transform_indices = @transform_1, window_bounds = array<i64: 128, 128>}, {pipeline_mode = #tpu.pipeline_mode<synchronous>, transform_indices = @transform_2, window_bounds = array<i64: 128, 256>}, {pipeline_mode = #tpu.pipeline_mode<synchronous>, transform_indices = @transform_3, window_bounds = array<i64: 128, 128>}, {pipeline_mode = #tpu.pipeline_mode<synchronous>, transform_indices = @transform_4, window_bounds = array<i64: 1, 128>}, {pipeline_mode = #tpu.pipeline_mode<synchronous>, transform_indices = @transform_5, window_bounds = array<i64: 128, 8>}, {pipeline_mode = #tpu.pipeline_mode<synchronous>, transform_indices = @transform_6, window_bounds = array<i64: 8, 128>}, {transform_indices = @transform_7, window_bounds = array<i64: 16, 128>}]} {
    %c0 = arith.constant 0 : index
    %c0_0 = arith.constant 0 : index
    %c0_1 = arith.constant 0 : index
    %0 = vector.load %arg1[%c0, %c0_0, %c0_1] : memref<16x8x128xf32, #tpu.memory_space<vmem>>, vector<16x1x128xf32>
    %1 = vector.shape_cast %0 : vector<16x1x128xf32> to vector<16x128xf32>
    %c0_2 = arith.constant 0 : index
    %c0_3 = arith.constant 0 : index
    %2 = vector.load %arg2[%c0_2, %c0_3] : memref<128x128xf32, #tpu.memory_space<vmem>>, vector<128x128xf32>
    %cst = arith.constant dense<0.000000e+00> : vector<16x128xf32>
    %3 = tpu.matmul %1, %2, %cst {dimension_numbers = #tpu.dot_dimension_numbers<[1], [0], [0], [1], [0, 0, 1, 1], [], []>} : vector<16x128xf32>, vector<128x128xf32>, vector<16x128xf32> -> vector<16x128xf32>
    %cst_4 = arith.constant 5.000000e-01 : f32
    %4 = vector.broadcast %cst_4 : f32 to vector<16x128xf32>
    %5 = arith.mulf %3, %4 : vector<16x128xf32>
    %c0_5 = arith.constant 0 : index
    %c0_6 = arith.constant 0 : index
    %c0_7 = arith.constant 0 : index
    %6 = vector.load %arg1[%c0_5, %c0_6, %c0_7] : memref<16x8x128xf32, #tpu.memory_space<vmem>>, vector<16x8x128xf32>
    %7 = vector.shape_cast %6 : vector<16x8x128xf32> to vector<128x128xf32>
    %c0_8 = arith.constant 0 : index
    %c0_9 = arith.constant 0 : index
    %8 = vector.load %arg3[%c0_8, %c0_9] : memref<128x256xf32, #tpu.memory_space<vmem>>, vector<128x256xf32>
    %cst_10 = arith.constant dense<0.000000e+00> : vector<128x256xf32>
    %9 = tpu.matmul %7, %8, %cst_10 {dimension_numbers = #tpu.dot_dimension_numbers<[1], [0], [0], [1], [0, 0, 1, 1], [], []>} : vector<128x128xf32>, vector<128x256xf32>, vector<128x256xf32> -> vector<128x256xf32>
    %10 = vector.extract_strided_slice %9 {offsets = [0, 0], sizes = [128, 128], strides = [1, 1]} : vector<128x256xf32> to vector<128x128xf32>
    %11 = vector.shape_cast %10 : vector<128x128xf32> to vector<16x8x128xf32>
    %12 = vector.extract_strided_slice %9 {offsets = [0, 128], sizes = [128, 128], strides = [1, 1]} : vector<128x256xf32> to vector<128x128xf32>
    %13 = vector.shape_cast %12 : vector<128x128xf32> to vector<16x8x128xf32>
    %14 = vector.shape_cast %5 : vector<16x128xf32> to vector<16x1x128xf32>
    %15 = vector.broadcast %14 : vector<16x1x128xf32> to vector<16x8x128xf32>
    %16 = arith.mulf %11, %15 : vector<16x8x128xf32>
    %17 = vector.shape_cast %16 : vector<16x8x128xf32> to vector<128x128xf32>
    %c0_11 = arith.constant 0 : index
    %c0_12 = arith.constant 0 : index
    %18 = vector.load %arg6[%c0_11, %c0_12] : memref<128x8xf32, #tpu.memory_space<vmem>>, vector<128x8xf32>
    %cst_13 = arith.constant dense<0.000000e+00> : vector<128x8xf32>
    %19 = tpu.matmul %17, %18, %cst_13 {dimension_numbers = #tpu.dot_dimension_numbers<[1], [0], [0], [1], [0, 0, 1, 1], [], []>} : vector<128x128xf32>, vector<128x8xf32>, vector<128x8xf32> -> vector<128x8xf32>
    %20 = vector.shape_cast %19 : vector<128x8xf32> to vector<16x8x8xf32>
    %cst_14 = arith.constant dense<0xFF800000> : vector<16x8xf32>
    %21 = vector.multi_reduction <maximumf>, %20, %cst_14 [1] : vector<16x8x8xf32> to vector<16x8xf32>
    %22 = vector.shape_cast %21 : vector<16x8xf32> to vector<16x1x8xf32>
    %23 = vector.broadcast %22 : vector<16x1x8xf32> to vector<16x8x8xf32>
    %24 = arith.subf %20, %23 : vector<16x8x8xf32>
    %25 = math.exp %24 : vector<16x8x8xf32>
    %cst_15 = arith.constant dense<0.000000e+00> : vector<16x8xf32>
    %26 = vector.multi_reduction <add>, %25, %cst_15 [1] : vector<16x8x8xf32> to vector<16x8xf32>
    %27 = vector.shape_cast %26 : vector<16x8xf32> to vector<16x1x8xf32>
    %28 = tpu.reciprocal %27 {approx = true} : vector<16x1x8xf32> -> vector<16x1x8xf32>
    %29 = vector.broadcast %28 : vector<16x1x8xf32> to vector<16x8x8xf32>
    %30 = arith.mulf %25, %29 : vector<16x8x8xf32>
    %31 = vector.shape_cast %30 : vector<16x8x8xf32> to vector<128x8xf32>
    %c0_16 = arith.constant 0 : index
    %c0_17 = arith.constant 0 : index
    %32 = vector.load %arg7[%c0_16, %c0_17] : memref<8x128xf32, #tpu.memory_space<vmem>>, vector<8x128xf32>
    %cst_18 = arith.constant dense<0.000000e+00> : vector<128x128xf32>
    %33 = tpu.matmul %31, %32, %cst_18 {dimension_numbers = #tpu.dot_dimension_numbers<[1], [0], [0], [1], [0, 0, 1, 1], [], []>} : vector<128x8xf32>, vector<8x128xf32>, vector<128x128xf32> -> vector<128x128xf32>
    %34 = vector.shape_cast %33 : vector<128x128xf32> to vector<16x8x128xf32>
    %35 = arith.mulf %34, %13 : vector<16x8x128xf32>
    %cst_19 = arith.constant dense<0.000000e+00> : vector<16x128xf32>
    %36 = vector.multi_reduction <add>, %35, %cst_19 [1] : vector<16x8x128xf32> to vector<16x128xf32>
    %c0_20 = arith.constant 0 : index
    %c0_21 = arith.constant 0 : index
    %37 = vector.load %arg4[%c0_20, %c0_21] : memref<128x128xf32, #tpu.memory_space<vmem>>, vector<128x128xf32>
    %cst_22 = arith.constant dense<0.000000e+00> : vector<16x128xf32>
    %38 = tpu.matmul %36, %37, %cst_22 {dimension_numbers = #tpu.dot_dimension_numbers<[1], [0], [0], [1], [0, 0, 1, 1], [], []>} : vector<16x128xf32>, vector<128x128xf32>, vector<16x128xf32> -> vector<16x128xf32>
    %c0_23 = arith.constant 0 : index
    %c0_24 = arith.constant 0 : index
    %39 = vector.load %arg5[%c0_23, %c0_24] : memref<1x128xf32, #tpu.memory_space<vmem>>, vector<1x128xf32>
    %40 = vector.broadcast %39 : vector<1x128xf32> to vector<16x128xf32>
    %41 = arith.addf %38, %40 : vector<16x128xf32>
    %c0_25 = arith.constant 0 : index
    %c0_26 = arith.constant 0 : index
    %42 = vector.load %arg8[%c0_25, %c0_26] : memref<16x128xf32, #tpu.memory_space<vmem>>, vector<16x128xf32>
    tpu.vector_store %arg8[%c0_25, %c0_26], %41 {strides = array<i32>} : memref<16x128xf32, #tpu.memory_space<vmem>>, vector<16x128xf32>,
    return
  }
  func.func @transform_0(%arg0: i32) -> (i32, i32, i32) {
    %c0_i32 = arith.constant 0 : i32
    %c0_i32_0 = arith.constant 0 : i32
    %c0_i32_1 = arith.constant 0 : i32
    return %arg0, %c0_i32, %c0_i32_0 : i32, i32, i32
  }
  func.func @transform_1(%arg0: i32) -> (i32, i32) {
    %c0_i32 = arith.constant 0 : i32
    %c0_i32_0 = arith.constant 0 : i32
    %c0_i32_1 = arith.constant 0 : i32
    return %c0_i32, %c0_i32_0 : i32, i32
  }
  func.func @transform_2(%arg0: i32) -> (i32, i32) {
    %c0_i32 = arith.constant 0 : i32
    %c0_i32_0 = arith.constant 0 : i32
    %c0_i32_1 = arith.constant 0 : i32
    return %c0_i32, %c0_i32_0 : i32, i32
  }
  func.func @transform_3(%arg0: i32) -> (i32, i32) {
    %c0_i32 = arith.constant 0 : i32
    %c0_i32_0 = arith.constant 0 : i32
    %c0_i32_1 = arith.constant 0 : i32
    return %c0_i32, %c0_i32_0 : i32, i32
  }
  func.func @transform_4(%arg0: i32) -> (i32, i32) {
    %c0_i32 = arith.constant 0 : i32
    %c0_i32_0 = arith.constant 0 : i32
    %c0_i32_1 = arith.constant 0 : i32
    return %c0_i32, %c0_i32_0 : i32, i32
  }
  func.func @transform_5(%arg0: i32) -> (i32, i32) {
    %c0_i32 = arith.constant 0 : i32
    %c0_i32_0 = arith.constant 0 : i32
    %c0_i32_1 = arith.constant 0 : i32
    return %c0_i32, %c0_i32_0 : i32, i32
  }
  func.func @transform_6(%arg0: i32) -> (i32, i32) {
    %c0_i32 = arith.constant 0 : i32
    %c0_i32_0 = arith.constant 0 : i32
    %c0_i32_1 = arith.constant 0 : i32
    return %c0_i32, %c0_i32_0 : i32, i32
  }
  func.func @transform_7(%arg0: i32) -> (i32, i32) {
    %c0_i32 = arith.constant 0 : i32
    %c0_i32_0 = arith.constant 0 : i32
    return %arg0, %c0_i32 : i32, i32
  }
}

module attributes {stable_mosaic.version = 11 : i64} {
  func.func @_cross_attn_kernel(%arg0: i32, %arg1: memref<16x8x128xf32, #tpu.memory_space<vmem>>, %arg2: memref<128x128xf32, #tpu.memory_space<vmem>>, %arg3: memref<128x256xf32, #tpu.memory_space<vmem>>, %arg4: memref<128x128xf32, #tpu.memory_space<vmem>>, %arg5: memref<1x128xf32, #tpu.memory_space<vmem>>, %arg6: memref<128x8xf32, #tpu.memory_space<vmem>>, %arg7: memref<8x128xf32, #tpu.memory_space<vmem>>, %arg8: memref<16x128xf32, #tpu.memory_space<vmem>>) attributes {dimension_semantics = [#tpu.dimension_semantics<parallel>], iteration_bounds = array<i64: 1>, scalar_prefetch = 0 : i64, scratch_operands = 0 : i64, tpu.core_type = #tpu.core_type<tc>, window_params = [{transform_indices = @transform_0, window_bounds = array<i64: 16, 8, 128>}, {pipeline_mode = #tpu.pipeline_mode<synchronous>, transform_indices = @transform_1, window_bounds = array<i64: 128, 128>}, {pipeline_mode = #tpu.pipeline_mode<synchronous>, transform_indices = @transform_2, window_bounds = array<i64: 128, 256>}, {pipeline_mode = #tpu.pipeline_mode<synchronous>, transform_indices = @transform_3, window_bounds = array<i64: 128, 128>}, {pipeline_mode = #tpu.pipeline_mode<synchronous>, transform_indices = @transform_4, window_bounds = array<i64: 1, 128>}, {pipeline_mode = #tpu.pipeline_mode<synchronous>, transform_indices = @transform_5, window_bounds = array<i64: 128, 8>}, {pipeline_mode = #tpu.pipeline_mode<synchronous>, transform_indices = @transform_6, window_bounds = array<i64: 8, 128>}, {transform_indices = @transform_7, window_bounds = array<i64: 16, 128>}]} {
    %c0 = arith.constant 0 : index
    %c0_0 = arith.constant 0 : index
    %c0_1 = arith.constant 0 : index
    %0 = vector.load %arg1[%c0, %c0_0, %c0_1] : memref<16x8x128xf32, #tpu.memory_space<vmem>>, vector<16x1x128xf32>
    %1 = vector.shape_cast %0 : vector<16x1x128xf32> to vector<16x128xf32>
    %c0_2 = arith.constant 0 : index
    %c0_3 = arith.constant 0 : index
    %2 = vector.load %arg2[%c0_2, %c0_3] : memref<128x128xf32, #tpu.memory_space<vmem>>, vector<128x128xf32>
    %cst = arith.constant dense<0.000000e+00> : vector<16x128xf32>
    %3 = tpu.matmul %1, %2, %cst {dimension_numbers = #tpu.dot_dimension_numbers<[1], [0], [0], [1], [0, 0, 1, 1], [], []>} : vector<16x128xf32>, vector<128x128xf32>, vector<16x128xf32> -> vector<16x128xf32>
    %cst_4 = arith.constant 5.000000e-01 : f32
    %4 = vector.broadcast %cst_4 : f32 to vector<16x128xf32>
    %5 = arith.mulf %3, %4 : vector<16x128xf32>
    %c0_5 = arith.constant 0 : index
    %c0_6 = arith.constant 0 : index
    %c0_7 = arith.constant 0 : index
    %6 = vector.load %arg1[%c0_5, %c0_6, %c0_7] : memref<16x8x128xf32, #tpu.memory_space<vmem>>, vector<16x8x128xf32>
    %7 = vector.shape_cast %6 : vector<16x8x128xf32> to vector<128x128xf32>
    %c0_8 = arith.constant 0 : index
    %c0_9 = arith.constant 0 : index
    %8 = vector.load %arg3[%c0_8, %c0_9] : memref<128x256xf32, #tpu.memory_space<vmem>>, vector<128x256xf32>
    %cst_10 = arith.constant dense<0.000000e+00> : vector<128x256xf32>
    %9 = tpu.matmul %7, %8, %cst_10 {dimension_numbers = #tpu.dot_dimension_numbers<[1], [0], [0], [1], [0, 0, 1, 1], [], []>} : vector<128x128xf32>, vector<128x256xf32>, vector<128x256xf32> -> vector<128x256xf32>
    %10 = vector.extract_strided_slice %9 {offsets = [0, 0], sizes = [128, 128], strides = [1, 1]} : vector<128x256xf32> to vector<128x128xf32>
    %11 = vector.shape_cast %10 : vector<128x128xf32> to vector<16x8x128xf32>
    %12 = vector.extract_strided_slice %9 {offsets = [0, 128], sizes = [128, 128], strides = [1, 1]} : vector<128x256xf32> to vector<128x128xf32>
    %13 = vector.shape_cast %12 : vector<128x128xf32> to vector<16x8x128xf32>
    %14 = vector.shape_cast %5 : vector<16x128xf32> to vector<16x1x128xf32>
    %15 = vector.broadcast %14 : vector<16x1x128xf32> to vector<16x8x128xf32>
    %16 = arith.mulf %11, %15 : vector<16x8x128xf32>
    %17 = vector.shape_cast %16 : vector<16x8x128xf32> to vector<128x128xf32>
    %c0_11 = arith.constant 0 : index
    %c0_12 = arith.constant 0 : index
    %18 = vector.load %arg6[%c0_11, %c0_12] : memref<128x8xf32, #tpu.memory_space<vmem>>, vector<128x8xf32>
    %cst_13 = arith.constant dense<0.000000e+00> : vector<128x8xf32>
    %19 = tpu.matmul %17, %18, %cst_13 {dimension_numbers = #tpu.dot_dimension_numbers<[1], [0], [0], [1], [0, 0, 1, 1], [], []>} : vector<128x128xf32>, vector<128x8xf32>, vector<128x8xf32> -> vector<128x8xf32>
    %20 = vector.shape_cast %19 : vector<128x8xf32> to vector<16x8x8xf32>
    %cst_14 = arith.constant dense<0xFF800000> : vector<16x8xf32>
    %21 = vector.multi_reduction <maximumf>, %20, %cst_14 [1] : vector<16x8x8xf32> to vector<16x8xf32>
    %22 = vector.shape_cast %21 : vector<16x8xf32> to vector<16x1x8xf32>
    %23 = vector.broadcast %22 : vector<16x1x8xf32> to vector<16x8x8xf32>
    %24 = arith.subf %20, %23 : vector<16x8x8xf32>
    %25 = math.exp %24 : vector<16x8x8xf32>
    %cst_15 = arith.constant dense<0.000000e+00> : vector<16x8xf32>
    %26 = vector.multi_reduction <add>, %25, %cst_15 [1] : vector<16x8x8xf32> to vector<16x8xf32>
    %27 = vector.shape_cast %26 : vector<16x8xf32> to vector<16x1x8xf32>
    %28 = tpu.reciprocal %27 {approx = true} : vector<16x1x8xf32> -> vector<16x1x8xf32>
    %29 = vector.broadcast %28 : vector<16x1x8xf32> to vector<16x8x8xf32>
    %30 = arith.mulf %25, %29 : vector<16x8x8xf32>
    %31 = vector.shape_cast %30 : vector<16x8x8xf32> to vector<128x8xf32>
    %c0_16 = arith.constant 0 : index
    %c0_17 = arith.constant 0 : index
    %32 = vector.load %arg7[%c0_16, %c0_17] : memref<8x128xf32, #tpu.memory_space<vmem>>, vector<8x128xf32>
    %cst_18 = arith.constant dense<0.000000e+00> : vector<128x128xf32>
    %33 = tpu.matmul %31, %32, %cst_18 {dimension_numbers = #tpu.dot_dimension_numbers<[1], [0], [0], [1], [0, 0, 1, 1], [], []>} : vector<128x8xf32>, vector<8x128xf32>, vector<128x128xf32> -> vector<128x128xf32>
    %34 = vector.shape_cast %33 : vector<128x128xf32> to vector<16x8x128xf32>
    %35 = arith.mulf %34, %13 : vector<16x8x128xf32>
    %cst_19 = arith.constant dense<0.000000e+00> : vector<16x128xf32>
    %36 = vector.multi_reduction <add>, %35, %cst_19 [1] : vector<16x8x128xf32> to vector<16x128xf32>
    %c0_20 = arith.constant 0 : index
    %c0_21 = arith.constant 0 : index
    %37 = vector.load %arg4[%c0_20, %c0_21] : memref<128x128xf32, #tpu.memory_space<vmem>>, vector<128x128xf32>
    %cst_22 = arith.constant dense<0.000000e+00> : vector<16x128xf32>
    %38 = tpu.matmul %36, %37, %cst_22 {dimension_numbers = #tpu.dot_dimension_numbers<[1], [0], [0], [1], [0, 0, 1, 1], [], []>} : vector<16x128xf32>, vector<128x128xf32>, vector<16x128xf32> -> vector<16x128xf32>
    %c0_23 = arith.constant 0 : index
    %c0_24 = arith.constant 0 : index
    %39 = vector.load %arg5[%c0_23, %c0_24] : memref<1x128xf32, #tpu.memory_space<vmem>>, vector<1x128xf32>
    %40 = vector.broadcast %39 : vector<1x128xf32> to vector<16x128xf32>
    %41 = arith.addf %38, %40 : vector<16x128xf32>
    %c0_25 = arith.constant 0 : index
    %c0_26 = arith.constant 0 : index
    %42 = vector.load %arg8[%c0_25, %c0_26] : memref<16x128xf32, #tpu.memory_space<vmem>>, vector<16x128xf32>
    tpu.vector_store %arg8[%c0_25, %c0_26], %41 {strides = array<i32>} : memref<16x128xf32, #tpu.memory_space<vmem>>, vector<16x128xf32>,
    return
  }
  func.func @transform_0(%arg0: i32) -> (i32, i32, i32) {
    %c0_i32 = arith.constant 0 : i32
    %c0_i32_0 = arith.constant 0 : i32
    %c0_i32_1 = arith.constant 0 : i32
    return %arg0, %c0_i32, %c0_i32_0 : i32, i32, i32
  }
  func.func @transform_1(%arg0: i32) -> (i32, i32) {
    %c0_i32 = arith.constant 0 : i32
    %c0_i32_0 = arith.constant 0 : i32
    %c0_i32_1 = arith.constant 0 : i32
    return %c0_i32, %c0_i32_0 : i32, i32
  }
  func.func @transform_2(%arg0: i32) -> (i32, i32) {
    %c0_i32 = arith.constant 0 : i32
    %c0_i32_0 = arith.constant 0 : i32
    %c0_i32_1 = arith.constant 0 : i32
    return %c0_i32, %c0_i32_0 : i32, i32
  }
  func.func @transform_3(%arg0: i32) -> (i32, i32) {
    %c0_i32 = arith.constant 0 : i32
    %c0_i32_0 = arith.constant 0 : i32
    %c0_i32_1 = arith.constant 0 : i32
    return %c0_i32, %c0_i32_0 : i32, i32
  }
  func.func @transform_4(%arg0: i32) -> (i32, i32) {
    %c0_i32 = arith.constant 0 : i32
    %c0_i32_0 = arith.constant 0 : i32
    %c0_i32_1 = arith.constant 0 : i32
    return %c0_i32, %c0_i32_0 : i32, i32
  }
  func.func @transform_5(%arg0: i32) -> (i32, i32) {
    %c0_i32 = arith.constant 0 : i32
    %c0_i32_0 = arith.constant 0 : i32
    %c0_i32_1 = arith.constant 0 : i32
    return %c0_i32, %c0_i32_0 : i32, i32
  }
  func.func @transform_6(%arg0: i32) -> (i32, i32) {
    %c0_i32 = arith.constant 0 : i32
    %c0_i32_0 = arith.constant 0 : i32
    %c0_i32_1 = arith.constant 0 : i32
    return %c0_i32, %c0_i32_0 : i32, i32
  }
  func.func @transform_7(%arg0: i32) -> (i32, i32) {
    %c0_i32 = arith.constant 0 : i32
    %c0_i32_0 = arith.constant 0 : i32
    return %arg0, %c0_i32 : i32, i32
  }
}

</mosaic_0001>

<llo_original>
// kernel: tpu_custom_call.1
$region0: #{tpu_custom_call.1}
  #allocation0 [shape = 'u32[]', space=smem, size = 0x4, offset = 0x4, fixed_abs, tag = 'smem constant byte address 0x4 - core index']
  #allocation1 [shape = 'u32[144,128]{1,0:T(1,128)}', space=vmem, size = 0x12000, scoped, tag = 'internal scratch']
  %s0 = inlined_call_operand.hbm [shape: f32[16,8,128], index: 0, kind: input, shape index: {}]
  %s1 = inlined_call_operand.hbm [shape: f32[128,128], index: 1, kind: input, shape index: {}]
  %s2 = inlined_call_operand.hbm [shape: f32[128,256], index: 2, kind: input, shape index: {}]
  %s3 = inlined_call_operand.hbm [shape: f32[128,128], index: 3, kind: input, shape index: {}]
  %s4 = inlined_call_operand.hbm [shape: f32[1,128], index: 4, kind: input, shape index: {}]
  %s5 = inlined_call_operand.hbm [shape: f32[128,8], index: 5, kind: input, shape index: {}]
  %s6 = inlined_call_operand.hbm [shape: f32[8,128], index: 6, kind: input, shape index: {}]
  %s7 = inlined_call_operand.hbm [shape: f32[16,128], index: 7, kind: output, shape index: {}]
  %s8 = sld [smem:[#allocation0]]
  $region66: #{tpu_custom_call.1} parent=0
    _
  %s10 = ssub.s32 1, %s8
  %s11 = scalar_select 0, %s10, %s8
  $region1: #{tpu_custom_call.1} parent=0
    #allocation2 [shape = 'u8[65536]{0}', space=vmem, size = 0x10000, scoped, tag = 'input window, operand 0, single buffered']
    #allocation3 [shape = 's32[1]{0}', space=sflag, size = 0x4, scoped, tag = 'scoped memory for tpu_custom_call.1']
    #allocation4 [shape = 's32[1]{0}', space=sflag, size = 0x4, scoped, tag = 'scoped memory for tpu_custom_call.1']
    #allocation5 [shape = 'u8[65536]{0}', space=vmem, size = 0x10000, scoped, tag = 'input window, operand 1, single buffered']
    #allocation6 [shape = 's32[1]{0}', space=sflag, size = 0x4, scoped, tag = 'scoped memory for tpu_custom_call.1']
    #allocation7 [shape = 'u8[131072]{0}', space=vmem, size = 0x20000, scoped, tag = 'input window, operand 2, single buffered']
    #allocation8 [shape = 'u8[65536]{0}', space=vmem, size = 0x10000, scoped, tag = 'input window, operand 3, single buffered']
    #allocation9 [shape = 's32[1]{0}', space=sflag, size = 0x4, scoped, tag = 'scoped memory for tpu_custom_call.1']
    #allocation10 [shape = 'u8[512]{0}', space=vmem, size = 0x400, scoped, tag = 'input window, operand 4, single buffered']
    #allocation11 [shape = 'u8[65536]{0}', space=vmem, size = 0x10000, scoped, tag = 'input window, operand 5, single buffered']
    #allocation12 [shape = 's32[1]{0}', space=sflag, size = 0x4, scoped, tag = 'scoped memory for tpu_custom_call.1']
    #allocation13 [shape = 'u8[4096]{0}', space=vmem, size = 0x1000, scoped, tag = 'input window, operand 6, single buffered']
    #allocation14 [shape = 'u8[8192]{0}', space=vmem, size = 0x2000, scoped, tag = 'output window, operand 0, single buffered']
    %12 = vsyncpa [#allocation3], 0
    %13 = vsyncpa [#allocation6], 0
    %14 = vsyncpa [#allocation9], 0
    %15 = vsyncpa [#allocation12], 0
    %16 = vsyncpa [#allocation4], 0
    // Predicated region
    $region2: #{tpu_custom_call.1} parent=1 // pred_check
      _
    $region3: #{tpu_custom_call.1} parent=1 // pred_check_branch
      %18 = sbr.rel (0) target = $region5
    $region4: #{tpu_custom_call.1} parent=1 // pred_region
      %s20 = ssub.s32 2048, 2048
      %21 = vsyncadd [#allocation3], %s20
      %s22 = sshll.u32 [#allocation2], 4
      %s23 = int_to_ptr.vmem [resolvable:$true] %s22
      %28 = dma.hbm_to_vmem [thread:$0]  %s0, 2048, %s23, [#allocation3], 128, 128, 8
    $region5: #{tpu_custom_call.1} parent=1 // pred_fallthru
      _
    // Predicated region
    $region6: #{tpu_custom_call.1} parent=1 // pred_check
      _
    $region7: #{tpu_custom_call.1} parent=1 // pred_check_branch
      %30 = sbr.rel (0) target = $region9
    $region8: #{tpu_custom_call.1} parent=1 // pred_region
      %s32 = ssub.s32 2048, 2048
      %33 = vsyncadd [#allocation6], %s32
      %s34 = sshll.u32 [#allocation5], 4
      %s35 = int_to_ptr.vmem [resolvable:$true] %s34
      %40 = dma.hbm_to_vmem [thread:$0]  %s1, 2048, %s35, [#allocation6], 128, 128, 8
    $region9: #{tpu_custom_call.1} parent=1 // pred_fallthru
      _
    // Predicated region
    $region10: #{tpu_custom_call.1} parent=1 // pred_check
      _
    $region11: #{tpu_custom_call.1} parent=1 // pred_check_branch
      %42 = sbr.rel (0) target = $region13
    $region12: #{tpu_custom_call.1} parent=1 // pred_region
      %s44 = ssub.s32 4096, 4096
      %45 = vsyncadd [#allocation6], %s44
      %s46 = sshll.u32 [#allocation7], 4
      %s47 = int_to_ptr.vmem [resolvable:$true] %s46
      %52 = dma.hbm_to_vmem [thread:$0]  %s2, 4096, %s47, [#allocation6], 256, 256, 16
    $region13: #{tpu_custom_call.1} parent=1 // pred_fallthru
      _
    // Predicated region
    $region14: #{tpu_custom_call.1} parent=1 // pred_check
      _
    $region15: #{tpu_custom_call.1} parent=1 // pred_check_branch
      %54 = sbr.rel (0) target = $region17
    $region16: #{tpu_custom_call.1} parent=1 // pred_region
      %s56 = ssub.s32 2048, 2048
      %57 = vsyncadd [#allocation9], %s56
      %s58 = sshll.u32 [#allocation8], 4
      %s59 = int_to_ptr.vmem [resolvable:$true] %s58
      %64 = dma.hbm_to_vmem [thread:$0]  %s3, 2048, %s59, [#allocation9], 128, 128, 8
    $region17: #{tpu_custom_call.1} parent=1 // pred_fallthru
      _
    // Predicated region
    $region18: #{tpu_custom_call.1} parent=1 // pred_check
      _
    $region19: #{tpu_custom_call.1} parent=1 // pred_check_branch
      %66 = sbr.rel (0) target = $region21
    $region20: #{tpu_custom_call.1} parent=1 // pred_region
      %s68 = ssub.s32 16, 16
      %69 = vsyncadd [#allocation9], %s68
      %s71 = sshll.u32 [#allocation10], 4
      %s72 = int_to_ptr.vmem [resolvable:$true] %s71
      %74 = dma.hbm_to_vmem [thread:$0]  %s4, 16, %s72, [#allocation9]
    $region21: #{tpu_custom_call.1} parent=1 // pred_fallthru
      _
    // Predicated region
    $region22: #{tpu_custom_call.1} parent=1 // pred_check
      _
    $region23: #{tpu_custom_call.1} parent=1 // pred_check_branch
      %76 = sbr.rel (0) target = $region25
    $region24: #{tpu_custom_call.1} parent=1 // pred_region
      %s78 = ssub.s32 2048, 2048
      %79 = vsyncadd [#allocation12], %s78
      %s80 = sshll.u32 [#allocation11], 4
      %s81 = int_to_ptr.vmem [resolvable:$true] %s80
      %86 = dma.hbm_to_vmem [thread:$0]  %s5, 2048, %s81, [#allocation12], 128, 128, 8
    $region25: #{tpu_custom_call.1} parent=1 // pred_fallthru
      _
    // Predicated region
    $region26: #{tpu_custom_call.1} parent=1 // pred_check
      _
    $region27: #{tpu_custom_call.1} parent=1 // pred_check_branch
      %88 = sbr.rel (0) target = $region29
    $region28: #{tpu_custom_call.1} parent=1 // pred_region
      %s90 = ssub.s32 128, 128
      %91 = vsyncadd [#allocation12], %s90
      %s93 = sshll.u32 [#allocation13], 4
      %s94 = int_to_ptr.vmem [resolvable:$true] %s93
      %96 = dma.hbm_to_vmem [thread:$0]  %s6, 128, %s94, [#allocation12]
    $region29: #{tpu_custom_call.1} parent=1 // pred_fallthru
      _
    // Predicated region
    $region30: #{tpu_custom_call.1} parent=1 // pred_check
      _
    $region31: #{tpu_custom_call.1} parent=1 // pred_check_branch
      %98 = sbr.rel (0) target = $region33
    $region32: #{tpu_custom_call.1} parent=1 // pred_region
      %99 = dma.done [#allocation3], 2048
    $region33: #{tpu_custom_call.1} parent=1 // pred_fallthru
      _
    // Predicated region
    $region34: #{tpu_custom_call.1} parent=1 // pred_check
      _
    $region35: #{tpu_custom_call.1} parent=1 // pred_check_branch
      %101 = sbr.rel (0) target = $region37
    $region36: #{tpu_custom_call.1} parent=1 // pred_region
      %102 = dma.done [#allocation6], 2048
    $region37: #{tpu_custom_call.1} parent=1 // pred_fallthru
      _
    // Predicated region
    $region38: #{tpu_custom_call.1} parent=1 // pred_check
      _
    $region39: #{tpu_custom_call.1} parent=1 // pred_check_branch
      %104 = sbr.rel (0) target = $region41
    $region40: #{tpu_custom_call.1} parent=1 // pred_region
      %105 = dma.done [#allocation6], 4096
    $region41: #{tpu_custom_call.1} parent=1 // pred_fallthru
      _
    // Predicated region
    $region42: #{tpu_custom_call.1} parent=1 // pred_check
      _
    $region43: #{tpu_custom_call.1} parent=1 // pred_check_branch
      %107 = sbr.rel (0) target = $region45
    $region44: #{tpu_custom_call.1} parent=1 // pred_region
      %108 = dma.done [#allocation9], 2048
    $region45: #{tpu_custom_call.1} parent=1 // pred_fallthru
      _
    // Predicated region
    $region46: #{tpu_custom_call.1} parent=1 // pred_check
      _
    $region47: #{tpu_custom_call.1} parent=1 // pred_check_branch
      %110 = sbr.rel (0) target = $region49
    $region48: #{tpu_custom_call.1} parent=1 // pred_region
      %111 = dma.done [#allocation9], 16
    $region49: #{tpu_custom_call.1} parent=1 // pred_fallthru
      _
    // Predicated region
    $region50: #{tpu_custom_call.1} parent=1 // pred_check
      _
    $region51: #{tpu_custom_call.1} parent=1 // pred_check_branch
      %113 = sbr.rel (0) target = $region53
    $region52: #{tpu_custom_call.1} parent=1 // pred_region
      %114 = dma.done [#allocation12], 2048
    $region53: #{tpu_custom_call.1} parent=1 // pred_fallthru
      _
    // Predicated region
    $region54: #{tpu_custom_call.1} parent=1 // pred_check
      _
    $region55: #{tpu_custom_call.1} parent=1 // pred_check_branch
      %116 = sbr.rel (0) target = $region57
    $region56: #{tpu_custom_call.1} parent=1 // pred_region
      %117 = dma.done [#allocation12], 128
    $region57: #{tpu_custom_call.1} parent=1 // pred_fallthru
      _
    %v118 = vld [vmem:[#allocation2] sm:$0x1]
    %v119 = vld [vmem:[#allocation2 + $0x8] sm:$0x1]
    %v120 = vld [vmem:[#allocation2 + $0x10] sm:$0x1]
    %v121 = vld [vmem:[#allocation2 + $0x18] sm:$0x1]
    %v122 = vld [vmem:[#allocation2 + $0x20] sm:$0x1]
    %v123 = vld [vmem:[#allocation2 + $0x28] sm:$0x1]
    %v124 = vld [vmem:[#allocation2 + $0x30] sm:$0x1]
    %v125 = vld [vmem:[#allocation2 + $0x38] sm:$0x1]
    %v126 = vld [vmem:[#allocation2 + $0x40] sm:$0x1]
    %v127 = vld [vmem:[#allocation2 + $0x48] sm:$0x1]
    %v128 = vld [vmem:[#allocation2 + $0x50] sm:$0x1]
    %v129 = vld [vmem:[#allocation2 + $0x58] sm:$0x1]
    %v130 = vld [vmem:[#allocation2 + $0x60] sm:$0x1]
    %v131 = vld [vmem:[#allocation2 + $0x68] sm:$0x1]
    %v132 = vld [vmem:[#allocation2 + $0x70] sm:$0x1]
    %v133 = vld [vmem:[#allocation2 + $0x78] sm:$0x1]
    %v134 = vld [vmem:[#allocation5] sm:$0xff]
    %v135 = vld [vmem:[#allocation5 + $0x8] sm:$0xff]
    %v136 = vld [vmem:[#allocation5 + $0x10] sm:$0xff]
    %v137 = vld [vmem:[#allocation5 + $0x18] sm:$0xff]
    %v138 = vld [vmem:[#allocation5 + $0x20] sm:$0xff]
    %v139 = vld [vmem:[#allocation5 + $0x28] sm:$0xff]
    %v140 = vld [vmem:[#allocation5 + $0x30] sm:$0xff]
    %v141 = vld [vmem:[#allocation5 + $0x38] sm:$0xff]
    %v142 = vld [vmem:[#allocation5 + $0x40] sm:$0xff]
    %v143 = vld [vmem:[#allocation5 + $0x48] sm:$0xff]
    %v144 = vld [vmem:[#allocation5 + $0x50] sm:$0xff]
    %v145 = vld [vmem:[#allocation5 + $0x58] sm:$0xff]
    %v146 = vld [vmem:[#allocation5 + $0x60] sm:$0xff]
    %v147 = vld [vmem:[#allocation5 + $0x68] sm:$0xff]
    %v148 = vld [vmem:[#allocation5 + $0x70] sm:$0xff]
    %v149 = vld [vmem:[#allocation5 + $0x78] sm:$0xff]
    %v166 = vrot.slane %v119, 7
    %vm167 = vcmask 1041409
    %v168 = vsel %vm167, %v166, %v118
    %v169 = vrot.slane %v120, 6
    %vm170 = vcmask 1042434
    %v171 = vsel %vm170, %v169, %v168
    %v172 = vrot.slane %v121, 5
    %vm173 = vcmask 1043459
    %v174 = vsel %vm173, %v172, %v171
    %v175 = vrot.slane %v122, 4
    %vm176 = vcmask 1044484
    %v177 = vsel %vm176, %v175, %v174
    %v178 = vrot.slane %v123, 3
    %vm179 = vcmask 1045509
    %v180 = vsel %vm179, %v178, %v177
    %v181 = vrot.slane %v124, 2
    %vm182 = vcmask 1046534
    %v183 = vsel %vm182, %v181, %v180
    %v184 = vrot.slane %v125, 1
    %vm185 = vcmask 1047559
    %v186 = vsel %vm185, %v184, %v183
    %v187 = vrot.slane %v127, 7
    %v188 = vsel %vm167, %v187, %v126
    %v189 = vrot.slane %v128, 6
    %v190 = vsel %vm170, %v189, %v188
    %v191 = vrot.slane %v129, 5
    %v192 = vsel %vm173, %v191, %v190
    %v193 = vrot.slane %v130, 4
    %v194 = vsel %vm176, %v193, %v192
    %v195 = vrot.slane %v131, 3
    %v196 = vsel %vm179, %v195, %v194
    %v197 = vrot.slane %v132, 2
    %v198 = vsel %vm182, %v197, %v196
    %v199 = vrot.slane %v133, 1
    %v200 = vsel %vm185, %v199, %v198
    %203 = vmatprep.subr.mxu0 0.0
    %204 = vmatpush1.msra.mxu0 %v134
    %205 = vmatprep.subr.mxu0 0.0
    %206 = vmatpush1.msra.mxu0 %v135
    %207 = vmatprep.subr.mxu0 0.0
    %208 = vmatpush1.msra.mxu0 %v136
    %209 = vmatprep.subr.mxu0 0.0
    %210 = vmatpush1.msra.mxu0 %v137
    %211 = vmatprep.subr.mxu0 0.0
    %212 = vmatpush1.msra.mxu0 %v138
    %213 = vmatprep.subr.mxu0 0.0
    %214 = vmatpush1.msra.mxu0 %v139
    %215 = vmatprep.subr.mxu0 0.0
    %216 = vmatpush1.msra.mxu0 %v140
    %217 = vmatprep.subr.mxu0 0.0
    %218 = vmatpush1.msra.mxu0 %v141
    %219 = vmatprep.subr.mxu0 0.0
    %220 = vmatpush1.msra.mxu0 %v142
    %221 = vmatprep.subr.mxu0 0.0
    %222 = vmatpush1.msra.mxu0 %v143
    %223 = vmatprep.subr.mxu0 0.0
    %224 = vmatpush1.msra.mxu0 %v144
    %225 = vmatprep.subr.mxu0 0.0
    %226 = vmatpush1.msra.mxu0 %v145
    %227 = vmatprep.subr.mxu0 0.0
    %228 = vmatpush1.msra.mxu0 %v146
    %229 = vmatprep.subr.mxu0 0.0
    %230 = vmatpush1.msra.mxu0 %v147
    %231 = vmatprep.subr.mxu0 0.0
    %232 = vmatpush1.msra.mxu0 %v148
    %233 = vmatprep.subr.mxu0 0.0
    %234 = vmatpush1.msra.mxu0 %v149
    %235 = vmatprep.subr.mxu0 0.0
    %236 = vmatpush1.msra.mxu0 0.0
    %237 = vmatprep.subr.mxu0 0.0
    %238 = vmatpush1.msra.mxu0 0.0
    %239 = vmatprep.subr.mxu0 0.0
    %240 = vmatpush1.msra.mxu0 0.0
    %241 = vmatprep.subr.mxu0 0.0
    %242 = vmatpush1.msra.mxu0 0.0
    %243 = vmatprep.subr.mxu0 0.0
    %244 = vmatpush1.msra.mxu0 0.0
    %245 = vmatprep.subr.mxu0 0.0
    %246 = vmatpush1.msra.mxu0 0.0
    %247 = vmatprep.subr.mxu0 0.0
    %248 = vmatpush1.msra.mxu0 0.0
    %249 = vmatprep.subr.mxu0 0.0
    %250 = vmatpush1.msra.mxu0 0.0
    %251 = vmatprep.subr.mxu0 0.0
    %252 = vmatpush1.msra.mxu0 0.0
    %253 = vmatprep.subr.mxu0 0.0
    %254 = vmatpush1.msra.mxu0 0.0
    %255 = vmatprep.subr.mxu0 0.0
    %256 = vmatpush1.msra.mxu0 0.0
    %257 = vmatprep.subr.mxu0 0.0
    %258 = vmatpush1.msra.mxu0 0.0
    %259 = vmatprep.subr.mxu0 0.0
    %260 = vmatpush1.msra.mxu0 0.0
    %261 = vmatprep.subr.mxu0 0.0
    %262 = vmatpush1.msra.mxu0 0.0
    %263 = vmatprep.subr.mxu0 0.0
    %264 = vmatpush1.msra.mxu0 0.0
    %265 = vmatprep.subr.mxu0 0.0
    %266 = vmatpush1.msra.mxu0 0.0
    %267 = vmatprep.mubr.f32.mxu0 0.0
    %268 = vmatmul.mubr.f32.gmra.mrb[0].mxu0 %v186
    %v269 = vpop.f32.mrb[0].mxu0
    %v270 = vadd.f32 0.0, %v269
    %v271 = vpop.f32.mrb[0].mxu0
    %272 = vmatprep.mubr.f32.mxu0 0.0
    %273 = vmatmul.mubr.f32.gmra.mrb[0].mxu0 %v200
    %v274 = vpop.f32.mrb[0].mxu0
    %v275 = vadd.f32 0.0, %v274
    %v276 = vpop.f32.mrb[0].mxu0
    %277 = vdwg.mxu0
    %v278 = vmul.f32 %v270, 0.5
    %v279 = vmul.f32 %v275, 0.5
    %v280 = vld [vmem:[#allocation2] sm:$0xff]
    %v281 = vld [vmem:[#allocation2 + $0x8] sm:$0xff]
    %v282 = vld [vmem:[#allocation2 + $0x10] sm:$0xff]
    %v283 = vld [vmem:[#allocation2 + $0x18] sm:$0xff]
    %v284 = vld [vmem:[#allocation2 + $0x20] sm:$0xff]
    %v285 = vld [vmem:[#allocation2 + $0x28] sm:$0xff]
    %v286 = vld [vmem:[#allocation2 + $0x30] sm:$0xff]
    %v287 = vld [vmem:[#allocation2 + $0x38] sm:$0xff]
    %v288 = vld [vmem:[#allocation2 + $0x40] sm:$0xff]
    %v289 = vld [vmem:[#allocation2 + $0x48] sm:$0xff]
    %v290 = vld [vmem:[#allocation2 + $0x50] sm:$0xff]
    %v291 = vld [vmem:[#allocation2 + $0x58] sm:$0xff]
    %v292 = vld [vmem:[#allocation2 + $0x60] sm:$0xff]
    %v293 = vld [vmem:[#allocation2 + $0x68] sm:$0xff]
    %v294 = vld [vmem:[#allocation2 + $0x70] sm:$0xff]
    %v295 = vld [vmem:[#allocation2 + $0x78] sm:$0xff]
    %v296 = vld [vmem:[#allocation7] sm:$0xff]
    %v297 = vld [vmem:[#allocation7 + $0x8] sm:$0xff]
    %v298 = vld [vmem:[#allocation7 + $0x10] sm:$0xff]
    %v299 = vld [vmem:[#allocation7 + $0x18] sm:$0xff]
    %v300 = vld [vmem:[#allocation7 + $0x20] sm:$0xff]
    %v301 = vld [vmem:[#allocation7 + $0x28] sm:$0xff]
    %v302 = vld [vmem:[#allocation7 + $0x30] sm:$0xff]
    %v303 = vld [vmem:[#allocation7 + $0x38] sm:$0xff]
    %v304 = vld [vmem:[#allocation7 + $0x40] sm:$0xff]
    %v305 = vld [vmem:[#allocation7 + $0x48] sm:$0xff]
    %v306 = vld [vmem:[#allocation7 + $0x50] sm:$0xff]
    %v307 = vld [vmem:[#allocation7 + $0x58] sm:$0xff]
    %v308 = vld [vmem:[#allocation7 + $0x60] sm:$0xff]
    %v309 = vld [vmem:[#allocation7 + $0x68] sm:$0xff]
    %v310 = vld [vmem:[#allocation7 + $0x70] sm:$0xff]
    %v311 = vld [vmem:[#allocation7 + $0x78] sm:$0xff]
    %v312 = vld [vmem:[#allocation7 + $0x80] sm:$0xff]
    %v313 = vld [vmem:[#allocation7 + $0x88] sm:$0xff]
    %v314 = vld [vmem:[#allocation7 + $0x90] sm:$0xff]
    %v315 = vld [vmem:[#allocation7 + $0x98] sm:$0xff]
    %v316 = vld [vmem:[#allocation7 + $0xa0] sm:$0xff]
    %v317 = vld [vmem:[#allocation7 + $0xa8] sm:$0xff]
    %v318 = vld [vmem:[#allocation7 + $0xb0] sm:$0xff]
    %v319 = vld [vmem:[#allocation7 + $0xb8] sm:$0xff]
    %v320 = vld [vmem:[#allocation7 + $0xc0] sm:$0xff]
    %v321 = vld [vmem:[#allocation7 + $0xc8] sm:$0xff]
    %v322 = vld [vmem:[#allocation7 + $0xd0] sm:$0xff]
    %v323 = vld [vmem:[#allocation7 + $0xd8] sm:$0xff]
    %v324 = vld [vmem:[#allocation7 + $0xe0] sm:$0xff]
    %v325 = vld [vmem:[#allocation7 + $0xe8] sm:$0xff]
    %v326 = vld [vmem:[#allocation7 + $0xf0] sm:$0xff]
    %v327 = vld [vmem:[#allocation7 + $0xf8] sm:$0xff]
    %328 = vmatprep.subr.mxu0 %v297
    %329 = vmatpush1.msra.mxu0 %v296
    %330 = vmatprep.subr.mxu0 %v299
    %331 = vmatpush1.msra.mxu0 %v298
    %332 = vmatprep.subr.mxu0 %v301
    %333 = vmatpush1.msra.mxu0 %v300
    %334 = vmatprep.subr.mxu0 %v303
    %335 = vmatpush1.msra.mxu0 %v302
    %336 = vmatprep.subr.mxu0 %v305
    %337 = vmatpush1.msra.mxu0 %v304
    %338 = vmatprep.subr.mxu0 %v307
    %339 = vmatpush1.msra.mxu0 %v306
    %340 = vmatprep.subr.mxu0 %v309
    %341 = vmatpush1.msra.mxu0 %v308
    %342 = vmatprep.subr.mxu0 %v311
    %343 = vmatpush1.msra.mxu0 %v310
    %344 = vmatprep.subr.mxu0 %v313
    %345 = vmatpush1.msra.mxu0 %v312
    %346 = vmatprep.subr.mxu0 %v315
    %347 = vmatpush1.msra.mxu0 %v314
    %348 = vmatprep.subr.mxu0 %v317
    %349 = vmatpush1.msra.mxu0 %v316
    %350 = vmatprep.subr.mxu0 %v319
    %351 = vmatpush1.msra.mxu0 %v318
    %352 = vmatprep.subr.mxu0 %v321
    %353 = vmatpush1.msra.mxu0 %v320
    %354 = vmatprep.subr.mxu0 %v323
    %355 = vmatpush1.msra.mxu0 %v322
    %356 = vmatprep.subr.mxu0 %v325
    %357 = vmatpush1.msra.mxu0 %v324
    %358 = vmatprep.subr.mxu0 %v327
    %359 = vmatpush1.msra.mxu0 %v326
    %360 = vmatprep.subr.mxu0 0.0
    %361 = vmatpush1.msra.mxu0 0.0
    %362 = vmatprep.subr.mxu0 0.0
    %363 = vmatpush1.msra.mxu0 0.0
    %364 = vmatprep.subr.mxu0 0.0
    %365 = vmatpush1.msra.mxu0 0.0
    %366 = vmatprep.subr.mxu0 0.0
    %367 = vmatpush1.msra.mxu0 0.0
    %368 = vmatprep.subr.mxu0 0.0
    %369 = vmatpush1.msra.mxu0 0.0
    %370 = vmatprep.subr.mxu0 0.0
    %371 = vmatpush1.msra.mxu0 0.0
    %372 = vmatprep.subr.mxu0 0.0
    %373 = vmatpush1.msra.mxu0 0.0
    %374 = vmatprep.subr.mxu0 0.0
    %375 = vmatpush1.msra.mxu0 0.0
    %376 = vmatprep.subr.mxu0 0.0
    %377 = vmatpush1.msra.mxu0 0.0
    %378 = vmatprep.subr.mxu0 0.0
    %379 = vmatpush1.msra.mxu0 0.0
    %380 = vmatprep.subr.mxu0 0.0
    %381 = vmatpush1.msra.mxu0 0.0
    %382 = vmatprep.subr.mxu0 0.0
    %383 = vmatpush1.msra.mxu0 0.0
    %384 = vmatprep.subr.mxu0 0.0
    %385 = vmatpush1.msra.mxu0 0.0
    %386 = vmatprep.subr.mxu0 0.0
    %387 = vmatpush1.msra.mxu0 0.0
    %388 = vmatprep.subr.mxu0 0.0
    %389 = vmatpush1.msra.mxu0 0.0
    %390 = vmatprep.subr.mxu0 0.0
    %391 = vmatpush1.msra.mxu0 0.0
    %392 = vmatprep.mubr.f32.mxu0 0.0
    %393 = vmatmul.mubr.f32.gmra.mrb[0].mxu0 %v280
    %v394 = vpop.f32.mrb[0].mxu0
    %v395 = vadd.f32 0.0, %v394
    %v396 = vpop.f32.mrb[0].mxu0
    %v397 = vadd.f32 0.0, %v396
    %398 = vmatprep.mubr.f32.mxu0 0.0
    %399 = vmatmul.mubr.f32.gmra.mrb[0].mxu0 %v281
    %v400 = vpop.f32.mrb[0].mxu0
    %v401 = vadd.f32 0.0, %v400
    %v402 = vpop.f32.mrb[0].mxu0
    %v403 = vadd.f32 0.0, %v402
    %404 = vmatprep.mubr.f32.mxu0 0.0
    %405 = vmatmul.mubr.f32.gmra.mrb[0].mxu0 %v282
    %v406 = vpop.f32.mrb[0].mxu0
    %v407 = vadd.f32 0.0, %v406
    %v408 = vpop.f32.mrb[0].mxu0
    %v409 = vadd.f32 0.0, %v408
    %410 = vmatprep.mubr.f32.mxu0 0.0
    %411 = vmatmul.mubr.f32.gmra.mrb[0].mxu0 %v283
    %v412 = vpop.f32.mrb[0].mxu0
    %v413 = vadd.f32 0.0, %v412
    %v414 = vpop.f32.mrb[0].mxu0
    %v415 = vadd.f32 0.0, %v414
    %416 = vmatprep.mubr.f32.mxu0 0.0
    %417 = vmatmul.mubr.f32.gmra.mrb[0].mxu0 %v284
    %v418 = vpop.f32.mrb[0].mxu0
    %v419 = vadd.f32 0.0, %v418
    %v420 = vpop.f32.mrb[0].mxu0
    %v421 = vadd.f32 0.0, %v420
    %422 = vmatprep.mubr.f32.mxu0 0.0
    %423 = vmatmul.mubr.f32.gmra.mrb[0].mxu0 %v285
    %v424 = vpop.f32.mrb[0].mxu0
    %v425 = vadd.f32 0.0, %v424
    %v426 = vpop.f32.mrb[0].mxu0
    %v427 = vadd.f32 0.0, %v426
    %428 = vmatprep.mubr.f32.mxu0 0.0
    %429 = vmatmul.mubr.f32.gmra.mrb[0].mxu0 %v286
    %v430 = vpop.f32.mrb[0].mxu0
    %v431 = vadd.f32 0.0, %v430
    %v432 = vpop.f32.mrb[0].mxu0
    %v433 = vadd.f32 0.0, %v432
    %434 = vmatprep.mubr.f32.mxu0 0.0
    %435 = vmatmul.mubr.f32.gmra.mrb[0].mxu0 %v287
    %v436 = vpop.f32.mrb[0].mxu0
    %v437 = vadd.f32 0.0, %v436
    %v438 = vpop.f32.mrb[0].mxu0
    %v439 = vadd.f32 0.0, %v438
    %440 = vmatprep.mubr.f32.mxu0 0.0
    %441 = vmatmul.mubr.f32.gmra.mrb[0].mxu0 %v288
    %v442 = vpop.f32.mrb[0].mxu0
    %v443 = vadd.f32 0.0, %v442
    %v444 = vpop.f32.mrb[0].mxu0
    %v445 = vadd.f32 0.0, %v444
    %446 = vmatprep.mubr.f32.mxu0 0.0
    %447 = vmatmul.mubr.f32.gmra.mrb[0].mxu0 %v289
    %v448 = vpop.f32.mrb[0].mxu0
    %v449 = vadd.f32 0.0, %v448
    %v450 = vpop.f32.mrb[0].mxu0
    %v451 = vadd.f32 0.0, %v450
    %452 = vmatprep.mubr.f32.mxu0 0.0
    %453 = vmatmul.mubr.f32.gmra.mrb[0].mxu0 %v290
    %v454 = vpop.f32.mrb[0].mxu0
    %v455 = vadd.f32 0.0, %v454
    %v456 = vpop.f32.mrb[0].mxu0
    %v457 = vadd.f32 0.0, %v456
    %458 = vmatprep.mubr.f32.mxu0 0.0
    %459 = vmatmul.mubr.f32.gmra.mrb[0].mxu0 %v291
    %v460 = vpop.f32.mrb[0].mxu0
    %v461 = vadd.f32 0.0, %v460
    %v462 = vpop.f32.mrb[0].mxu0
    %v463 = vadd.f32 0.0, %v462
    %464 = vmatprep.mubr.f32.mxu0 0.0
    %465 = vmatmul.mubr.f32.gmra.mrb[0].mxu0 %v292
    %v466 = vpop.f32.mrb[0].mxu0
    %v467 = vadd.f32 0.0, %v466
    %v468 = vpop.f32.mrb[0].mxu0
    %v469 = vadd.f32 0.0, %v468
    %470 = vmatprep.mubr.f32.mxu0 0.0
    %471 = vmatmul.mubr.f32.gmra.mrb[0].mxu0 %v293
    %v472 = vpop.f32.mrb[0].mxu0
    %v473 = vadd.f32 0.0, %v472
    %v474 = vpop.f32.mrb[0].mxu0
    %v475 = vadd.f32 0.0, %v474
    %476 = vmatprep.mubr.f32.mxu0 0.0
    %477 = vmatmul.mubr.f32.gmra.mrb[0].mxu0 %v294
    %v478 = vpop.f32.mrb[0].mxu0
    %v479 = vadd.f32 0.0, %v478
    %v480 = vpop.f32.mrb[0].mxu0
    %v481 = vadd.f32 0.0, %v480
    %482 = vmatprep.mubr.f32.mxu0 0.0
    %483 = vmatmul.mubr.f32.gmra.mrb[0].mxu0 %v295
    %v484 = vpop.f32.mrb[0].mxu0
    %v485 = vadd.f32 0.0, %v484
    %v486 = vpop.f32.mrb[0].mxu0
    %v487 = vadd.f32 0.0, %v486
    %488 = vdwg.mxu0
    %v491 = vcombine.high %v278, %v278
    %v493 = vunpack.c.l.s4 1966171168
    %v494 = vunpack.c.0.s8 %v493
    %v495 = vlaneseq
    %v496 = vshrl.u32 %v495, 7
    %v497 = vsub.s32 %v494, %v496
    %v498 = vrot.slane %v278, %v497
    %v500 = vunpack.c.l.s4 1966171168
    %v501 = vunpack.c.0.s8 %v500
    %v502 = vlaneseq
    %v503 = vshrl.u32 %v502, 7
    %v504 = vsub.s32 %v501, %v503
    %v505 = vrot.slane %v491, %v504
    %v506 = vcombine.high %v498, %v498
    %v507 = vcombine.high %v505, %v505
    %v509 = vunpack.c.l.s4 1966171168
    %v510 = vunpack.c.0.s8 %v509
    %v511 = vlaneseq
    %v512 = vshrl.u32 %v511, 7
    %v513 = vsub.s32 %v510, %v512
    %v514 = vrot.slane %v498, %v513
    %v516 = vunpack.c.l.s4 1966171168
    %v517 = vunpack.c.0.s8 %v516
    %v518 = vlaneseq
    %v519 = vshrl.u32 %v518, 7
    %v520 = vsub.s32 %v517, %v519
    %v521 = vrot.slane %v505, %v520
    %v523 = vunpack.c.l.s4 1966171168
    %v524 = vunpack.c.0.s8 %v523
    %v525 = vlaneseq
    %v526 = vshrl.u32 %v525, 7
    %v527 = vsub.s32 %v524, %v526
    %v528 = vrot.slane %v506, %v527
    %v530 = vunpack.c.l.s4 1966171168
    %v531 = vunpack.c.0.s8 %v530
    %v532 = vlaneseq
    %v533 = vshrl.u32 %v532, 7
    %v534 = vsub.s32 %v531, %v533
    %v535 = vrot.slane %v507, %v534
    %v536 = vcombine.high %v514, %v514
    %v537 = vcombine.high %v521, %v521
    %v538 = vcombine.high %v528, %v528
    %v539 = vcombine.high %v535, %v535
    %v540 = vcombine.high %v279, %v279
    %v542 = vunpack.c.l.s4 1966171168
    %v543 = vunpack.c.0.s8 %v542
    %v544 = vlaneseq
    %v545 = vshrl.u32 %v544, 7
    %v546 = vsub.s32 %v543, %v545
    %v547 = vrot.slane %v279, %v546
    %v549 = vunpack.c.l.s4 1966171168
    %v550 = vunpack.c.0.s8 %v549
    %v551 = vlaneseq
    %v552 = vshrl.u32 %v551, 7
    %v553 = vsub.s32 %v550, %v552
    %v554 = vrot.slane %v540, %v553
    %v555 = vcombine.high %v547, %v547
    %v556 = vcombine.high %v554, %v554
    %v558 = vunpack.c.l.s4 1966171168
    %v559 = vunpack.c.0.s8 %v558
    %v560 = vlaneseq
    %v561 = vshrl.u32 %v560, 7
    %v562 = vsub.s32 %v559, %v561
    %v563 = vrot.slane %v547, %v562
    %v565 = vunpack.c.l.s4 1966171168
    %v566 = vunpack.c.0.s8 %v565
    %v567 = vlaneseq
    %v568 = vshrl.u32 %v567, 7
    %v569 = vsub.s32 %v566, %v568
    %v570 = vrot.slane %v554, %v569
    %v572 = vunpack.c.l.s4 1966171168
    %v573 = vunpack.c.0.s8 %v572
    %v574 = vlaneseq
    %v575 = vshrl.u32 %v574, 7
    %v576 = vsub.s32 %v573, %v575
    %v577 = vrot.slane %v555, %v576
    %v579 = vunpack.c.l.s4 1966171168
    %v580 = vunpack.c.0.s8 %v579
    %v581 = vlaneseq
    %v582 = vshrl.u32 %v581, 7
    %v583 = vsub.s32 %v580, %v582
    %v584 = vrot.slane %v556, %v583
    %v585 = vcombine.high %v563, %v563
    %v586 = vcombine.high %v570, %v570
    %v587 = vcombine.high %v577, %v577
    %v588 = vcombine.high %v584, %v584
    %v589 = vlaneseq
    %v590 = vshrl.u32 %v589, 7
    %v591 = vsub.s32 0, %v590
    %v592 = vrot.slane %v514, %v591
    %v593 = vlaneseq
    %v594 = vshrl.u32 %v593, 7
    %v595 = vsub.s32 0, %v594
    %v596 = vrot.slane %v528, %v595
    %v597 = vlaneseq
    %v598 = vshrl.u32 %v597, 7
    %v599 = vsub.s32 0, %v598
    %v600 = vrot.slane %v536, %v599
    %v601 = vlaneseq
    %v602 = vshrl.u32 %v601, 7
    %v603 = vsub.s32 0, %v602
    %v604 = vrot.slane %v538, %v603
    %v605 = vlaneseq
    %v606 = vshrl.u32 %v605, 7
    %v607 = vsub.s32 0, %v606
    %v608 = vrot.slane %v521, %v607
    %v609 = vlaneseq
    %v610 = vshrl.u32 %v609, 7
    %v611 = vsub.s32 0, %v610
    %v612 = vrot.slane %v535, %v611
    %v613 = vlaneseq
    %v614 = vshrl.u32 %v613, 7
    %v615 = vsub.s32 0, %v614
    %v616 = vrot.slane %v537, %v615
    %v617 = vlaneseq
    %v618 = vshrl.u32 %v617, 7
    %v619 = vsub.s32 0, %v618
    %v620 = vrot.slane %v539, %v619
    %v621 = vlaneseq
    %v622 = vshrl.u32 %v621, 7
    %v623 = vsub.s32 0, %v622
    %v624 = vrot.slane %v563, %v623
    %v625 = vlaneseq
    %v626 = vshrl.u32 %v625, 7
    %v627 = vsub.s32 0, %v626
    %v628 = vrot.slane %v577, %v627
    %v629 = vlaneseq
    %v630 = vshrl.u32 %v629, 7
    %v631 = vsub.s32 0, %v630
    %v632 = vrot.slane %v585, %v631
    %v633 = vlaneseq
    %v634 = vshrl.u32 %v633, 7
    %v635 = vsub.s32 0, %v634
    %v636 = vrot.slane %v587, %v635
    %v637 = vlaneseq
    %v638 = vshrl.u32 %v637, 7
    %v639 = vsub.s32 0, %v638
    %v640 = vrot.slane %v570, %v639
    %v641 = vlaneseq
    %v642 = vshrl.u32 %v641, 7
    %v643 = vsub.s32 0, %v642
    %v644 = vrot.slane %v584, %v643
    %v645 = vlaneseq
    %v646 = vshrl.u32 %v645, 7
    %v647 = vsub.s32 0, %v646
    %v648 = vrot.slane %v586, %v647
    %v649 = vlaneseq
    %v650 = vshrl.u32 %v649, 7
    %v651 = vsub.s32 0, %v650
    %v652 = vrot.slane %v588, %v651
    %v669 = vmul.f32 %v395, %v592
    %v670 = vmul.f32 %v401, %v596
    %v671 = vmul.f32 %v407, %v600
    %v672 = vmul.f32 %v413, %v604
    %v673 = vmul.f32 %v419, %v608
    %v674 = vmul.f32 %v425, %v612
    %v675 = vmul.f32 %v431, %v616
    %v676 = vmul.f32 %v437, %v620
    %v677 = vmul.f32 %v443, %v624
    %v678 = vmul.f32 %v449, %v628
    %v679 = vmul.f32 %v455, %v632
    %v680 = vmul.f32 %v461, %v636
    %v681 = vmul.f32 %v467, %v640
    %v682 = vmul.f32 %v473, %v644
    %v683 = vmul.f32 %v479, %v648
    %v684 = vmul.f32 %v485, %v652
    %v685 = vld [vmem:[#allocation11] sm:$0xff]
    %v686 = vld [vmem:[#allocation11 + $0x8] sm:$0xff]
    %v687 = vld [vmem:[#allocation11 + $0x10] sm:$0xff]
    %v688 = vld [vmem:[#allocation11 + $0x18] sm:$0xff]
    %v689 = vld [vmem:[#allocation11 + $0x20] sm:$0xff]
    %v690 = vld [vmem:[#allocation11 + $0x28] sm:$0xff]
    %v691 = vld [vmem:[#allocation11 + $0x30] sm:$0xff]
    %v692 = vld [vmem:[#allocation11 + $0x38] sm:$0xff]
    %v693 = vld [vmem:[#allocation11 + $0x40] sm:$0xff]
    %v694 = vld [vmem:[#allocation11 + $0x48] sm:$0xff]
    %v695 = vld [vmem:[#allocation11 + $0x50] sm:$0xff]
    %v696 = vld [vmem:[#allocation11 + $0x58] sm:$0xff]
    %v697 = vld [vmem:[#allocation11 + $0x60] sm:$0xff]
    %v698 = vld [vmem:[#allocation11 + $0x68] sm:$0xff]
    %v699 = vld [vmem:[#allocation11 + $0x70] sm:$0xff]
    %v700 = vld [vmem:[#allocation11 + $0x78] sm:$0xff]
    %701 = vmatprep.subr.mxu0 0.0
    %702 = vmatpush1.msra.mxu0 %v685
    %703 = vmatprep.subr.mxu0 0.0
    %704 = vmatpush1.msra.mxu0 %v686
    %705 = vmatprep.subr.mxu0 0.0
    %706 = vmatpush1.msra.mxu0 %v687
    %707 = vmatprep.subr.mxu0 0.0
    %708 = vmatpush1.msra.mxu0 %v688
    %709 = vmatprep.subr.mxu0 0.0
    %710 = vmatpush1.msra.mxu0 %v689
    %711 = vmatprep.subr.mxu0 0.0
    %712 = vmatpush1.msra.mxu0 %v690
    %713 = vmatprep.subr.mxu0 0.0
    %714 = vmatpush1.msra.mxu0 %v691
    %715 = vmatprep.subr.mxu0 0.0
    %716 = vmatpush1.msra.mxu0 %v692
    %717 = vmatprep.subr.mxu0 0.0
    %718 = vmatpush1.msra.mxu0 %v693
    %719 = vmatprep.subr.mxu0 0.0
    %720 = vmatpush1.msra.mxu0 %v694
    %721 = vmatprep.subr.mxu0 0.0
    %722 = vmatpush1.msra.mxu0 %v695
    %723 = vmatprep.subr.mxu0 0.0
    %724 = vmatpush1.msra.mxu0 %v696
    %725 = vmatprep.subr.mxu0 0.0
    %726 = vmatpush1.msra.mxu0 %v697
    %727 = vmatprep.subr.mxu0 0.0
    %728 = vmatpush1.msra.mxu0 %v698
    %729 = vmatprep.subr.mxu0 0.0
    %730 = vmatpush1.msra.mxu0 %v699
    %731 = vmatprep.subr.mxu0 0.0
    %732 = vmatpush1.msra.mxu0 %v700
    %733 = vmatprep.subr.mxu0 0.0
    %734 = vmatpush1.msra.mxu0 0.0
    %735 = vmatprep.subr.mxu0 0.0
    %736 = vmatpush1.msra.mxu0 0.0
    %737 = vmatprep.subr.mxu0 0.0
    %738 = vmatpush1.msra.mxu0 0.0
    %739 = vmatprep.subr.mxu0 0.0
    %740 = vmatpush1.msra.mxu0 0.0
    %741 = vmatprep.subr.mxu0 0.0
    %742 = vmatpush1.msra.mxu0 0.0
    %743 = vmatprep.subr.mxu0 0.0
    %744 = vmatpush1.msra.mxu0 0.0
    %745 = vmatprep.subr.mxu0 0.0
    %746 = vmatpush1.msra.mxu0 0.0
    %747 = vmatprep.subr.mxu0 0.0
    %748 = vmatpush1.msra.mxu0 0.0
    %749 = vmatprep.subr.mxu0 0.0
    %750 = vmatpush1.msra.mxu0 0.0
    %751 = vmatprep.subr.mxu0 0.0
    %752 = vmatpush1.msra.mxu0 0.0
    %753 = vmatprep.subr.mxu0 0.0
    %754 = vmatpush1.msra.mxu0 0.0
    %755 = vmatprep.subr.mxu0 0.0
    %756 = vmatpush1.msra.mxu0 0.0
    %757 = vmatprep.subr.mxu0 0.0
    %758 = vmatpush1.msra.mxu0 0.0
    %759 = vmatprep.subr.mxu0 0.0
    %760 = vmatpush1.msra.mxu0 0.0
    %761 = vmatprep.subr.mxu0 0.0
    %762 = vmatpush1.msra.mxu0 0.0
    %763 = vmatprep.subr.mxu0 0.0
    %764 = vmatpush1.msra.mxu0 0.0
    %765 = vmatprep.mubr.f32.mxu0 0.0
    %766 = vmatmul.mubr.f32.gmra.mrb[0].mxu0 %v669
    %v767 = vpop.f32.mrb[0].mxu0
    %v768 = vadd.f32 0.0, %v767
    %v769 = vpop.f32.mrb[0].mxu0
    %770 = vmatprep.mubr.f32.mxu0 0.0
    %771 = vmatmul.mubr.f32.gmra.mrb[0].mxu0 %v670
    %v772 = vpop.f32.mrb[0].mxu0
    %v773 = vadd.f32 0.0, %v772
    %v774 = vpop.f32.mrb[0].mxu0
    %775 = vmatprep.mubr.f32.mxu0 0.0
    %776 = vmatmul.mubr.f32.gmra.mrb[0].mxu0 %v671
    %v777 = vpop.f32.mrb[0].mxu0
    %v778 = vadd.f32 0.0, %v777
    %v779 = vpop.f32.mrb[0].mxu0
    %780 = vmatprep.mubr.f32.mxu0 0.0
    %781 = vmatmul.mubr.f32.gmra.mrb[0].mxu0 %v672
    %v782 = vpop.f32.mrb[0].mxu0
    %v783 = vadd.f32 0.0, %v782
    %v784 = vpop.f32.mrb[0].mxu0
    %785 = vmatprep.mubr.f32.mxu0 0.0
    %786 = vmatmul.mubr.f32.gmra.mrb[0].mxu0 %v673
    %v787 = vpop.f32.mrb[0].mxu0
    %v788 = vadd.f32 0.0, %v787
    %v789 = vpop.f32.mrb[0].mxu0
    %790 = vmatprep.mubr.f32.mxu0 0.0
    %791 = vmatmul.mubr.f32.gmra.mrb[0].mxu0 %v674
    %v792 = vpop.f32.mrb[0].mxu0
    %v793 = vadd.f32 0.0, %v792
    %v794 = vpop.f32.mrb[0].mxu0
    %795 = vmatprep.mubr.f32.mxu0 0.0
    %796 = vmatmul.mubr.f32.gmra.mrb[0].mxu0 %v675
    %v797 = vpop.f32.mrb[0].mxu0
    %v798 = vadd.f32 0.0, %v797
    %v799 = vpop.f32.mrb[0].mxu0
    %800 = vmatprep.mubr.f32.mxu0 0.0
    %801 = vmatmul.mubr.f32.gmra.mrb[0].mxu0 %v676
    %v802 = vpop.f32.mrb[0].mxu0
    %v803 = vadd.f32 0.0, %v802
    %v804 = vpop.f32.mrb[0].mxu0
    %805 = vmatprep.mubr.f32.mxu0 0.0
    %806 = vmatmul.mubr.f32.gmra.mrb[0].mxu0 %v677
    %v807 = vpop.f32.mrb[0].mxu0
    %v808 = vadd.f32 0.0, %v807
    %v809 = vpop.f32.mrb[0].mxu0
    %810 = vmatprep.mubr.f32.mxu0 0.0
    %811 = vmatmul.mubr.f32.gmra.mrb[0].mxu0 %v678
    %v812 = vpop.f32.mrb[0].mxu0
    %v813 = vadd.f32 0.0, %v812
    %v814 = vpop.f32.mrb[0].mxu0
    %815 = vmatprep.mubr.f32.mxu0 0.0
    %816 = vmatmul.mubr.f32.gmra.mrb[0].mxu0 %v679
    %v817 = vpop.f32.mrb[0].mxu0
    %v818 = vadd.f32 0.0, %v817
    %v819 = vpop.f32.mrb[0].mxu0
    %820 = vmatprep.mubr.f32.mxu0 0.0
    %821 = vmatmul.mubr.f32.gmra.mrb[0].mxu0 %v680
    %v822 = vpop.f32.mrb[0].mxu0
    %v823 = vadd.f32 0.0, %v822
    %v824 = vpop.f32.mrb[0].mxu0
    %825 = vmatprep.mubr.f32.mxu0 0.0
    %826 = vmatmul.mubr.f32.gmra.mrb[0].mxu0 %v681
    %v827 = vpop.f32.mrb[0].mxu0
    %v828 = vadd.f32 0.0, %v827
    %v829 = vpop.f32.mrb[0].mxu0
    %830 = vmatprep.mubr.f32.mxu0 0.0
    %831 = vmatmul.mubr.f32.gmra.mrb[0].mxu0 %v682
    %v832 = vpop.f32.mrb[0].mxu0
    %v833 = vadd.f32 0.0, %v832
    %v834 = vpop.f32.mrb[0].mxu0
    %835 = vmatprep.mubr.f32.mxu0 0.0
    %836 = vmatmul.mubr.f32.gmra.mrb[0].mxu0 %v683
    %v837 = vpop.f32.mrb[0].mxu0
    %v838 = vadd.f32 0.0, %v837
    %v839 = vpop.f32.mrb[0].mxu0
    %840 = vmatprep.mubr.f32.mxu0 0.0
    %841 = vmatmul.mubr.f32.gmra.mrb[0].mxu0 %v684
    %v842 = vpop.f32.mrb[0].mxu0
    %v843 = vadd.f32 0.0, %v842
    %v844 = vpop.f32.mrb[0].mxu0
    %845 = vdwg.mxu0
    %vm846 = vcmask 64512
    %v847 = vsel %vm846, %v768, -inf
    %v848 = vrot.slane %v847, 4
    %v849 = vmax.f32 %v847, %v848
    %v850 = vrot.slane %v849, 2
    %v851 = vmax.f32 %v849, %v850
    %v852 = vrot.slane %v851, 1
    %v853 = vmax.f32 %v851, %v852
    %v854 = vsel %vm846, %v773, -inf
    %v855 = vrot.slane %v854, 4
    %v856 = vmax.f32 %v854, %v855
    %v857 = vrot.slane %v856, 2
    %v858 = vmax.f32 %v856, %v857
    %v859 = vrot.slane %v858, 1
    %v860 = vmax.f32 %v858, %v859
    %v861 = vsel %vm846, %v778, -inf
    %v862 = vrot.slane %v861, 4
    %v863 = vmax.f32 %v861, %v862
    %v864 = vrot.slane %v863, 2
    %v865 = vmax.f32 %v863, %v864
    %v866 = vrot.slane %v865, 1
    %v867 = vmax.f32 %v865, %v866
    %v868 = vsel %vm846, %v783, -inf
    %v869 = vrot.slane %v868, 4
    %v870 = vmax.f32 %v868, %v869
    %v871 = vrot.slane %v870, 2
    %v872 = vmax.f32 %v870, %v871
    %v873 = vrot.slane %v872, 1
    %v874 = vmax.f32 %v872, %v873
    %v875 = vsel %vm846, %v788, -inf
    %v876 = vrot.slane %v875, 4
    %v877 = vmax.f32 %v875, %v876
    %v878 = vrot.slane %v877, 2
    %v879 = vmax.f32 %v877, %v878
    %v880 = vrot.slane %v879, 1
    %v881 = vmax.f32 %v879, %v880
    %v882 = vsel %vm846, %v793, -inf
    %v883 = vrot.slane %v882, 4
    %v884 = vmax.f32 %v882, %v883
    %v885 = vrot.slane %v884, 2
    %v886 = vmax.f32 %v884, %v885
    %v887 = vrot.slane %v886, 1
    %v888 = vmax.f32 %v886, %v887
    %v889 = vsel %vm846, %v798, -inf
    %v890 = vrot.slane %v889, 4
    %v891 = vmax.f32 %v889, %v890
    %v892 = vrot.slane %v891, 2
    %v893 = vmax.f32 %v891, %v892
    %v894 = vrot.slane %v893, 1
    %v895 = vmax.f32 %v893, %v894
    %v896 = vsel %vm846, %v803, -inf
    %v897 = vrot.slane %v896, 4
    %v898 = vmax.f32 %v896, %v897
    %v899 = vrot.slane %v898, 2
    %v900 = vmax.f32 %v898, %v899
    %v901 = vrot.slane %v900, 1
    %v902 = vmax.f32 %v900, %v901
    %v903 = vsel %vm846, %v808, -inf
    %v904 = vrot.slane %v903, 4
    %v905 = vmax.f32 %v903, %v904
    %v906 = vrot.slane %v905, 2
    %v907 = vmax.f32 %v905, %v906
    %v908 = vrot.slane %v907, 1
    %v909 = vmax.f32 %v907, %v908
    %v910 = vsel %vm846, %v813, -inf
    %v911 = vrot.slane %v910, 4
    %v912 = vmax.f32 %v910, %v911
    %v913 = vrot.slane %v912, 2
    %v914 = vmax.f32 %v912, %v913
    %v915 = vrot.slane %v914, 1
    %v916 = vmax.f32 %v914, %v915
    %v917 = vsel %vm846, %v818, -inf
    %v918 = vrot.slane %v917, 4
    %v919 = vmax.f32 %v917, %v918
    %v920 = vrot.slane %v919, 2
    %v921 = vmax.f32 %v919, %v920
    %v922 = vrot.slane %v921, 1
    %v923 = vmax.f32 %v921, %v922
    %v924 = vsel %vm846, %v823, -inf
    %v925 = vrot.slane %v924, 4
    %v926 = vmax.f32 %v924, %v925
    %v927 = vrot.slane %v926, 2
    %v928 = vmax.f32 %v926, %v927
    %v929 = vrot.slane %v928, 1
    %v930 = vmax.f32 %v928, %v929
    %v931 = vsel %vm846, %v828, -inf
    %v932 = vrot.slane %v931, 4
    %v933 = vmax.f32 %v931, %v932
    %v934 = vrot.slane %v933, 2
    %v935 = vmax.f32 %v933, %v934
    %v936 = vrot.slane %v935, 1
    %v937 = vmax.f32 %v935, %v936
    %v938 = vsel %vm846, %v833, -inf
    %v939 = vrot.slane %v938, 4
    %v940 = vmax.f32 %v938, %v939
    %v941 = vrot.slane %v940, 2
    %v942 = vmax.f32 %v940, %v941
    %v943 = vrot.slane %v942, 1
    %v944 = vmax.f32 %v942, %v943
    %v945 = vsel %vm846, %v838, -inf
    %v946 = vrot.slane %v945, 4
    %v947 = vmax.f32 %v945, %v946
    %v948 = vrot.slane %v947, 2
    %v949 = vmax.f32 %v947, %v948
    %v950 = vrot.slane %v949, 1
    %v951 = vmax.f32 %v949, %v950
    %v952 = vsel %vm846, %v843, -inf
    %v953 = vrot.slane %v952, 4
    %v954 = vmax.f32 %v952, %v953
    %v955 = vrot.slane %v954, 2
    %v956 = vmax.f32 %v954, %v955
    %v957 = vrot.slane %v956, 1
    %v958 = vmax.f32 %v956, %v957
    %v959 = vsub.f32 %v768, %v853
    %v960 = vsub.f32 %v773, %v860
    %v961 = vsub.f32 %v778, %v867
    %v962 = vsub.f32 %v783, %v874
    %v963 = vsub.f32 %v788, %v881
    %v964 = vsub.f32 %v793, %v888
    %v965 = vsub.f32 %v798, %v895
    %v966 = vsub.f32 %v803, %v902
    %v967 = vsub.f32 %v808, %v909
    %v968 = vsub.f32 %v813, %v916
    %v969 = vsub.f32 %v818, %v923
    %v970 = vsub.f32 %v823, %v930
    %v971 = vsub.f32 %v828, %v937
    %v972 = vsub.f32 %v833, %v944
    %v973 = vsub.f32 %v838, %v951
    %v974 = vsub.f32 %v843, %v958
    %v975 = vmul.f32 %v959, 1.442695
    %v976 = vpow.pop %v975
    %v977 = vmul.f32 %v960, 1.442695
    %v978 = vpow.pop %v977
    %v979 = vmul.f32 %v961, 1.442695
    %v980 = vpow.pop %v979
    %v981 = vmul.f32 %v962, 1.442695
    %v982 = vpow.pop %v981
    %v983 = vmul.f32 %v963, 1.442695
    %v984 = vpow.pop %v983
    %v985 = vmul.f32 %v964, 1.442695
    %v986 = vpow.pop %v985
    %v987 = vmul.f32 %v965, 1.442695
    %v988 = vpow.pop %v987
    %v989 = vmul.f32 %v966, 1.442695
    %v990 = vpow.pop %v989
    %v991 = vmul.f32 %v967, 1.442695
    %v992 = vpow.pop %v991
    %v993 = vmul.f32 %v968, 1.442695
    %v994 = vpow.pop %v993
    %v995 = vmul.f32 %v969, 1.442695
    %v996 = vpow.pop %v995
    %v997 = vmul.f32 %v970, 1.442695
    %v998 = vpow.pop %v997
    %v999 = vmul.f32 %v971, 1.442695
    %v1000 = vpow.pop %v999
    %v1001 = vmul.f32 %v972, 1.442695
    %v1002 = vpow.pop %v1001
    %v1003 = vmul.f32 %v973, 1.442695
    %v1004 = vpow.pop %v1003
    %v1005 = vmul.f32 %v974, 1.442695
    %v1006 = vpow.pop %v1005
    %v1007 = vsel %vm846, %v976, 0.0
    %v1008 = vrot.slane %v1007, 4
    %v1009 = vadd.f32 %v1007, %v1008
    %v1010 = vrot.slane %v1009, 2
    %v1011 = vadd.f32 %v1009, %v1010
    %v1012 = vrot.slane %v1011, 1
    %v1013 = vadd.f32 %v1011, %v1012
    %v1014 = vsel %vm846, %v978, 0.0
    %v1015 = vrot.slane %v1014, 4
    %v1016 = vadd.f32 %v1014, %v1015
    %v1017 = vrot.slane %v1016, 2
    %v1018 = vadd.f32 %v1016, %v1017
    %v1019 = vrot.slane %v1018, 1
    %v1020 = vadd.f32 %v1018, %v1019
    %v1021 = vsel %vm846, %v980, 0.0
    %v1022 = vrot.slane %v1021, 4
    %v1023 = vadd.f32 %v1021, %v1022
    %v1024 = vrot.slane %v1023, 2
    %v1025 = vadd.f32 %v1023, %v1024
    %v1026 = vrot.slane %v1025, 1
    %v1027 = vadd.f32 %v1025, %v1026
    %v1028 = vsel %vm846, %v982, 0.0
    %v1029 = vrot.slane %v1028, 4
    %v1030 = vadd.f32 %v1028, %v1029
    %v1031 = vrot.slane %v1030, 2
    %v1032 = vadd.f32 %v1030, %v1031
    %v1033 = vrot.slane %v1032, 1
    %v1034 = vadd.f32 %v1032, %v1033
    %v1035 = vsel %vm846, %v984, 0.0
    %v1036 = vrot.slane %v1035, 4
    %v1037 = vadd.f32 %v1035, %v1036
    %v1038 = vrot.slane %v1037, 2
    %v1039 = vadd.f32 %v1037, %v1038
    %v1040 = vrot.slane %v1039, 1
    %v1041 = vadd.f32 %v1039, %v1040
    %v1042 = vsel %vm846, %v986, 0.0
    %v1043 = vrot.slane %v1042, 4
    %v1044 = vadd.f32 %v1042, %v1043
    %v1045 = vrot.slane %v1044, 2
    %v1046 = vadd.f32 %v1044, %v1045
    %v1047 = vrot.slane %v1046, 1
    %v1048 = vadd.f32 %v1046, %v1047
    %v1049 = vsel %vm846, %v988, 0.0
    %v1050 = vrot.slane %v1049, 4
    %v1051 = vadd.f32 %v1049, %v1050
    %v1052 = vrot.slane %v1051, 2
    %v1053 = vadd.f32 %v1051, %v1052
    %v1054 = vrot.slane %v1053, 1
    %v1055 = vadd.f32 %v1053, %v1054
    %v1056 = vsel %vm846, %v990, 0.0
    %v1057 = vrot.slane %v1056, 4
    %v1058 = vadd.f32 %v1056, %v1057
    %v1059 = vrot.slane %v1058, 2
    %v1060 = vadd.f32 %v1058, %v1059
    %v1061 = vrot.slane %v1060, 1
    %v1062 = vadd.f32 %v1060, %v1061
    %v1063 = vsel %vm846, %v992, 0.0
    %v1064 = vrot.slane %v1063, 4
    %v1065 = vadd.f32 %v1063, %v1064
    %v1066 = vrot.slane %v1065, 2
    %v1067 = vadd.f32 %v1065, %v1066
    %v1068 = vrot.slane %v1067, 1
    %v1069 = vadd.f32 %v1067, %v1068
    %v1070 = vsel %vm846, %v994, 0.0
    %v1071 = vrot.slane %v1070, 4
    %v1072 = vadd.f32 %v1070, %v1071
    %v1073 = vrot.slane %v1072, 2
    %v1074 = vadd.f32 %v1072, %v1073
    %v1075 = vrot.slane %v1074, 1
    %v1076 = vadd.f32 %v1074, %v1075
    %v1077 = vsel %vm846, %v996, 0.0
    %v1078 = vrot.slane %v1077, 4
    %v1079 = vadd.f32 %v1077, %v1078
    %v1080 = vrot.slane %v1079, 2
    %v1081 = vadd.f32 %v1079, %v1080
    %v1082 = vrot.slane %v1081, 1
    %v1083 = vadd.f32 %v1081, %v1082
    %v1084 = vsel %vm846, %v998, 0.0
    %v1085 = vrot.slane %v1084, 4
    %v1086 = vadd.f32 %v1084, %v1085
    %v1087 = vrot.slane %v1086, 2
    %v1088 = vadd.f32 %v1086, %v1087
    %v1089 = vrot.slane %v1088, 1
    %v1090 = vadd.f32 %v1088, %v1089
    %v1091 = vsel %vm846, %v1000, 0.0
    %v1092 = vrot.slane %v1091, 4
    %v1093 = vadd.f32 %v1091, %v1092
    %v1094 = vrot.slane %v1093, 2
    %v1095 = vadd.f32 %v1093, %v1094
    %v1096 = vrot.slane %v1095, 1
    %v1097 = vadd.f32 %v1095, %v1096
    %v1098 = vsel %vm846, %v1002, 0.0
    %v1099 = vrot.slane %v1098, 4
    %v1100 = vadd.f32 %v1098, %v1099
    %v1101 = vrot.slane %v1100, 2
    %v1102 = vadd.f32 %v1100, %v1101
    %v1103 = vrot.slane %v1102, 1
    %v1104 = vadd.f32 %v1102, %v1103
    %v1105 = vsel %vm846, %v1004, 0.0
    %v1106 = vrot.slane %v1105, 4
    %v1107 = vadd.f32 %v1105, %v1106
    %v1108 = vrot.slane %v1107, 2
    %v1109 = vadd.f32 %v1107, %v1108
    %v1110 = vrot.slane %v1109, 1
    %v1111 = vadd.f32 %v1109, %v1110
    %v1112 = vsel %vm846, %v1006, 0.0
    %v1113 = vrot.slane %v1112, 4
    %v1114 = vadd.f32 %v1112, %v1113
    %v1115 = vrot.slane %v1114, 2
    %v1116 = vadd.f32 %v1114, %v1115
    %v1117 = vrot.slane %v1116, 1
    %v1118 = vadd.f32 %v1116, %v1117
    %v1119 = vrcp.pop %v1013
    %v1120 = vrcp.pop %v1020
    %v1121 = vrcp.pop %v1027
    %v1122 = vrcp.pop %v1034
    %v1123 = vrcp.pop %v1041
    %v1124 = vrcp.pop %v1048
    %v1125 = vrcp.pop %v1055
    %v1126 = vrcp.pop %v1062
    %v1127 = vrcp.pop %v1069
    %v1128 = vrcp.pop %v1076
    %v1129 = vrcp.pop %v1083
    %v1130 = vrcp.pop %v1090
    %v1131 = vrcp.pop %v1097
    %v1132 = vrcp.pop %v1104
    %v1133 = vrcp.pop %v1111
    %v1134 = vrcp.pop %v1118
    %v1135 = vmul.f32 %v976, %v1119
    %v1136 = vmul.f32 %v978, %v1120
    %v1137 = vmul.f32 %v980, %v1121
    %v1138 = vmul.f32 %v982, %v1122
    %v1139 = vmul.f32 %v984, %v1123
    %v1140 = vmul.f32 %v986, %v1124
    %v1141 = vmul.f32 %v988, %v1125
    %v1142 = vmul.f32 %v990, %v1126
    %v1143 = vmul.f32 %v992, %v1127
    %v1144 = vmul.f32 %v994, %v1128
    %v1145 = vmul.f32 %v996, %v1129
    %v1146 = vmul.f32 %v998, %v1130
    %v1147 = vmul.f32 %v1000, %v1131
    %v1148 = vmul.f32 %v1002, %v1132
    %v1149 = vmul.f32 %v1004, %v1133
    %v1150 = vmul.f32 %v1006, %v1134
    %v1151 = vld [vmem:[#allocation13] sm:$0xff]
    %v1153 = vsel %vm846, %v1135, 0
    %v1156 = vsel %vm846, %v1136, 0
    %v1159 = vsel %vm846, %v1137, 0
    %v1162 = vsel %vm846, %v1138, 0
    %v1165 = vsel %vm846, %v1139, 0
    %v1168 = vsel %vm846, %v1140, 0
    %v1171 = vsel %vm846, %v1141, 0
    %v1174 = vsel %vm846, %v1142, 0
    %v1177 = vsel %vm846, %v1143, 0
    %v1180 = vsel %vm846, %v1144, 0
    %v1183 = vsel %vm846, %v1145, 0
    %v1186 = vsel %vm846, %v1146, 0
    %v1189 = vsel %vm846, %v1147, 0
    %v1192 = vsel %vm846, %v1148, 0
    %v1195 = vsel %vm846, %v1149, 0
    %v1198 = vsel %vm846, %v1150, 0
    %1200 = vmatprep.subr.mxu0 0.0
    %1201 = vmatpush1.msra.mxu0 %v1151
    %1202 = vmatprep.subr.mxu0 0.0
    %1203 = vmatpush1.msra.mxu0 0.0
    %1204 = vmatprep.subr.mxu0 0.0
    %1205 = vmatpush1.msra.mxu0 0.0
    %1206 = vmatprep.subr.mxu0 0.0
    %1207 = vmatpush1.msra.mxu0 0.0
    %1208 = vmatprep.subr.mxu0 0.0
    %1209 = vmatpush1.msra.mxu0 0.0
    %1210 = vmatprep.subr.mxu0 0.0
    %1211 = vmatpush1.msra.mxu0 0.0
    %1212 = vmatprep.subr.mxu0 0.0
    %1213 = vmatpush1.msra.mxu0 0.0
    %1214 = vmatprep.subr.mxu0 0.0
    %1215 = vmatpush1.msra.mxu0 0.0
    %1216 = vmatprep.subr.mxu0 0.0
    %1217 = vmatpush1.msra.mxu0 0.0
    %1218 = vmatprep.subr.mxu0 0.0
    %1219 = vmatpush1.msra.mxu0 0.0
    %1220 = vmatprep.subr.mxu0 0.0
    %1221 = vmatpush1.msra.mxu0 0.0
    %1222 = vmatprep.subr.mxu0 0.0
    %1223 = vmatpush1.msra.mxu0 0.0
    %1224 = vmatprep.subr.mxu0 0.0
    %1225 = vmatpush1.msra.mxu0 0.0
    %1226 = vmatprep.subr.mxu0 0.0
    %1227 = vmatpush1.msra.mxu0 0.0
    %1228 = vmatprep.subr.mxu0 0.0
    %1229 = vmatpush1.msra.mxu0 0.0
    %1230 = vmatprep.subr.mxu0 0.0
    %1231 = vmatpush1.msra.mxu0 0.0
    %1232 = vmatprep.subr.mxu0 0.0
    %1233 = vmatpush1.msra.mxu0 0.0
    %1234 = vmatprep.subr.mxu0 0.0
    %1235 = vmatpush1.msra.mxu0 0.0
    %1236 = vmatprep.subr.mxu0 0.0
    %1237 = vmatpush1.msra.mxu0 0.0
    %1238 = vmatprep.subr.mxu0 0.0
    %1239 = vmatpush1.msra.mxu0 0.0
    %1240 = vmatprep.subr.mxu0 0.0
    %1241 = vmatpush1.msra.mxu0 0.0
    %1242 = vmatprep.subr.mxu0 0.0
    %1243 = vmatpush1.msra.mxu0 0.0
    %1244 = vmatprep.subr.mxu0 0.0
    %1245 = vmatpush1.msra.mxu0 0.0
    %1246 = vmatprep.subr.mxu0 0.0
    %1247 = vmatpush1.msra.mxu0 0.0
    %1248 = vmatprep.subr.mxu0 0.0
    %1249 = vmatpush1.msra.mxu0 0.0
    %1250 = vmatprep.subr.mxu0 0.0
    %1251 = vmatpush1.msra.mxu0 0.0
    %1252 = vmatprep.subr.mxu0 0.0
    %1253 = vmatpush1.msra.mxu0 0.0
    %1254 = vmatprep.subr.mxu0 0.0
    %1255 = vmatpush1.msra.mxu0 0.0
    %1256 = vmatprep.subr.mxu0 0.0
    %1257 = vmatpush1.msra.mxu0 0.0
    %1258 = vmatprep.subr.mxu0 0.0
    %1259 = vmatpush1.msra.mxu0 0.0
    %1260 = vmatprep.subr.mxu0 0.0
    %1261 = vmatpush1.msra.mxu0 0.0
    %1262 = vmatprep.subr.mxu0 0.0
    %1263 = vmatpush1.msra.mxu0 0.0
    %1264 = vmatprep.mubr.f32.mxu0 0.0
    %1265 = vmatmul.mubr.f32.gmra.mrb[0].mxu0 %v1153
    %v1266 = vpop.f32.mrb[0].mxu0
    %v1267 = vadd.f32 0.0, %v1266
    %v1268 = vpop.f32.mrb[0].mxu0
    %1269 = vmatprep.mubr.f32.mxu0 0.0
    %1270 = vmatmul.mubr.f32.gmra.mrb[0].mxu0 %v1156
    %v1271 = vpop.f32.mrb[0].mxu0
    %v1272 = vadd.f32 0.0, %v1271
    %v1273 = vpop.f32.mrb[0].mxu0
    %1274 = vmatprep.mubr.f32.mxu0 0.0
    %1275 = vmatmul.mubr.f32.gmra.mrb[0].mxu0 %v1159
    %v1276 = vpop.f32.mrb[0].mxu0
    %v1277 = vadd.f32 0.0, %v1276
    %v1278 = vpop.f32.mrb[0].mxu0
    %1279 = vmatprep.mubr.f32.mxu0 0.0
    %1280 = vmatmul.mubr.f32.gmra.mrb[0].mxu0 %v1162
    %v1281 = vpop.f32.mrb[0].mxu0
    %v1282 = vadd.f32 0.0, %v1281
    %v1283 = vpop.f32.mrb[0].mxu0
    %1284 = vmatprep.mubr.f32.mxu0 0.0
    %1285 = vmatmul.mubr.f32.gmra.mrb[0].mxu0 %v1165
    %v1286 = vpop.f32.mrb[0].mxu0
    %v1287 = vadd.f32 0.0, %v1286
    %v1288 = vpop.f32.mrb[0].mxu0
    %1289 = vmatprep.mubr.f32.mxu0 0.0
    %1290 = vmatmul.mubr.f32.gmra.mrb[0].mxu0 %v1168
    %v1291 = vpop.f32.mrb[0].mxu0
    %v1292 = vadd.f32 0.0, %v1291
    %v1293 = vpop.f32.mrb[0].mxu0
    %1294 = vmatprep.mubr.f32.mxu0 0.0
    %1295 = vmatmul.mubr.f32.gmra.mrb[0].mxu0 %v1171
    %v1296 = vpop.f32.mrb[0].mxu0
    %v1297 = vadd.f32 0.0, %v1296
    %v1298 = vpop.f32.mrb[0].mxu0
    %1299 = vmatprep.mubr.f32.mxu0 0.0
    %1300 = vmatmul.mubr.f32.gmra.mrb[0].mxu0 %v1174
    %v1301 = vpop.f32.mrb[0].mxu0
    %v1302 = vadd.f32 0.0, %v1301
    %v1303 = vpop.f32.mrb[0].mxu0
    %1304 = vmatprep.mubr.f32.mxu0 0.0
    %1305 = vmatmul.mubr.f32.gmra.mrb[0].mxu0 %v1177
    %v1306 = vpop.f32.mrb[0].mxu0
    %v1307 = vadd.f32 0.0, %v1306
    %v1308 = vpop.f32.mrb[0].mxu0
    %1309 = vmatprep.mubr.f32.mxu0 0.0
    %1310 = vmatmul.mubr.f32.gmra.mrb[0].mxu0 %v1180
    %v1311 = vpop.f32.mrb[0].mxu0
    %v1312 = vadd.f32 0.0, %v1311
    %v1313 = vpop.f32.mrb[0].mxu0
    %1314 = vmatprep.mubr.f32.mxu0 0.0
    %1315 = vmatmul.mubr.f32.gmra.mrb[0].mxu0 %v1183
    %v1316 = vpop.f32.mrb[0].mxu0
    %v1317 = vadd.f32 0.0, %v1316
    %v1318 = vpop.f32.mrb[0].mxu0
    %1319 = vmatprep.mubr.f32.mxu0 0.0
    %1320 = vmatmul.mubr.f32.gmra.mrb[0].mxu0 %v1186
    %v1321 = vpop.f32.mrb[0].mxu0
    %v1322 = vadd.f32 0.0, %v1321
    %v1323 = vpop.f32.mrb[0].mxu0
    %1324 = vmatprep.mubr.f32.mxu0 0.0
    %1325 = vmatmul.mubr.f32.gmra.mrb[0].mxu0 %v1189
    %v1326 = vpop.f32.mrb[0].mxu0
    %v1327 = vadd.f32 0.0, %v1326
    %v1328 = vpop.f32.mrb[0].mxu0
    %1329 = vmatprep.mubr.f32.mxu0 0.0
    %1330 = vmatmul.mubr.f32.gmra.mrb[0].mxu0 %v1192
    %v1331 = vpop.f32.mrb[0].mxu0
    %v1332 = vadd.f32 0.0, %v1331
    %v1333 = vpop.f32.mrb[0].mxu0
    %1334 = vmatprep.mubr.f32.mxu0 0.0
    %1335 = vmatmul.mubr.f32.gmra.mrb[0].mxu0 %v1195
    %v1336 = vpop.f32.mrb[0].mxu0
    %v1337 = vadd.f32 0.0, %v1336
    %v1338 = vpop.f32.mrb[0].mxu0
    %1339 = vmatprep.mubr.f32.mxu0 0.0
    %1340 = vmatmul.mubr.f32.gmra.mrb[0].mxu0 %v1198
    %v1341 = vpop.f32.mrb[0].mxu0
    %v1342 = vadd.f32 0.0, %v1341
    %v1343 = vpop.f32.mrb[0].mxu0
    %1344 = vdwg.mxu0
    %v1345 = vmul.f32 %v1267, %v397
    %v1346 = vmul.f32 %v1272, %v403
    %v1347 = vmul.f32 %v1277, %v409
    %v1348 = vmul.f32 %v1282, %v415
    %v1349 = vmul.f32 %v1287, %v421
    %v1350 = vmul.f32 %v1292, %v427
    %v1351 = vmul.f32 %v1297, %v433
    %v1352 = vmul.f32 %v1302, %v439
    %v1353 = vmul.f32 %v1307, %v445
    %v1354 = vmul.f32 %v1312, %v451
    %v1355 = vmul.f32 %v1317, %v457
    %v1356 = vmul.f32 %v1322, %v463
    %v1357 = vmul.f32 %v1327, %v469
    %v1358 = vmul.f32 %v1332, %v475
    %v1359 = vmul.f32 %v1337, %v481
    %v1360 = vmul.f32 %v1342, %v487
    %v1361 = vrot.slane %v1345, 4
    %v1362 = vadd.f32 %v1345, %v1361
    %v1363 = vrot.slane %v1362, 2
    %v1364 = vadd.f32 %v1362, %v1363
    %v1365 = vrot.slane %v1364, 1
    %v1366 = vadd.f32 %v1364, %v1365
    %v1367 = vrot.slane %v1346, 4
    %v1368 = vadd.f32 %v1346, %v1367
    %v1369 = vrot.slane %v1368, 2
    %v1370 = vadd.f32 %v1368, %v1369
    %v1371 = vrot.slane %v1370, 1
    %v1372 = vadd.f32 %v1370, %v1371
    %v1373 = vrot.slane %v1347, 4
    %v1374 = vadd.f32 %v1347, %v1373
    %v1375 = vrot.slane %v1374, 2
    %v1376 = vadd.f32 %v1374, %v1375
    %v1377 = vrot.slane %v1376, 1
    %v1378 = vadd.f32 %v1376, %v1377
    %v1379 = vrot.slane %v1348, 4
    %v1380 = vadd.f32 %v1348, %v1379
    %v1381 = vrot.slane %v1380, 2
    %v1382 = vadd.f32 %v1380, %v1381
    %v1383 = vrot.slane %v1382, 1
    %v1384 = vadd.f32 %v1382, %v1383
    %v1385 = vrot.slane %v1349, 4
    %v1386 = vadd.f32 %v1349, %v1385
    %v1387 = vrot.slane %v1386, 2
    %v1388 = vadd.f32 %v1386, %v1387
    %v1389 = vrot.slane %v1388, 1
    %v1390 = vadd.f32 %v1388, %v1389
    %v1391 = vrot.slane %v1350, 4
    %v1392 = vadd.f32 %v1350, %v1391
    %v1393 = vrot.slane %v1392, 2
    %v1394 = vadd.f32 %v1392, %v1393
    %v1395 = vrot.slane %v1394, 1
    %v1396 = vadd.f32 %v1394, %v1395
    %v1397 = vrot.slane %v1351, 4
    %v1398 = vadd.f32 %v1351, %v1397
    %v1399 = vrot.slane %v1398, 2
    %v1400 = vadd.f32 %v1398, %v1399
    %v1401 = vrot.slane %v1400, 1
    %v1402 = vadd.f32 %v1400, %v1401
    %v1403 = vrot.slane %v1352, 4
    %v1404 = vadd.f32 %v1352, %v1403
    %v1405 = vrot.slane %v1404, 2
    %v1406 = vadd.f32 %v1404, %v1405
    %v1407 = vrot.slane %v1406, 1
    %v1408 = vadd.f32 %v1406, %v1407
    %v1409 = vrot.slane %v1353, 4
    %v1410 = vadd.f32 %v1353, %v1409
    %v1411 = vrot.slane %v1410, 2
    %v1412 = vadd.f32 %v1410, %v1411
    %v1413 = vrot.slane %v1412, 1
    %v1414 = vadd.f32 %v1412, %v1413
    %v1415 = vrot.slane %v1354, 4
    %v1416 = vadd.f32 %v1354, %v1415
    %v1417 = vrot.slane %v1416, 2
    %v1418 = vadd.f32 %v1416, %v1417
    %v1419 = vrot.slane %v1418, 1
    %v1420 = vadd.f32 %v1418, %v1419
    %v1421 = vrot.slane %v1355, 4
    %v1422 = vadd.f32 %v1355, %v1421
    %v1423 = vrot.slane %v1422, 2
    %v1424 = vadd.f32 %v1422, %v1423
    %v1425 = vrot.slane %v1424, 1
    %v1426 = vadd.f32 %v1424, %v1425
    %v1427 = vrot.slane %v1356, 4
    %v1428 = vadd.f32 %v1356, %v1427
    %v1429 = vrot.slane %v1428, 2
    %v1430 = vadd.f32 %v1428, %v1429
    %v1431 = vrot.slane %v1430, 1
    %v1432 = vadd.f32 %v1430, %v1431
    %v1433 = vrot.slane %v1357, 4
    %v1434 = vadd.f32 %v1357, %v1433
    %v1435 = vrot.slane %v1434, 2
    %v1436 = vadd.f32 %v1434, %v1435
    %v1437 = vrot.slane %v1436, 1
    %v1438 = vadd.f32 %v1436, %v1437
    %v1439 = vrot.slane %v1358, 4
    %v1440 = vadd.f32 %v1358, %v1439
    %v1441 = vrot.slane %v1440, 2
    %v1442 = vadd.f32 %v1440, %v1441
    %v1443 = vrot.slane %v1442, 1
    %v1444 = vadd.f32 %v1442, %v1443
    %v1445 = vrot.slane %v1359, 4
    %v1446 = vadd.f32 %v1359, %v1445
    %v1447 = vrot.slane %v1446, 2
    %v1448 = vadd.f32 %v1446, %v1447
    %v1449 = vrot.slane %v1448, 1
    %v1450 = vadd.f32 %v1448, %v1449
    %v1451 = vrot.slane %v1360, 4
    %v1452 = vadd.f32 %v1360, %v1451
    %v1453 = vrot.slane %v1452, 2
    %v1454 = vadd.f32 %v1452, %v1453
    %v1455 = vrot.slane %v1454, 1
    %v1456 = vadd.f32 %v1454, %v1455
    %v1457 = vld [vmem:[#allocation8] sm:$0xff]
    %v1458 = vld [vmem:[#allocation8 + $0x8] sm:$0xff]
    %v1459 = vld [vmem:[#allocation8 + $0x10] sm:$0xff]
    %v1460 = vld [vmem:[#allocation8 + $0x18] sm:$0xff]
    %v1461 = vld [vmem:[#allocation8 + $0x20] sm:$0xff]
    %v1462 = vld [vmem:[#allocation8 + $0x28] sm:$0xff]
    %v1463 = vld [vmem:[#allocation8 + $0x30] sm:$0xff]
    %v1464 = vld [vmem:[#allocation8 + $0x38] sm:$0xff]
    %v1465 = vld [vmem:[#allocation8 + $0x40] sm:$0xff]
    %v1466 = vld [vmem:[#allocation8 + $0x48] sm:$0xff]
    %v1467 = vld [vmem:[#allocation8 + $0x50] sm:$0xff]
    %v1468 = vld [vmem:[#allocation8 + $0x58] sm:$0xff]
    %v1469 = vld [vmem:[#allocation8 + $0x60] sm:$0xff]
    %v1470 = vld [vmem:[#allocation8 + $0x68] sm:$0xff]
    %v1471 = vld [vmem:[#allocation8 + $0x70] sm:$0xff]
    %v1472 = vld [vmem:[#allocation8 + $0x78] sm:$0xff]
    %v1473 = vld [vmem:[#allocation10] sm:$0x1]
    %v1475 = vlaneseq
    %v1476 = vshrl.u32 %v1475, 7
    %v1477 = vsub.s32 0, %v1476
    %v1478 = vrot.slane %v1473, %v1477
    %v1496 = vsel %vm167, %v1372, %v1366
    %v1497 = vsel %vm170, %v1378, %v1496
    %v1498 = vsel %vm173, %v1384, %v1497
    %v1499 = vsel %vm176, %v1390, %v1498
    %v1500 = vsel %vm179, %v1396, %v1499
    %v1501 = vsel %vm182, %v1402, %v1500
    %v1502 = vsel %vm185, %v1408, %v1501
    %v1503 = vsel %vm167, %v1420, %v1414
    %v1504 = vsel %vm170, %v1426, %v1503
    %v1505 = vsel %vm173, %v1432, %v1504
    %v1506 = vsel %vm176, %v1438, %v1505
    %v1507 = vsel %vm179, %v1444, %v1506
    %v1508 = vsel %vm182, %v1450, %v1507
    %v1509 = vsel %vm185, %v1456, %v1508
    %1512 = vmatprep.subr.mxu0 0.0
    %1513 = vmatpush1.msra.mxu0 %v1457
    %1514 = vmatprep.subr.mxu0 0.0
    %1515 = vmatpush1.msra.mxu0 %v1458
    %1516 = vmatprep.subr.mxu0 0.0
    %1517 = vmatpush1.msra.mxu0 %v1459
    %1518 = vmatprep.subr.mxu0 0.0
    %1519 = vmatpush1.msra.mxu0 %v1460
    %1520 = vmatprep.subr.mxu0 0.0
    %1521 = vmatpush1.msra.mxu0 %v1461
    %1522 = vmatprep.subr.mxu0 0.0
    %1523 = vmatpush1.msra.mxu0 %v1462
    %1524 = vmatprep.subr.mxu0 0.0
    %1525 = vmatpush1.msra.mxu0 %v1463
    %1526 = vmatprep.subr.mxu0 0.0
    %1527 = vmatpush1.msra.mxu0 %v1464
    %1528 = vmatprep.subr.mxu0 0.0
    %1529 = vmatpush1.msra.mxu0 %v1465
    %1530 = vmatprep.subr.mxu0 0.0
    %1531 = vmatpush1.msra.mxu0 %v1466
    %1532 = vmatprep.subr.mxu0 0.0
    %1533 = vmatpush1.msra.mxu0 %v1467
    %1534 = vmatprep.subr.mxu0 0.0
    %1535 = vmatpush1.msra.mxu0 %v1468
    %1536 = vmatprep.subr.mxu0 0.0
    %1537 = vmatpush1.msra.mxu0 %v1469
    %1538 = vmatprep.subr.mxu0 0.0
    %1539 = vmatpush1.msra.mxu0 %v1470
    %1540 = vmatprep.subr.mxu0 0.0
    %1541 = vmatpush1.msra.mxu0 %v1471
    %1542 = vmatprep.subr.mxu0 0.0
    %1543 = vmatpush1.msra.mxu0 %v1472
    %1544 = vmatprep.subr.mxu0 0.0
    %1545 = vmatpush1.msra.mxu0 0.0
    %1546 = vmatprep.subr.mxu0 0.0
    %1547 = vmatpush1.msra.mxu0 0.0
    %1548 = vmatprep.subr.mxu0 0.0
    %1549 = vmatpush1.msra.mxu0 0.0
    %1550 = vmatprep.subr.mxu0 0.0
    %1551 = vmatpush1.msra.mxu0 0.0
    %1552 = vmatprep.subr.mxu0 0.0
    %1553 = vmatpush1.msra.mxu0 0.0
    %1554 = vmatprep.subr.mxu0 0.0
    %1555 = vmatpush1.msra.mxu0 0.0
    %1556 = vmatprep.subr.mxu0 0.0
    %1557 = vmatpush1.msra.mxu0 0.0
    %1558 = vmatprep.subr.mxu0 0.0
    %1559 = vmatpush1.msra.mxu0 0.0
    %1560 = vmatprep.subr.mxu0 0.0
    %1561 = vmatpush1.msra.mxu0 0.0
    %1562 = vmatprep.subr.mxu0 0.0
    %1563 = vmatpush1.msra.mxu0 0.0
    %1564 = vmatprep.subr.mxu0 0.0
    %1565 = vmatpush1.msra.mxu0 0.0
    %1566 = vmatprep.subr.mxu0 0.0
    %1567 = vmatpush1.msra.mxu0 0.0
    %1568 = vmatprep.subr.mxu0 0.0
    %1569 = vmatpush1.msra.mxu0 0.0
    %1570 = vmatprep.subr.mxu0 0.0
    %1571 = vmatpush1.msra.mxu0 0.0
    %1572 = vmatprep.subr.mxu0 0.0
    %1573 = vmatpush1.msra.mxu0 0.0
    %1574 = vmatprep.subr.mxu0 0.0
    %1575 = vmatpush1.msra.mxu0 0.0
    %1576 = vmatprep.mubr.f32.mxu0 0.0
    %1577 = vmatmul.mubr.f32.gmra.mrb[0].mxu0 %v1502
    %v1578 = vpop.f32.mrb[0].mxu0
    %v1579 = vadd.f32 %v1478, %v1578
    %v1580 = vpop.f32.mrb[0].mxu0
    %1581 = vmatprep.mubr.f32.mxu0 0.0
    %1582 = vmatmul.mubr.f32.gmra.mrb[0].mxu0 %v1509
    %v1583 = vpop.f32.mrb[0].mxu0
    %v1584 = vadd.f32 %v1478, %v1583
    %v1585 = vpop.f32.mrb[0].mxu0
    %1586 = vdwg.mxu0
    %1587 = vst [vmem:[#allocation14] sm:$0xff] %v1579
    %1588 = vst [vmem:[#allocation14 + $0x8] sm:$0xff] %v1584
    // Predicated region
    $region58: #{tpu_custom_call.1} parent=1 // pred_check
      _
    $region59: #{tpu_custom_call.1} parent=1 // pred_check_branch
      %1590 = sbr.rel (0) target = $region61
    $region60: #{tpu_custom_call.1} parent=1 // pred_region
      %s1592 = ssub.s32 256, 256
      %1593 = vsyncadd [#allocation4], %s1592
      %s1594 = sshll.u32 [#allocation14], 4
      %s1595 = int_to_ptr.vmem [resolvable:$true] %s1594
      %1600 = dma.vmem_to_hbm [thread:$0]  %s1595, 256, %s7, [#allocation4], 128, 128, 8
    $region61: #{tpu_custom_call.1} parent=1 // pred_fallthru
      _
    // Predicated region
    $region62: #{tpu_custom_call.1} parent=1 // pred_check
      _
    $region63: #{tpu_custom_call.1} parent=1 // pred_check_branch
      %1602 = sbr.rel (0) target = $region65
    $region64: #{tpu_custom_call.1} parent=1 // pred_region
      %1603 = dma.done [#allocation4], 256
    $region65: #{tpu_custom_call.1} parent=1 // pred_fallthru
      _
    %1604 = vsyncpa [#allocation3], 1
    %1605 = vsyncpa [#allocation6], 1
    %1606 = vsyncpa [#allocation9], 1
    %1607 = vsyncpa [#allocation12], 1
    %1608 = vsyncpa [#allocation4], 1

// kernel: tpu_custom_call.1
$region0: #{tpu_custom_call.1}
  #allocation0 [shape = 'u32[]', space=smem, size = 0x4, offset = 0x4, fixed_abs, tag = 'smem constant byte address 0x4 - core index']
  #allocation1 [shape = 'u32[144,128]{1,0:T(1,128)}', space=vmem, size = 0x12000, scoped, tag = 'internal scratch']
  %s0 = inlined_call_operand.hbm [shape: f32[16,8,128], index: 0, kind: input, shape index: {}]
  %s1 = inlined_call_operand.hbm [shape: f32[128,128], index: 1, kind: input, shape index: {}]
  %s2 = inlined_call_operand.hbm [shape: f32[128,256], index: 2, kind: input, shape index: {}]
  %s3 = inlined_call_operand.hbm [shape: f32[128,128], index: 3, kind: input, shape index: {}]
  %s4 = inlined_call_operand.hbm [shape: f32[1,128], index: 4, kind: input, shape index: {}]
  %s5 = inlined_call_operand.hbm [shape: f32[128,8], index: 5, kind: input, shape index: {}]
  %s6 = inlined_call_operand.hbm [shape: f32[8,128], index: 6, kind: input, shape index: {}]
  %s7 = inlined_call_operand.hbm [shape: f32[16,128], index: 7, kind: output, shape index: {}]
  %s8 = sld [smem:[#allocation0]]
  $region66: #{tpu_custom_call.1} parent=0
    _
  %s10 = ssub.s32 1, %s8
  %s11 = scalar_select 0, %s10, %s8
  $region1: #{tpu_custom_call.1} parent=0
    #allocation2 [shape = 'u8[65536]{0}', space=vmem, size = 0x10000, scoped, tag = 'input window, operand 0, single buffered']
    #allocation3 [shape = 's32[1]{0}', space=sflag, size = 0x4, scoped, tag = 'scoped memory for tpu_custom_call.1']
    #allocation4 [shape = 's32[1]{0}', space=sflag, size = 0x4, scoped, tag = 'scoped memory for tpu_custom_call.1']
    #allocation5 [shape = 'u8[65536]{0}', space=vmem, size = 0x10000, scoped, tag = 'input window, operand 1, single buffered']
    #allocation6 [shape = 's32[1]{0}', space=sflag, size = 0x4, scoped, tag = 'scoped memory for tpu_custom_call.1']
    #allocation7 [shape = 'u8[131072]{0}', space=vmem, size = 0x20000, scoped, tag = 'input window, operand 2, single buffered']
    #allocation8 [shape = 'u8[65536]{0}', space=vmem, size = 0x10000, scoped, tag = 'input window, operand 3, single buffered']
    #allocation9 [shape = 's32[1]{0}', space=sflag, size = 0x4, scoped, tag = 'scoped memory for tpu_custom_call.1']
    #allocation10 [shape = 'u8[512]{0}', space=vmem, size = 0x400, scoped, tag = 'input window, operand 4, single buffered']
    #allocation11 [shape = 'u8[65536]{0}', space=vmem, size = 0x10000, scoped, tag = 'input window, operand 5, single buffered']
    #allocation12 [shape = 's32[1]{0}', space=sflag, size = 0x4, scoped, tag = 'scoped memory for tpu_custom_call.1']
    #allocation13 [shape = 'u8[4096]{0}', space=vmem, size = 0x1000, scoped, tag = 'input window, operand 6, single buffered']
    #allocation14 [shape = 'u8[8192]{0}', space=vmem, size = 0x2000, scoped, tag = 'output window, operand 0, single buffered']
    %12 = vsyncpa [#allocation3], 0
    %13 = vsyncpa [#allocation6], 0
    %14 = vsyncpa [#allocation9], 0
    %15 = vsyncpa [#allocation12], 0
    %16 = vsyncpa [#allocation4], 0
    // Predicated region
    $region2: #{tpu_custom_call.1} parent=1 // pred_check
      _
    $region3: #{tpu_custom_call.1} parent=1 // pred_check_branch
      %18 = sbr.rel (0) target = $region5
    $region4: #{tpu_custom_call.1} parent=1 // pred_region
      %s20 = ssub.s32 2048, 2048
      %21 = vsyncadd [#allocation3], %s20
      %s22 = sshll.u32 [#allocation2], 4
      %s23 = int_to_ptr.vmem [resolvable:$true] %s22
      %28 = dma.hbm_to_vmem [thread:$0]  %s0, 2048, %s23, [#allocation3], 128, 128, 8
    $region5: #{tpu_custom_call.1} parent=1 // pred_fallthru
      _
    // Predicated region
    $region6: #{tpu_custom_call.1} parent=1 // pred_check
      _
    $region7: #{tpu_custom_call.1} parent=1 // pred_check_branch
      %30 = sbr.rel (0) target = $region9
    $region8: #{tpu_custom_call.1} parent=1 // pred_region
      %s32 = ssub.s32 2048, 2048
      %33 = vsyncadd [#allocation6], %s32
      %s34 = sshll.u32 [#allocation5], 4
      %s35 = int_to_ptr.vmem [resolvable:$true] %s34
      %40 = dma.hbm_to_vmem [thread:$0]  %s1, 2048, %s35, [#allocation6], 128, 128, 8
    $region9: #{tpu_custom_call.1} parent=1 // pred_fallthru
      _
    // Predicated region
    $region10: #{tpu_custom_call.1} parent=1 // pred_check
      _
    $region11: #{tpu_custom_call.1} parent=1 // pred_check_branch
      %42 = sbr.rel (0) target = $region13
    $region12: #{tpu_custom_call.1} parent=1 // pred_region
      %s44 = ssub.s32 4096, 4096
      %45 = vsyncadd [#allocation6], %s44
      %s46 = sshll.u32 [#allocation7], 4
      %s47 = int_to_ptr.vmem [resolvable:$true] %s46
      %52 = dma.hbm_to_vmem [thread:$0]  %s2, 4096, %s47, [#allocation6], 256, 256, 16
    $region13: #{tpu_custom_call.1} parent=1 // pred_fallthru
      _
    // Predicated region
    $region14: #{tpu_custom_call.1} parent=1 // pred_check
      _
    $region15: #{tpu_custom_call.1} parent=1 // pred_check_branch
      %54 = sbr.rel (0) target = $region17
    $region16: #{tpu_custom_call.1} parent=1 // pred_region
      %s56 = ssub.s32 2048, 2048
      %57 = vsyncadd [#allocation9], %s56
      %s58 = sshll.u32 [#allocation8], 4
      %s59 = int_to_ptr.vmem [resolvable:$true] %s58
      %64 = dma.hbm_to_vmem [thread:$0]  %s3, 2048, %s59, [#allocation9], 128, 128, 8
    $region17: #{tpu_custom_call.1} parent=1 // pred_fallthru
      _
    // Predicated region
    $region18: #{tpu_custom_call.1} parent=1 // pred_check
      _
    $region19: #{tpu_custom_call.1} parent=1 // pred_check_branch
      %66 = sbr.rel (0) target = $region21
    $region20: #{tpu_custom_call.1} parent=1 // pred_region
      %s68 = ssub.s32 16, 16
      %69 = vsyncadd [#allocation9], %s68
      %s71 = sshll.u32 [#allocation10], 4
      %s72 = int_to_ptr.vmem [resolvable:$true] %s71
      %74 = dma.hbm_to_vmem [thread:$0]  %s4, 16, %s72, [#allocation9]
    $region21: #{tpu_custom_call.1} parent=1 // pred_fallthru
      _
    // Predicated region
    $region22: #{tpu_custom_call.1} parent=1 // pred_check
      _
    $region23: #{tpu_custom_call.1} parent=1 // pred_check_branch
      %76 = sbr.rel (0) target = $region25
    $region24: #{tpu_custom_call.1} parent=1 // pred_region
      %s78 = ssub.s32 2048, 2048
      %79 = vsyncadd [#allocation12], %s78
      %s80 = sshll.u32 [#allocation11], 4
      %s81 = int_to_ptr.vmem [resolvable:$true] %s80
      %86 = dma.hbm_to_vmem [thread:$0]  %s5, 2048, %s81, [#allocation12], 128, 128, 8
    $region25: #{tpu_custom_call.1} parent=1 // pred_fallthru
      _
    // Predicated region
    $region26: #{tpu_custom_call.1} parent=1 // pred_check
      _
    $region27: #{tpu_custom_call.1} parent=1 // pred_check_branch
      %88 = sbr.rel (0) target = $region29
    $region28: #{tpu_custom_call.1} parent=1 // pred_region
      %s90 = ssub.s32 128, 128
      %91 = vsyncadd [#allocation12], %s90
      %s93 = sshll.u32 [#allocation13], 4
      %s94 = int_to_ptr.vmem [resolvable:$true] %s93
      %96 = dma.hbm_to_vmem [thread:$0]  %s6, 128, %s94, [#allocation12]
    $region29: #{tpu_custom_call.1} parent=1 // pred_fallthru
      _
    // Predicated region
    $region30: #{tpu_custom_call.1} parent=1 // pred_check
      _
    $region31: #{tpu_custom_call.1} parent=1 // pred_check_branch
      %98 = sbr.rel (0) target = $region33
    $region32: #{tpu_custom_call.1} parent=1 // pred_region
      %99 = dma.done [#allocation3], 2048
    $region33: #{tpu_custom_call.1} parent=1 // pred_fallthru
      _
    // Predicated region
    $region34: #{tpu_custom_call.1} parent=1 // pred_check
      _
    $region35: #{tpu_custom_call.1} parent=1 // pred_check_branch
      %101 = sbr.rel (0) target = $region37
    $region36: #{tpu_custom_call.1} parent=1 // pred_region
      %102 = dma.done [#allocation6], 2048
    $region37: #{tpu_custom_call.1} parent=1 // pred_fallthru
      _
    // Predicated region
    $region38: #{tpu_custom_call.1} parent=1 // pred_check
      _
    $region39: #{tpu_custom_call.1} parent=1 // pred_check_branch
      %104 = sbr.rel (0) target = $region41
    $region40: #{tpu_custom_call.1} parent=1 // pred_region
      %105 = dma.done [#allocation6], 4096
    $region41: #{tpu_custom_call.1} parent=1 // pred_fallthru
      _
    // Predicated region
    $region42: #{tpu_custom_call.1} parent=1 // pred_check
      _
    $region43: #{tpu_custom_call.1} parent=1 // pred_check_branch
      %107 = sbr.rel (0) target = $region45
    $region44: #{tpu_custom_call.1} parent=1 // pred_region
      %108 = dma.done [#allocation9], 2048
    $region45: #{tpu_custom_call.1} parent=1 // pred_fallthru
      _
    // Predicated region
    $region46: #{tpu_custom_call.1} parent=1 // pred_check
      _
    $region47: #{tpu_custom_call.1} parent=1 // pred_check_branch
      %110 = sbr.rel (0) target = $region49
    $region48: #{tpu_custom_call.1} parent=1 // pred_region
      %111 = dma.done [#allocation9], 16
    $region49: #{tpu_custom_call.1} parent=1 // pred_fallthru
      _
    // Predicated region
    $region50: #{tpu_custom_call.1} parent=1 // pred_check
      _
    $region51: #{tpu_custom_call.1} parent=1 // pred_check_branch
      %113 = sbr.rel (0) target = $region53
    $region52: #{tpu_custom_call.1} parent=1 // pred_region
      %114 = dma.done [#allocation12], 2048
    $region53: #{tpu_custom_call.1} parent=1 // pred_fallthru
      _
    // Predicated region
    $region54: #{tpu_custom_call.1} parent=1 // pred_check
      _
    $region55: #{tpu_custom_call.1} parent=1 // pred_check_branch
      %116 = sbr.rel (0) target = $region57
    $region56: #{tpu_custom_call.1} parent=1 // pred_region
      %117 = dma.done [#allocation12], 128
    $region57: #{tpu_custom_call.1} parent=1 // pred_fallthru
      _
    %v118 = vld [vmem:[#allocation2] sm:$0x1]
    %v119 = vld [vmem:[#allocation2 + $0x8] sm:$0x1]
    %v120 = vld [vmem:[#allocation2 + $0x10] sm:$0x1]
    %v121 = vld [vmem:[#allocation2 + $0x18] sm:$0x1]
    %v122 = vld [vmem:[#allocation2 + $0x20] sm:$0x1]
    %v123 = vld [vmem:[#allocation2 + $0x28] sm:$0x1]
    %v124 = vld [vmem:[#allocation2 + $0x30] sm:$0x1]
    %v125 = vld [vmem:[#allocation2 + $0x38] sm:$0x1]
    %v126 = vld [vmem:[#allocation2 + $0x40] sm:$0x1]
    %v127 = vld [vmem:[#allocation2 + $0x48] sm:$0x1]
    %v128 = vld [vmem:[#allocation2 + $0x50] sm:$0x1]
    %v129 = vld [vmem:[#allocation2 + $0x58] sm:$0x1]
    %v130 = vld [vmem:[#allocation2 + $0x60] sm:$0x1]
    %v131 = vld [vmem:[#allocation2 + $0x68] sm:$0x1]
    %v132 = vld [vmem:[#allocation2 + $0x70] sm:$0x1]
    %v133 = vld [vmem:[#allocation2 + $0x78] sm:$0x1]
    %v134 = vld [vmem:[#allocation5] sm:$0xff]
    %v135 = vld [vmem:[#allocation5 + $0x8] sm:$0xff]
    %v136 = vld [vmem:[#allocation5 + $0x10] sm:$0xff]
    %v137 = vld [vmem:[#allocation5 + $0x18] sm:$0xff]
    %v138 = vld [vmem:[#allocation5 + $0x20] sm:$0xff]
    %v139 = vld [vmem:[#allocation5 + $0x28] sm:$0xff]
    %v140 = vld [vmem:[#allocation5 + $0x30] sm:$0xff]
    %v141 = vld [vmem:[#allocation5 + $0x38] sm:$0xff]
    %v142 = vld [vmem:[#allocation5 + $0x40] sm:$0xff]
    %v143 = vld [vmem:[#allocation5 + $0x48] sm:$0xff]
    %v144 = vld [vmem:[#allocation5 + $0x50] sm:$0xff]
    %v145 = vld [vmem:[#allocation5 + $0x58] sm:$0xff]
    %v146 = vld [vmem:[#allocation5 + $0x60] sm:$0xff]
    %v147 = vld [vmem:[#allocation5 + $0x68] sm:$0xff]
    %v148 = vld [vmem:[#allocation5 + $0x70] sm:$0xff]
    %v149 = vld [vmem:[#allocation5 + $0x78] sm:$0xff]
    %v166 = vrot.slane %v119, 7
    %vm167 = vcmask 1041409
    %v168 = vsel %vm167, %v166, %v118
    %v169 = vrot.slane %v120, 6
    %vm170 = vcmask 1042434
    %v171 = vsel %vm170, %v169, %v168
    %v172 = vrot.slane %v121, 5
    %vm173 = vcmask 1043459
    %v174 = vsel %vm173, %v172, %v171
    %v175 = vrot.slane %v122, 4
    %vm176 = vcmask 1044484
    %v177 = vsel %vm176, %v175, %v174
    %v178 = vrot.slane %v123, 3
    %vm179 = vcmask 1045509
    %v180 = vsel %vm179, %v178, %v177
    %v181 = vrot.slane %v124, 2
    %vm182 = vcmask 1046534
    %v183 = vsel %vm182, %v181, %v180
    %v184 = vrot.slane %v125, 1
    %vm185 = vcmask 1047559
    %v186 = vsel %vm185, %v184, %v183
    %v187 = vrot.slane %v127, 7
    %v188 = vsel %vm167, %v187, %v126
    %v189 = vrot.slane %v128, 6
    %v190 = vsel %vm170, %v189, %v188
    %v191 = vrot.slane %v129, 5
    %v192 = vsel %vm173, %v191, %v190
    %v193 = vrot.slane %v130, 4
    %v194 = vsel %vm176, %v193, %v192
    %v195 = vrot.slane %v131, 3
    %v196 = vsel %vm179, %v195, %v194
    %v197 = vrot.slane %v132, 2
    %v198 = vsel %vm182, %v197, %v196
    %v199 = vrot.slane %v133, 1
    %v200 = vsel %vm185, %v199, %v198
    %203 = vmatprep.subr.mxu0 0.0
    %204 = vmatpush1.msra.mxu0 %v134
    %205 = vmatprep.subr.mxu0 0.0
    %206 = vmatpush1.msra.mxu0 %v135
    %207 = vmatprep.subr.mxu0 0.0
    %208 = vmatpush1.msra.mxu0 %v136
    %209 = vmatprep.subr.mxu0 0.0
    %210 = vmatpush1.msra.mxu0 %v137
    %211 = vmatprep.subr.mxu0 0.0
    %212 = vmatpush1.msra.mxu0 %v138
    %213 = vmatprep.subr.mxu0 0.0
    %214 = vmatpush1.msra.mxu0 %v139
    %215 = vmatprep.subr.mxu0 0.0
    %216 = vmatpush1.msra.mxu0 %v140
    %217 = vmatprep.subr.mxu0 0.0
    %218 = vmatpush1.msra.mxu0 %v141
    %219 = vmatprep.subr.mxu0 0.0
    %220 = vmatpush1.msra.mxu0 %v142
    %221 = vmatprep.subr.mxu0 0.0
    %222 = vmatpush1.msra.mxu0 %v143
    %223 = vmatprep.subr.mxu0 0.0
    %224 = vmatpush1.msra.mxu0 %v144
    %225 = vmatprep.subr.mxu0 0.0
    %226 = vmatpush1.msra.mxu0 %v145
    %227 = vmatprep.subr.mxu0 0.0
    %228 = vmatpush1.msra.mxu0 %v146
    %229 = vmatprep.subr.mxu0 0.0
    %230 = vmatpush1.msra.mxu0 %v147
    %231 = vmatprep.subr.mxu0 0.0
    %232 = vmatpush1.msra.mxu0 %v148
    %233 = vmatprep.subr.mxu0 0.0
    %234 = vmatpush1.msra.mxu0 %v149
    %235 = vmatprep.subr.mxu0 0.0
    %236 = vmatpush1.msra.mxu0 0.0
    %237 = vmatprep.subr.mxu0 0.0
    %238 = vmatpush1.msra.mxu0 0.0
    %239 = vmatprep.subr.mxu0 0.0
    %240 = vmatpush1.msra.mxu0 0.0
    %241 = vmatprep.subr.mxu0 0.0
    %242 = vmatpush1.msra.mxu0 0.0
    %243 = vmatprep.subr.mxu0 0.0
    %244 = vmatpush1.msra.mxu0 0.0
    %245 = vmatprep.subr.mxu0 0.0
    %246 = vmatpush1.msra.mxu0 0.0
    %247 = vmatprep.subr.mxu0 0.0
    %248 = vmatpush1.msra.mxu0 0.0
    %249 = vmatprep.subr.mxu0 0.0
    %250 = vmatpush1.msra.mxu0 0.0
    %251 = vmatprep.subr.mxu0 0.0
    %252 = vmatpush1.msra.mxu0 0.0
    %253 = vmatprep.subr.mxu0 0.0
    %254 = vmatpush1.msra.mxu0 0.0
    %255 = vmatprep.subr.mxu0 0.0
    %256 = vmatpush1.msra.mxu0 0.0
    %257 = vmatprep.subr.mxu0 0.0
    %258 = vmatpush1.msra.mxu0 0.0
    %259 = vmatprep.subr.mxu0 0.0
    %260 = vmatpush1.msra.mxu0 0.0
    %261 = vmatprep.subr.mxu0 0.0
    %262 = vmatpush1.msra.mxu0 0.0
    %263 = vmatprep.subr.mxu0 0.0
    %264 = vmatpush1.msra.mxu0 0.0
    %265 = vmatprep.subr.mxu0 0.0
    %266 = vmatpush1.msra.mxu0 0.0
    %267 = vmatprep.mubr.f32.mxu0 0.0
    %268 = vmatmul.mubr.f32.gmra.mrb[0].mxu0 %v186
    %v269 = vpop.f32.mrb[0].mxu0
    %v270 = vadd.f32 0.0, %v269
    %v271 = vpop.f32.mrb[0].mxu0
    %272 = vmatprep.mubr.f32.mxu0 0.0
    %273 = vmatmul.mubr.f32.gmra.mrb[0].mxu0 %v200
    %v274 = vpop.f32.mrb[0].mxu0
    %v275 = vadd.f32 0.0, %v274
    %v276 = vpop.f32.mrb[0].mxu0
    %277 = vdwg.mxu0
    %v278 = vmul.f32 %v270, 0.5
    %v279 = vmul.f32 %v275, 0.5
    %v280 = vld [vmem:[#allocation2] sm:$0xff]
    %v281 = vld [vmem:[#allocation2 + $0x8] sm:$0xff]
    %v282 = vld [vmem:[#allocation2 + $0x10] sm:$0xff]
    %v283 = vld [vmem:[#allocation2 + $0x18] sm:$0xff]
    %v284 = vld [vmem:[#allocation2 + $0x20] sm:$0xff]
    %v285 = vld [vmem:[#allocation2 + $0x28] sm:$0xff]
    %v286 = vld [vmem:[#allocation2 + $0x30] sm:$0xff]
    %v287 = vld [vmem:[#allocation2 + $0x38] sm:$0xff]
    %v288 = vld [vmem:[#allocation2 + $0x40] sm:$0xff]
    %v289 = vld [vmem:[#allocation2 + $0x48] sm:$0xff]
    %v290 = vld [vmem:[#allocation2 + $0x50] sm:$0xff]
    %v291 = vld [vmem:[#allocation2 + $0x58] sm:$0xff]
    %v292 = vld [vmem:[#allocation2 + $0x60] sm:$0xff]
    %v293 = vld [vmem:[#allocation2 + $0x68] sm:$0xff]
    %v294 = vld [vmem:[#allocation2 + $0x70] sm:$0xff]
    %v295 = vld [vmem:[#allocation2 + $0x78] sm:$0xff]
    %v296 = vld [vmem:[#allocation7] sm:$0xff]
    %v297 = vld [vmem:[#allocation7 + $0x8] sm:$0xff]
    %v298 = vld [vmem:[#allocation7 + $0x10] sm:$0xff]
    %v299 = vld [vmem:[#allocation7 + $0x18] sm:$0xff]
    %v300 = vld [vmem:[#allocation7 + $0x20] sm:$0xff]
    %v301 = vld [vmem:[#allocation7 + $0x28] sm:$0xff]
    %v302 = vld [vmem:[#allocation7 + $0x30] sm:$0xff]
    %v303 = vld [vmem:[#allocation7 + $0x38] sm:$0xff]
    %v304 = vld [vmem:[#allocation7 + $0x40] sm:$0xff]
    %v305 = vld [vmem:[#allocation7 + $0x48] sm:$0xff]
    %v306 = vld [vmem:[#allocation7 + $0x50] sm:$0xff]
    %v307 = vld [vmem:[#allocation7 + $0x58] sm:$0xff]
    %v308 = vld [vmem:[#allocation7 + $0x60] sm:$0xff]
    %v309 = vld [vmem:[#allocation7 + $0x68] sm:$0xff]
    %v310 = vld [vmem:[#allocation7 + $0x70] sm:$0xff]
    %v311 = vld [vmem:[#allocation7 + $0x78] sm:$0xff]
    %v312 = vld [vmem:[#allocation7 + $0x80] sm:$0xff]
    %v313 = vld [vmem:[#allocation7 + $0x88] sm:$0xff]
    %v314 = vld [vmem:[#allocation7 + $0x90] sm:$0xff]
    %v315 = vld [vmem:[#allocation7 + $0x98] sm:$0xff]
    %v316 = vld [vmem:[#allocation7 + $0xa0] sm:$0xff]
    %v317 = vld [vmem:[#allocation7 + $0xa8] sm:$0xff]
    %v318 = vld [vmem:[#allocation7 + $0xb0] sm:$0xff]
    %v319 = vld [vmem:[#allocation7 + $0xb8] sm:$0xff]
    %v320 = vld [vmem:[#allocation7 + $0xc0] sm:$0xff]
    %v321 = vld [vmem:[#allocation7 + $0xc8] sm:$0xff]
    %v322 = vld [vmem:[#allocation7 + $0xd0] sm:$0xff]
    %v323 = vld [vmem:[#allocation7 + $0xd8] sm:$0xff]
    %v324 = vld [vmem:[#allocation7 + $0xe0] sm:$0xff]
    %v325 = vld [vmem:[#allocation7 + $0xe8] sm:$0xff]
    %v326 = vld [vmem:[#allocation7 + $0xf0] sm:$0xff]
    %v327 = vld [vmem:[#allocation7 + $0xf8] sm:$0xff]
    %328 = vmatprep.subr.mxu0 %v297
    %329 = vmatpush1.msra.mxu0 %v296
    %330 = vmatprep.subr.mxu0 %v299
    %331 = vmatpush1.msra.mxu0 %v298
    %332 = vmatprep.subr.mxu0 %v301
    %333 = vmatpush1.msra.mxu0 %v300
    %334 = vmatprep.subr.mxu0 %v303
    %335 = vmatpush1.msra.mxu0 %v302
    %336 = vmatprep.subr.mxu0 %v305
    %337 = vmatpush1.msra.mxu0 %v304
    %338 = vmatprep.subr.mxu0 %v307
    %339 = vmatpush1.msra.mxu0 %v306
    %340 = vmatprep.subr.mxu0 %v309
    %341 = vmatpush1.msra.mxu0 %v308
    %342 = vmatprep.subr.mxu0 %v311
    %343 = vmatpush1.msra.mxu0 %v310
    %344 = vmatprep.subr.mxu0 %v313
    %345 = vmatpush1.msra.mxu0 %v312
    %346 = vmatprep.subr.mxu0 %v315
    %347 = vmatpush1.msra.mxu0 %v314
    %348 = vmatprep.subr.mxu0 %v317
    %349 = vmatpush1.msra.mxu0 %v316
    %350 = vmatprep.subr.mxu0 %v319
    %351 = vmatpush1.msra.mxu0 %v318
    %352 = vmatprep.subr.mxu0 %v321
    %353 = vmatpush1.msra.mxu0 %v320
    %354 = vmatprep.subr.mxu0 %v323
    %355 = vmatpush1.msra.mxu0 %v322
    %356 = vmatprep.subr.mxu0 %v325
    %357 = vmatpush1.msra.mxu0 %v324
    %358 = vmatprep.subr.mxu0 %v327
    %359 = vmatpush1.msra.mxu0 %v326
    %360 = vmatprep.subr.mxu0 0.0
    %361 = vmatpush1.msra.mxu0 0.0
    %362 = vmatprep.subr.mxu0 0.0
    %363 = vmatpush1.msra.mxu0 0.0
    %364 = vmatprep.subr.mxu0 0.0
    %365 = vmatpush1.msra.mxu0 0.0
    %366 = vmatprep.subr.mxu0 0.0
    %367 = vmatpush1.msra.mxu0 0.0
    %368 = vmatprep.subr.mxu0 0.0
    %369 = vmatpush1.msra.mxu0 0.0
    %370 = vmatprep.subr.mxu0 0.0
    %371 = vmatpush1.msra.mxu0 0.0
    %372 = vmatprep.subr.mxu0 0.0
    %373 = vmatpush1.msra.mxu0 0.0
    %374 = vmatprep.subr.mxu0 0.0
    %375 = vmatpush1.msra.mxu0 0.0
    %376 = vmatprep.subr.mxu0 0.0
    %377 = vmatpush1.msra.mxu0 0.0
    %378 = vmatprep.subr.mxu0 0.0
    %379 = vmatpush1.msra.mxu0 0.0
    %380 = vmatprep.subr.mxu0 0.0
    %381 = vmatpush1.msra.mxu0 0.0
    %382 = vmatprep.subr.mxu0 0.0
    %383 = vmatpush1.msra.mxu0 0.0
    %384 = vmatprep.subr.mxu0 0.0
    %385 = vmatpush1.msra.mxu0 0.0
    %386 = vmatprep.subr.mxu0 0.0
    %387 = vmatpush1.msra.mxu0 0.0
    %388 = vmatprep.subr.mxu0 0.0
    %389 = vmatpush1.msra.mxu0 0.0
    %390 = vmatprep.subr.mxu0 0.0
    %391 = vmatpush1.msra.mxu0 0.0
    %392 = vmatprep.mubr.f32.mxu0 0.0
    %393 = vmatmul.mubr.f32.gmra.mrb[0].mxu0 %v280
    %v394 = vpop.f32.mrb[0].mxu0
    %v395 = vadd.f32 0.0, %v394
    %v396 = vpop.f32.mrb[0].mxu0
    %v397 = vadd.f32 0.0, %v396
    %398 = vmatprep.mubr.f32.mxu0 0.0
    %399 = vmatmul.mubr.f32.gmra.mrb[0].mxu0 %v281
    %v400 = vpop.f32.mrb[0].mxu0
    %v401 = vadd.f32 0.0, %v400
    %v402 = vpop.f32.mrb[0].mxu0
    %v403 = vadd.f32 0.0, %v402
    %404 = vmatprep.mubr.f32.mxu0 0.0
    %405 = vmatmul.mubr.f32.gmra.mrb[0].mxu0 %v282
    %v406 = vpop.f32.mrb[0].mxu0
    %v407 = vadd.f32 0.0, %v406
    %v408 = vpop.f32.mrb[0].mxu0
    %v409 = vadd.f32 0.0, %v408
    %410 = vmatprep.mubr.f32.mxu0 0.0
    %411 = vmatmul.mubr.f32.gmra.mrb[0].mxu0 %v283
    %v412 = vpop.f32.mrb[0].mxu0
    %v413 = vadd.f32 0.0, %v412
    %v414 = vpop.f32.mrb[0].mxu0
    %v415 = vadd.f32 0.0, %v414
    %416 = vmatprep.mubr.f32.mxu0 0.0
    %417 = vmatmul.mubr.f32.gmra.mrb[0].mxu0 %v284
    %v418 = vpop.f32.mrb[0].mxu0
    %v419 = vadd.f32 0.0, %v418
    %v420 = vpop.f32.mrb[0].mxu0
    %v421 = vadd.f32 0.0, %v420
    %422 = vmatprep.mubr.f32.mxu0 0.0
    %423 = vmatmul.mubr.f32.gmra.mrb[0].mxu0 %v285
    %v424 = vpop.f32.mrb[0].mxu0
    %v425 = vadd.f32 0.0, %v424
    %v426 = vpop.f32.mrb[0].mxu0
    %v427 = vadd.f32 0.0, %v426
    %428 = vmatprep.mubr.f32.mxu0 0.0
    %429 = vmatmul.mubr.f32.gmra.mrb[0].mxu0 %v286
    %v430 = vpop.f32.mrb[0].mxu0
    %v431 = vadd.f32 0.0, %v430
    %v432 = vpop.f32.mrb[0].mxu0
    %v433 = vadd.f32 0.0, %v432
    %434 = vmatprep.mubr.f32.mxu0 0.0
    %435 = vmatmul.mubr.f32.gmra.mrb[0].mxu0 %v287
    %v436 = vpop.f32.mrb[0].mxu0
    %v437 = vadd.f32 0.0, %v436
    %v438 = vpop.f32.mrb[0].mxu0
    %v439 = vadd.f32 0.0, %v438
    %440 = vmatprep.mubr.f32.mxu0 0.0
    %441 = vmatmul.mubr.f32.gmra.mrb[0].mxu0 %v288
    %v442 = vpop.f32.mrb[0].mxu0
    %v443 = vadd.f32 0.0, %v442
    %v444 = vpop.f32.mrb[0].mxu0
    %v445 = vadd.f32 0.0, %v444
    %446 = vmatprep.mubr.f32.mxu0 0.0
    %447 = vmatmul.mubr.f32.gmra.mrb[0].mxu0 %v289
    %v448 = vpop.f32.mrb[0].mxu0
    %v449 = vadd.f32 0.0, %v448
    %v450 = vpop.f32.mrb[0].mxu0
    %v451 = vadd.f32 0.0, %v450
    %452 = vmatprep.mubr.f32.mxu0 0.0
    %453 = vmatmul.mubr.f32.gmra.mrb[0].mxu0 %v290
    %v454 = vpop.f32.mrb[0].mxu0
    %v455 = vadd.f32 0.0, %v454
    %v456 = vpop.f32.mrb[0].mxu0
    %v457 = vadd.f32 0.0, %v456
    %458 = vmatprep.mubr.f32.mxu0 0.0
    %459 = vmatmul.mubr.f32.gmra.mrb[0].mxu0 %v291
    %v460 = vpop.f32.mrb[0].mxu0
    %v461 = vadd.f32 0.0, %v460
    %v462 = vpop.f32.mrb[0].mxu0
    %v463 = vadd.f32 0.0, %v462
    %464 = vmatprep.mubr.f32.mxu0 0.0
    %465 = vmatmul.mubr.f32.gmra.mrb[0].mxu0 %v292
    %v466 = vpop.f32.mrb[0].mxu0
    %v467 = vadd.f32 0.0, %v466
    %v468 = vpop.f32.mrb[0].mxu0
    %v469 = vadd.f32 0.0, %v468
    %470 = vmatprep.mubr.f32.mxu0 0.0
    %471 = vmatmul.mubr.f32.gmra.mrb[0].mxu0 %v293
    %v472 = vpop.f32.mrb[0].mxu0
    %v473 = vadd.f32 0.0, %v472
    %v474 = vpop.f32.mrb[0].mxu0
    %v475 = vadd.f32 0.0, %v474
    %476 = vmatprep.mubr.f32.mxu0 0.0
    %477 = vmatmul.mubr.f32.gmra.mrb[0].mxu0 %v294
    %v478 = vpop.f32.mrb[0].mxu0
    %v479 = vadd.f32 0.0, %v478
    %v480 = vpop.f32.mrb[0].mxu0
    %v481 = vadd.f32 0.0, %v480
    %482 = vmatprep.mubr.f32.mxu0 0.0
    %483 = vmatmul.mubr.f32.gmra.mrb[0].mxu0 %v295
    %v484 = vpop.f32.mrb[0].mxu0
    %v485 = vadd.f32 0.0, %v484
    %v486 = vpop.f32.mrb[0].mxu0
    %v487 = vadd.f32 0.0, %v486
    %488 = vdwg.mxu0
    %v491 = vcombine.high %v278, %v278
    %v493 = vunpack.c.l.s4 1966171168
    %v494 = vunpack.c.0.s8 %v493
    %v495 = vlaneseq
    %v496 = vshrl.u32 %v495, 7
    %v497 = vsub.s32 %v494, %v496
    %v498 = vrot.slane %v278, %v497
    %v500 = vunpack.c.l.s4 1966171168
    %v501 = vunpack.c.0.s8 %v500
    %v502 = vlaneseq
    %v503 = vshrl.u32 %v502, 7
    %v504 = vsub.s32 %v501, %v503
    %v505 = vrot.slane %v491, %v504
    %v506 = vcombine.high %v498, %v498
    %v507 = vcombine.high %v505, %v505
    %v509 = vunpack.c.l.s4 1966171168
    %v510 = vunpack.c.0.s8 %v509
    %v511 = vlaneseq
    %v512 = vshrl.u32 %v511, 7
    %v513 = vsub.s32 %v510, %v512
    %v514 = vrot.slane %v498, %v513
    %v516 = vunpack.c.l.s4 1966171168
    %v517 = vunpack.c.0.s8 %v516
    %v518 = vlaneseq
    %v519 = vshrl.u32 %v518, 7
    %v520 = vsub.s32 %v517, %v519
    %v521 = vrot.slane %v505, %v520
    %v523 = vunpack.c.l.s4 1966171168
    %v524 = vunpack.c.0.s8 %v523
    %v525 = vlaneseq
    %v526 = vshrl.u32 %v525, 7
    %v527 = vsub.s32 %v524, %v526
    %v528 = vrot.slane %v506, %v527
    %v530 = vunpack.c.l.s4 1966171168
    %v531 = vunpack.c.0.s8 %v530
    %v532 = vlaneseq
    %v533 = vshrl.u32 %v532, 7
    %v534 = vsub.s32 %v531, %v533
    %v535 = vrot.slane %v507, %v534
    %v536 = vcombine.high %v514, %v514
    %v537 = vcombine.high %v521, %v521
    %v538 = vcombine.high %v528, %v528
    %v539 = vcombine.high %v535, %v535
    %v540 = vcombine.high %v279, %v279
    %v542 = vunpack.c.l.s4 1966171168
    %v543 = vunpack.c.0.s8 %v542
    %v544 = vlaneseq
    %v545 = vshrl.u32 %v544, 7
    %v546 = vsub.s32 %v543, %v545
    %v547 = vrot.slane %v279, %v546
    %v549 = vunpack.c.l.s4 1966171168
    %v550 = vunpack.c.0.s8 %v549
    %v551 = vlaneseq
    %v552 = vshrl.u32 %v551, 7
    %v553 = vsub.s32 %v550, %v552
    %v554 = vrot.slane %v540, %v553
    %v555 = vcombine.high %v547, %v547
    %v556 = vcombine.high %v554, %v554
    %v558 = vunpack.c.l.s4 1966171168
    %v559 = vunpack.c.0.s8 %v558
    %v560 = vlaneseq
    %v561 = vshrl.u32 %v560, 7
    %v562 = vsub.s32 %v559, %v561
    %v563 = vrot.slane %v547, %v562
    %v565 = vunpack.c.l.s4 1966171168
    %v566 = vunpack.c.0.s8 %v565
    %v567 = vlaneseq
    %v568 = vshrl.u32 %v567, 7
    %v569 = vsub.s32 %v566, %v568
    %v570 = vrot.slane %v554, %v569
    %v572 = vunpack.c.l.s4 1966171168
    %v573 = vunpack.c.0.s8 %v572
    %v574 = vlaneseq
    %v575 = vshrl.u32 %v574, 7
    %v576 = vsub.s32 %v573, %v575
    %v577 = vrot.slane %v555, %v576
    %v579 = vunpack.c.l.s4 1966171168
    %v580 = vunpack.c.0.s8 %v579
    %v581 = vlaneseq
    %v582 = vshrl.u32 %v581, 7
    %v583 = vsub.s32 %v580, %v582
    %v584 = vrot.slane %v556, %v583
    %v585 = vcombine.high %v563, %v563
    %v586 = vcombine.high %v570, %v570
    %v587 = vcombine.high %v577, %v577
    %v588 = vcombine.high %v584, %v584
    %v589 = vlaneseq
    %v590 = vshrl.u32 %v589, 7
    %v591 = vsub.s32 0, %v590
    %v592 = vrot.slane %v514, %v591
    %v593 = vlaneseq
    %v594 = vshrl.u32 %v593, 7
    %v595 = vsub.s32 0, %v594
    %v596 = vrot.slane %v528, %v595
    %v597 = vlaneseq
    %v598 = vshrl.u32 %v597, 7
    %v599 = vsub.s32 0, %v598
    %v600 = vrot.slane %v536, %v599
    %v601 = vlaneseq
    %v602 = vshrl.u32 %v601, 7
    %v603 = vsub.s32 0, %v602
    %v604 = vrot.slane %v538, %v603
    %v605 = vlaneseq
    %v606 = vshrl.u32 %v605, 7
    %v607 = vsub.s32 0, %v606
    %v608 = vrot.slane %v521, %v607
    %v609 = vlaneseq
    %v610 = vshrl.u32 %v609, 7
    %v611 = vsub.s32 0, %v610
    %v612 = vrot.slane %v535, %v611
    %v613 = vlaneseq
    %v614 = vshrl.u32 %v613, 7
    %v615 = vsub.s32 0, %v614
    %v616 = vrot.slane %v537, %v615
    %v617 = vlaneseq
    %v618 = vshrl.u32 %v617, 7
    %v619 = vsub.s32 0, %v618
    %v620 = vrot.slane %v539, %v619
    %v621 = vlaneseq
    %v622 = vshrl.u32 %v621, 7
    %v623 = vsub.s32 0, %v622
    %v624 = vrot.slane %v563, %v623
    %v625 = vlaneseq
    %v626 = vshrl.u32 %v625, 7
    %v627 = vsub.s32 0, %v626
    %v628 = vrot.slane %v577, %v627
    %v629 = vlaneseq
    %v630 = vshrl.u32 %v629, 7
    %v631 = vsub.s32 0, %v630
    %v632 = vrot.slane %v585, %v631
    %v633 = vlaneseq
    %v634 = vshrl.u32 %v633, 7
    %v635 = vsub.s32 0, %v634
    %v636 = vrot.slane %v587, %v635
    %v637 = vlaneseq
    %v638 = vshrl.u32 %v637, 7
    %v639 = vsub.s32 0, %v638
    %v640 = vrot.slane %v570, %v639
    %v641 = vlaneseq
    %v642 = vshrl.u32 %v641, 7
    %v643 = vsub.s32 0, %v642
    %v644 = vrot.slane %v584, %v643
    %v645 = vlaneseq
    %v646 = vshrl.u32 %v645, 7
    %v647 = vsub.s32 0, %v646
    %v648 = vrot.slane %v586, %v647
    %v649 = vlaneseq
    %v650 = vshrl.u32 %v649, 7
    %v651 = vsub.s32 0, %v650
    %v652 = vrot.slane %v588, %v651
    %v669 = vmul.f32 %v395, %v592
    %v670 = vmul.f32 %v401, %v596
    %v671 = vmul.f32 %v407, %v600
    %v672 = vmul.f32 %v413, %v604
    %v673 = vmul.f32 %v419, %v608
    %v674 = vmul.f32 %v425, %v612
    %v675 = vmul.f32 %v431, %v616
    %v676 = vmul.f32 %v437, %v620
    %v677 = vmul.f32 %v443, %v624
    %v678 = vmul.f32 %v449, %v628
    %v679 = vmul.f32 %v455, %v632
    %v680 = vmul.f32 %v461, %v636
    %v681 = vmul.f32 %v467, %v640
    %v682 = vmul.f32 %v473, %v644
    %v683 = vmul.f32 %v479, %v648
    %v684 = vmul.f32 %v485, %v652
    %v685 = vld [vmem:[#allocation11] sm:$0xff]
    %v686 = vld [vmem:[#allocation11 + $0x8] sm:$0xff]
    %v687 = vld [vmem:[#allocation11 + $0x10] sm:$0xff]
    %v688 = vld [vmem:[#allocation11 + $0x18] sm:$0xff]
    %v689 = vld [vmem:[#allocation11 + $0x20] sm:$0xff]
    %v690 = vld [vmem:[#allocation11 + $0x28] sm:$0xff]
    %v691 = vld [vmem:[#allocation11 + $0x30] sm:$0xff]
    %v692 = vld [vmem:[#allocation11 + $0x38] sm:$0xff]
    %v693 = vld [vmem:[#allocation11 + $0x40] sm:$0xff]
    %v694 = vld [vmem:[#allocation11 + $0x48] sm:$0xff]
    %v695 = vld [vmem:[#allocation11 + $0x50] sm:$0xff]
    %v696 = vld [vmem:[#allocation11 + $0x58] sm:$0xff]
    %v697 = vld [vmem:[#allocation11 + $0x60] sm:$0xff]
    %v698 = vld [vmem:[#allocation11 + $0x68] sm:$0xff]
    %v699 = vld [vmem:[#allocation11 + $0x70] sm:$0xff]
    %v700 = vld [vmem:[#allocation11 + $0x78] sm:$0xff]
    %701 = vmatprep.subr.mxu0 0.0
    %702 = vmatpush1.msra.mxu0 %v685
    %703 = vmatprep.subr.mxu0 0.0
    %704 = vmatpush1.msra.mxu0 %v686
    %705 = vmatprep.subr.mxu0 0.0
    %706 = vmatpush1.msra.mxu0 %v687
    %707 = vmatprep.subr.mxu0 0.0
    %708 = vmatpush1.msra.mxu0 %v688
    %709 = vmatprep.subr.mxu0 0.0
    %710 = vmatpush1.msra.mxu0 %v689
    %711 = vmatprep.subr.mxu0 0.0
    %712 = vmatpush1.msra.mxu0 %v690
    %713 = vmatprep.subr.mxu0 0.0
    %714 = vmatpush1.msra.mxu0 %v691
    %715 = vmatprep.subr.mxu0 0.0
    %716 = vmatpush1.msra.mxu0 %v692
    %717 = vmatprep.subr.mxu0 0.0
    %718 = vmatpush1.msra.mxu0 %v693
    %719 = vmatprep.subr.mxu0 0.0
    %720 = vmatpush1.msra.mxu0 %v694
    %721 = vmatprep.subr.mxu0 0.0
    %722 = vmatpush1.msra.mxu0 %v695
    %723 = vmatprep.subr.mxu0 0.0
    %724 = vmatpush1.msra.mxu0 %v696
    %725 = vmatprep.subr.mxu0 0.0
    %726 = vmatpush1.msra.mxu0 %v697
    %727 = vmatprep.subr.mxu0 0.0
    %728 = vmatpush1.msra.mxu0 %v698
    %729 = vmatprep.subr.mxu0 0.0
    %730 = vmatpush1.msra.mxu0 %v699
    %731 = vmatprep.subr.mxu0 0.0
    %732 = vmatpush1.msra.mxu0 %v700
    %733 = vmatprep.subr.mxu0 0.0
    %734 = vmatpush1.msra.mxu0 0.0
    %735 = vmatprep.subr.mxu0 0.0
    %736 = vmatpush1.msra.mxu0 0.0
    %737 = vmatprep.subr.mxu0 0.0
    %738 = vmatpush1.msra.mxu0 0.0
    %739 = vmatprep.subr.mxu0 0.0
    %740 = vmatpush1.msra.mxu0 0.0
    %741 = vmatprep.subr.mxu0 0.0
    %742 = vmatpush1.msra.mxu0 0.0
    %743 = vmatprep.subr.mxu0 0.0
    %744 = vmatpush1.msra.mxu0 0.0
    %745 = vmatprep.subr.mxu0 0.0
    %746 = vmatpush1.msra.mxu0 0.0
    %747 = vmatprep.subr.mxu0 0.0
    %748 = vmatpush1.msra.mxu0 0.0
    %749 = vmatprep.subr.mxu0 0.0
    %750 = vmatpush1.msra.mxu0 0.0
    %751 = vmatprep.subr.mxu0 0.0
    %752 = vmatpush1.msra.mxu0 0.0
    %753 = vmatprep.subr.mxu0 0.0
    %754 = vmatpush1.msra.mxu0 0.0
    %755 = vmatprep.subr.mxu0 0.0
    %756 = vmatpush1.msra.mxu0 0.0
    %757 = vmatprep.subr.mxu0 0.0
    %758 = vmatpush1.msra.mxu0 0.0
    %759 = vmatprep.subr.mxu0 0.0
    %760 = vmatpush1.msra.mxu0 0.0
    %761 = vmatprep.subr.mxu0 0.0
    %762 = vmatpush1.msra.mxu0 0.0
    %763 = vmatprep.subr.mxu0 0.0
    %764 = vmatpush1.msra.mxu0 0.0
    %765 = vmatprep.mubr.f32.mxu0 0.0
    %766 = vmatmul.mubr.f32.gmra.mrb[0].mxu0 %v669
    %v767 = vpop.f32.mrb[0].mxu0
    %v768 = vadd.f32 0.0, %v767
    %v769 = vpop.f32.mrb[0].mxu0
    %770 = vmatprep.mubr.f32.mxu0 0.0
    %771 = vmatmul.mubr.f32.gmra.mrb[0].mxu0 %v670
    %v772 = vpop.f32.mrb[0].mxu0
    %v773 = vadd.f32 0.0, %v772
    %v774 = vpop.f32.mrb[0].mxu0
    %775 = vmatprep.mubr.f32.mxu0 0.0
    %776 = vmatmul.mubr.f32.gmra.mrb[0].mxu0 %v671
    %v777 = vpop.f32.mrb[0].mxu0
    %v778 = vadd.f32 0.0, %v777
    %v779 = vpop.f32.mrb[0].mxu0
    %780 = vmatprep.mubr.f32.mxu0 0.0
    %781 = vmatmul.mubr.f32.gmra.mrb[0].mxu0 %v672
    %v782 = vpop.f32.mrb[0].mxu0
    %v783 = vadd.f32 0.0, %v782
    %v784 = vpop.f32.mrb[0].mxu0
    %785 = vmatprep.mubr.f32.mxu0 0.0
    %786 = vmatmul.mubr.f32.gmra.mrb[0].mxu0 %v673
    %v787 = vpop.f32.mrb[0].mxu0
    %v788 = vadd.f32 0.0, %v787
    %v789 = vpop.f32.mrb[0].mxu0
    %790 = vmatprep.mubr.f32.mxu0 0.0
    %791 = vmatmul.mubr.f32.gmra.mrb[0].mxu0 %v674
    %v792 = vpop.f32.mrb[0].mxu0
    %v793 = vadd.f32 0.0, %v792
    %v794 = vpop.f32.mrb[0].mxu0
    %795 = vmatprep.mubr.f32.mxu0 0.0
    %796 = vmatmul.mubr.f32.gmra.mrb[0].mxu0 %v675
    %v797 = vpop.f32.mrb[0].mxu0
    %v798 = vadd.f32 0.0, %v797
    %v799 = vpop.f32.mrb[0].mxu0
    %800 = vmatprep.mubr.f32.mxu0 0.0
    %801 = vmatmul.mubr.f32.gmra.mrb[0].mxu0 %v676
    %v802 = vpop.f32.mrb[0].mxu0
    %v803 = vadd.f32 0.0, %v802
    %v804 = vpop.f32.mrb[0].mxu0
    %805 = vmatprep.mubr.f32.mxu0 0.0
    %806 = vmatmul.mubr.f32.gmra.mrb[0].mxu0 %v677
    %v807 = vpop.f32.mrb[0].mxu0
    %v808 = vadd.f32 0.0, %v807
    %v809 = vpop.f32.mrb[0].mxu0
    %810 = vmatprep.mubr.f32.mxu0 0.0
    %811 = vmatmul.mubr.f32.gmra.mrb[0].mxu0 %v678
    %v812 = vpop.f32.mrb[0].mxu0
    %v813 = vadd.f32 0.0, %v812
    %v814 = vpop.f32.mrb[0].mxu0
    %815 = vmatprep.mubr.f32.mxu0 0.0
    %816 = vmatmul.mubr.f32.gmra.mrb[0].mxu0 %v679
    %v817 = vpop.f32.mrb[0].mxu0
    %v818 = vadd.f32 0.0, %v817
    %v819 = vpop.f32.mrb[0].mxu0
    %820 = vmatprep.mubr.f32.mxu0 0.0
    %821 = vmatmul.mubr.f32.gmra.mrb[0].mxu0 %v680
    %v822 = vpop.f32.mrb[0].mxu0
    %v823 = vadd.f32 0.0, %v822
    %v824 = vpop.f32.mrb[0].mxu0
    %825 = vmatprep.mubr.f32.mxu0 0.0
    %826 = vmatmul.mubr.f32.gmra.mrb[0].mxu0 %v681
    %v827 = vpop.f32.mrb[0].mxu0
    %v828 = vadd.f32 0.0, %v827
    %v829 = vpop.f32.mrb[0].mxu0
    %830 = vmatprep.mubr.f32.mxu0 0.0
    %831 = vmatmul.mubr.f32.gmra.mrb[0].mxu0 %v682
    %v832 = vpop.f32.mrb[0].mxu0
    %v833 = vadd.f32 0.0, %v832
    %v834 = vpop.f32.mrb[0].mxu0
    %835 = vmatprep.mubr.f32.mxu0 0.0
    %836 = vmatmul.mubr.f32.gmra.mrb[0].mxu0 %v683
    %v837 = vpop.f32.mrb[0].mxu0
    %v838 = vadd.f32 0.0, %v837
    %v839 = vpop.f32.mrb[0].mxu0
    %840 = vmatprep.mubr.f32.mxu0 0.0
    %841 = vmatmul.mubr.f32.gmra.mrb[0].mxu0 %v684
    %v842 = vpop.f32.mrb[0].mxu0
    %v843 = vadd.f32 0.0, %v842
    %v844 = vpop.f32.mrb[0].mxu0
    %845 = vdwg.mxu0
    %vm846 = vcmask 64512
    %v847 = vsel %vm846, %v768, -inf
    %v848 = vrot.slane %v847, 4
    %v849 = vmax.f32 %v847, %v848
    %v850 = vrot.slane %v849, 2
    %v851 = vmax.f32 %v849, %v850
    %v852 = vrot.slane %v851, 1
    %v853 = vmax.f32 %v851, %v852
    %v854 = vsel %vm846, %v773, -inf
    %v855 = vrot.slane %v854, 4
    %v856 = vmax.f32 %v854, %v855
    %v857 = vrot.slane %v856, 2
    %v858 = vmax.f32 %v856, %v857
    %v859 = vrot.slane %v858, 1
    %v860 = vmax.f32 %v858, %v859
    %v861 = vsel %vm846, %v778, -inf
    %v862 = vrot.slane %v861, 4
    %v863 = vmax.f32 %v861, %v862
    %v864 = vrot.slane %v863, 2
    %v865 = vmax.f32 %v863, %v864
    %v866 = vrot.slane %v865, 1
    %v867 = vmax.f32 %v865, %v866
    %v868 = vsel %vm846, %v783, -inf
    %v869 = vrot.slane %v868, 4
    %v870 = vmax.f32 %v868, %v869
    %v871 = vrot.slane %v870, 2
    %v872 = vmax.f32 %v870, %v871
    %v873 = vrot.slane %v872, 1
    %v874 = vmax.f32 %v872, %v873
    %v875 = vsel %vm846, %v788, -inf
    %v876 = vrot.slane %v875, 4
    %v877 = vmax.f32 %v875, %v876
    %v878 = vrot.slane %v877, 2
    %v879 = vmax.f32 %v877, %v878
    %v880 = vrot.slane %v879, 1
    %v881 = vmax.f32 %v879, %v880
    %v882 = vsel %vm846, %v793, -inf
    %v883 = vrot.slane %v882, 4
    %v884 = vmax.f32 %v882, %v883
    %v885 = vrot.slane %v884, 2
    %v886 = vmax.f32 %v884, %v885
    %v887 = vrot.slane %v886, 1
    %v888 = vmax.f32 %v886, %v887
    %v889 = vsel %vm846, %v798, -inf
    %v890 = vrot.slane %v889, 4
    %v891 = vmax.f32 %v889, %v890
    %v892 = vrot.slane %v891, 2
    %v893 = vmax.f32 %v891, %v892
    %v894 = vrot.slane %v893, 1
    %v895 = vmax.f32 %v893, %v894
    %v896 = vsel %vm846, %v803, -inf
    %v897 = vrot.slane %v896, 4
    %v898 = vmax.f32 %v896, %v897
    %v899 = vrot.slane %v898, 2
    %v900 = vmax.f32 %v898, %v899
    %v901 = vrot.slane %v900, 1
    %v902 = vmax.f32 %v900, %v901
    %v903 = vsel %vm846, %v808, -inf
    %v904 = vrot.slane %v903, 4
    %v905 = vmax.f32 %v903, %v904
    %v906 = vrot.slane %v905, 2
    %v907 = vmax.f32 %v905, %v906
    %v908 = vrot.slane %v907, 1
    %v909 = vmax.f32 %v907, %v908
    %v910 = vsel %vm846, %v813, -inf
    %v911 = vrot.slane %v910, 4
    %v912 = vmax.f32 %v910, %v911
    %v913 = vrot.slane %v912, 2
    %v914 = vmax.f32 %v912, %v913
    %v915 = vrot.slane %v914, 1
    %v916 = vmax.f32 %v914, %v915
    %v917 = vsel %vm846, %v818, -inf
    %v918 = vrot.slane %v917, 4
    %v919 = vmax.f32 %v917, %v918
    %v920 = vrot.slane %v919, 2
    %v921 = vmax.f32 %v919, %v920
    %v922 = vrot.slane %v921, 1
    %v923 = vmax.f32 %v921, %v922
    %v924 = vsel %vm846, %v823, -inf
    %v925 = vrot.slane %v924, 4
    %v926 = vmax.f32 %v924, %v925
    %v927 = vrot.slane %v926, 2
    %v928 = vmax.f32 %v926, %v927
    %v929 = vrot.slane %v928, 1
    %v930 = vmax.f32 %v928, %v929
    %v931 = vsel %vm846, %v828, -inf
    %v932 = vrot.slane %v931, 4
    %v933 = vmax.f32 %v931, %v932
    %v934 = vrot.slane %v933, 2
    %v935 = vmax.f32 %v933, %v934
    %v936 = vrot.slane %v935, 1
    %v937 = vmax.f32 %v935, %v936
    %v938 = vsel %vm846, %v833, -inf
    %v939 = vrot.slane %v938, 4
    %v940 = vmax.f32 %v938, %v939
    %v941 = vrot.slane %v940, 2
    %v942 = vmax.f32 %v940, %v941
    %v943 = vrot.slane %v942, 1
    %v944 = vmax.f32 %v942, %v943
    %v945 = vsel %vm846, %v838, -inf
    %v946 = vrot.slane %v945, 4
    %v947 = vmax.f32 %v945, %v946
    %v948 = vrot.slane %v947, 2
    %v949 = vmax.f32 %v947, %v948
    %v950 = vrot.slane %v949, 1
    %v951 = vmax.f32 %v949, %v950
    %v952 = vsel %vm846, %v843, -inf
    %v953 = vrot.slane %v952, 4
    %v954 = vmax.f32 %v952, %v953
    %v955 = vrot.slane %v954, 2
    %v956 = vmax.f32 %v954, %v955
    %v957 = vrot.slane %v956, 1
    %v958 = vmax.f32 %v956, %v957
    %v959 = vsub.f32 %v768, %v853
    %v960 = vsub.f32 %v773, %v860
    %v961 = vsub.f32 %v778, %v867
    %v962 = vsub.f32 %v783, %v874
    %v963 = vsub.f32 %v788, %v881
    %v964 = vsub.f32 %v793, %v888
    %v965 = vsub.f32 %v798, %v895
    %v966 = vsub.f32 %v803, %v902
    %v967 = vsub.f32 %v808, %v909
    %v968 = vsub.f32 %v813, %v916
    %v969 = vsub.f32 %v818, %v923
    %v970 = vsub.f32 %v823, %v930
    %v971 = vsub.f32 %v828, %v937
    %v972 = vsub.f32 %v833, %v944
    %v973 = vsub.f32 %v838, %v951
    %v974 = vsub.f32 %v843, %v958
    %v975 = vmul.f32 %v959, 1.442695
    %v976 = vpow.pop %v975
    %v977 = vmul.f32 %v960, 1.442695
    %v978 = vpow.pop %v977
    %v979 = vmul.f32 %v961, 1.442695
    %v980 = vpow.pop %v979
    %v981 = vmul.f32 %v962, 1.442695
    %v982 = vpow.pop %v981
    %v983 = vmul.f32 %v963, 1.442695
    %v984 = vpow.pop %v983
    %v985 = vmul.f32 %v964, 1.442695
    %v986 = vpow.pop %v985
    %v987 = vmul.f32 %v965, 1.442695
    %v988 = vpow.pop %v987
    %v989 = vmul.f32 %v966, 1.442695
    %v990 = vpow.pop %v989
    %v991 = vmul.f32 %v967, 1.442695
    %v992 = vpow.pop %v991
    %v993 = vmul.f32 %v968, 1.442695
    %v994 = vpow.pop %v993
    %v995 = vmul.f32 %v969, 1.442695
    %v996 = vpow.pop %v995
    %v997 = vmul.f32 %v970, 1.442695
    %v998 = vpow.pop %v997
    %v999 = vmul.f32 %v971, 1.442695
    %v1000 = vpow.pop %v999
    %v1001 = vmul.f32 %v972, 1.442695
    %v1002 = vpow.pop %v1001
    %v1003 = vmul.f32 %v973, 1.442695
    %v1004 = vpow.pop %v1003
    %v1005 = vmul.f32 %v974, 1.442695
    %v1006 = vpow.pop %v1005
    %v1007 = vsel %vm846, %v976, 0.0
    %v1008 = vrot.slane %v1007, 4
    %v1009 = vadd.f32 %v1007, %v1008
    %v1010 = vrot.slane %v1009, 2
    %v1011 = vadd.f32 %v1009, %v1010
    %v1012 = vrot.slane %v1011, 1
    %v1013 = vadd.f32 %v1011, %v1012
    %v1014 = vsel %vm846, %v978, 0.0
    %v1015 = vrot.slane %v1014, 4
    %v1016 = vadd.f32 %v1014, %v1015
    %v1017 = vrot.slane %v1016, 2
    %v1018 = vadd.f32 %v1016, %v1017
    %v1019 = vrot.slane %v1018, 1
    %v1020 = vadd.f32 %v1018, %v1019
    %v1021 = vsel %vm846, %v980, 0.0
    %v1022 = vrot.slane %v1021, 4
    %v1023 = vadd.f32 %v1021, %v1022
    %v1024 = vrot.slane %v1023, 2
    %v1025 = vadd.f32 %v1023, %v1024
    %v1026 = vrot.slane %v1025, 1
    %v1027 = vadd.f32 %v1025, %v1026
    %v1028 = vsel %vm846, %v982, 0.0
    %v1029 = vrot.slane %v1028, 4
    %v1030 = vadd.f32 %v1028, %v1029
    %v1031 = vrot.slane %v1030, 2
    %v1032 = vadd.f32 %v1030, %v1031
    %v1033 = vrot.slane %v1032, 1
    %v1034 = vadd.f32 %v1032, %v1033
    %v1035 = vsel %vm846, %v984, 0.0
    %v1036 = vrot.slane %v1035, 4
    %v1037 = vadd.f32 %v1035, %v1036
    %v1038 = vrot.slane %v1037, 2
    %v1039 = vadd.f32 %v1037, %v1038
    %v1040 = vrot.slane %v1039, 1
    %v1041 = vadd.f32 %v1039, %v1040
    %v1042 = vsel %vm846, %v986, 0.0
    %v1043 = vrot.slane %v1042, 4
    %v1044 = vadd.f32 %v1042, %v1043
    %v1045 = vrot.slane %v1044, 2
    %v1046 = vadd.f32 %v1044, %v1045
    %v1047 = vrot.slane %v1046, 1
    %v1048 = vadd.f32 %v1046, %v1047
    %v1049 = vsel %vm846, %v988, 0.0
    %v1050 = vrot.slane %v1049, 4
    %v1051 = vadd.f32 %v1049, %v1050
    %v1052 = vrot.slane %v1051, 2
    %v1053 = vadd.f32 %v1051, %v1052
    %v1054 = vrot.slane %v1053, 1
    %v1055 = vadd.f32 %v1053, %v1054
    %v1056 = vsel %vm846, %v990, 0.0
    %v1057 = vrot.slane %v1056, 4
    %v1058 = vadd.f32 %v1056, %v1057
    %v1059 = vrot.slane %v1058, 2
    %v1060 = vadd.f32 %v1058, %v1059
    %v1061 = vrot.slane %v1060, 1
    %v1062 = vadd.f32 %v1060, %v1061
    %v1063 = vsel %vm846, %v992, 0.0
    %v1064 = vrot.slane %v1063, 4
    %v1065 = vadd.f32 %v1063, %v1064
    %v1066 = vrot.slane %v1065, 2
    %v1067 = vadd.f32 %v1065, %v1066
    %v1068 = vrot.slane %v1067, 1
    %v1069 = vadd.f32 %v1067, %v1068
    %v1070 = vsel %vm846, %v994, 0.0
    %v1071 = vrot.slane %v1070, 4
    %v1072 = vadd.f32 %v1070, %v1071
    %v1073 = vrot.slane %v1072, 2
    %v1074 = vadd.f32 %v1072, %v1073
    %v1075 = vrot.slane %v1074, 1
    %v1076 = vadd.f32 %v1074, %v1075
    %v1077 = vsel %vm846, %v996, 0.0
    %v1078 = vrot.slane %v1077, 4
    %v1079 = vadd.f32 %v1077, %v1078
    %v1080 = vrot.slane %v1079, 2
    %v1081 = vadd.f32 %v1079, %v1080
    %v1082 = vrot.slane %v1081, 1
    %v1083 = vadd.f32 %v1081, %v1082
    %v1084 = vsel %vm846, %v998, 0.0
    %v1085 = vrot.slane %v1084, 4
    %v1086 = vadd.f32 %v1084, %v1085
    %v1087 = vrot.slane %v1086, 2
    %v1088 = vadd.f32 %v1086, %v1087
    %v1089 = vrot.slane %v1088, 1
    %v1090 = vadd.f32 %v1088, %v1089
    %v1091 = vsel %vm846, %v1000, 0.0
    %v1092 = vrot.slane %v1091, 4
    %v1093 = vadd.f32 %v1091, %v1092
    %v1094 = vrot.slane %v1093, 2
    %v1095 = vadd.f32 %v1093, %v1094
    %v1096 = vrot.slane %v1095, 1
    %v1097 = vadd.f32 %v1095, %v1096
    %v1098 = vsel %vm846, %v1002, 0.0
    %v1099 = vrot.slane %v1098, 4
    %v1100 = vadd.f32 %v1098, %v1099
    %v1101 = vrot.slane %v1100, 2
    %v1102 = vadd.f32 %v1100, %v1101
    %v1103 = vrot.slane %v1102, 1
    %v1104 = vadd.f32 %v1102, %v1103
    %v1105 = vsel %vm846, %v1004, 0.0
    %v1106 = vrot.slane %v1105, 4
    %v1107 = vadd.f32 %v1105, %v1106
    %v1108 = vrot.slane %v1107, 2
    %v1109 = vadd.f32 %v1107, %v1108
    %v1110 = vrot.slane %v1109, 1
    %v1111 = vadd.f32 %v1109, %v1110
    %v1112 = vsel %vm846, %v1006, 0.0
    %v1113 = vrot.slane %v1112, 4
    %v1114 = vadd.f32 %v1112, %v1113
    %v1115 = vrot.slane %v1114, 2
    %v1116 = vadd.f32 %v1114, %v1115
    %v1117 = vrot.slane %v1116, 1
    %v1118 = vadd.f32 %v1116, %v1117
    %v1119 = vrcp.pop %v1013
    %v1120 = vrcp.pop %v1020
    %v1121 = vrcp.pop %v1027
    %v1122 = vrcp.pop %v1034
    %v1123 = vrcp.pop %v1041
    %v1124 = vrcp.pop %v1048
    %v1125 = vrcp.pop %v1055
    %v1126 = vrcp.pop %v1062
    %v1127 = vrcp.pop %v1069
    %v1128 = vrcp.pop %v1076
    %v1129 = vrcp.pop %v1083
    %v1130 = vrcp.pop %v1090
    %v1131 = vrcp.pop %v1097
    %v1132 = vrcp.pop %v1104
    %v1133 = vrcp.pop %v1111
    %v1134 = vrcp.pop %v1118
    %v1135 = vmul.f32 %v976, %v1119
    %v1136 = vmul.f32 %v978, %v1120
    %v1137 = vmul.f32 %v980, %v1121
    %v1138 = vmul.f32 %v982, %v1122
    %v1139 = vmul.f32 %v984, %v1123
    %v1140 = vmul.f32 %v986, %v1124
    %v1141 = vmul.f32 %v988, %v1125
    %v1142 = vmul.f32 %v990, %v1126
    %v1143 = vmul.f32 %v992, %v1127
    %v1144 = vmul.f32 %v994, %v1128
    %v1145 = vmul.f32 %v996, %v1129
    %v1146 = vmul.f32 %v998, %v1130
    %v1147 = vmul.f32 %v1000, %v1131
    %v1148 = vmul.f32 %v1002, %v1132
    %v1149 = vmul.f32 %v1004, %v1133
    %v1150 = vmul.f32 %v1006, %v1134
    %v1151 = vld [vmem:[#allocation13] sm:$0xff]
    %v1153 = vsel %vm846, %v1135, 0
    %v1156 = vsel %vm846, %v1136, 0
    %v1159 = vsel %vm846, %v1137, 0
    %v1162 = vsel %vm846, %v1138, 0
    %v1165 = vsel %vm846, %v1139, 0
    %v1168 = vsel %vm846, %v1140, 0
    %v1171 = vsel %vm846, %v1141, 0
    %v1174 = vsel %vm846, %v1142, 0
    %v1177 = vsel %vm846, %v1143, 0
    %v1180 = vsel %vm846, %v1144, 0
    %v1183 = vsel %vm846, %v1145, 0
    %v1186 = vsel %vm846, %v1146, 0
    %v1189 = vsel %vm846, %v1147, 0
    %v1192 = vsel %vm846, %v1148, 0
    %v1195 = vsel %vm846, %v1149, 0
    %v1198 = vsel %vm846, %v1150, 0
    %1200 = vmatprep.subr.mxu0 0.0
    %1201 = vmatpush1.msra.mxu0 %v1151
    %1202 = vmatprep.subr.mxu0 0.0
    %1203 = vmatpush1.msra.mxu0 0.0
    %1204 = vmatprep.subr.mxu0 0.0
    %1205 = vmatpush1.msra.mxu0 0.0
    %1206 = vmatprep.subr.mxu0 0.0
    %1207 = vmatpush1.msra.mxu0 0.0
    %1208 = vmatprep.subr.mxu0 0.0
    %1209 = vmatpush1.msra.mxu0 0.0
    %1210 = vmatprep.subr.mxu0 0.0
    %1211 = vmatpush1.msra.mxu0 0.0
    %1212 = vmatprep.subr.mxu0 0.0
    %1213 = vmatpush1.msra.mxu0 0.0
    %1214 = vmatprep.subr.mxu0 0.0
    %1215 = vmatpush1.msra.mxu0 0.0
    %1216 = vmatprep.subr.mxu0 0.0
    %1217 = vmatpush1.msra.mxu0 0.0
    %1218 = vmatprep.subr.mxu0 0.0
    %1219 = vmatpush1.msra.mxu0 0.0
    %1220 = vmatprep.subr.mxu0 0.0
    %1221 = vmatpush1.msra.mxu0 0.0
    %1222 = vmatprep.subr.mxu0 0.0
    %1223 = vmatpush1.msra.mxu0 0.0
    %1224 = vmatprep.subr.mxu0 0.0
    %1225 = vmatpush1.msra.mxu0 0.0
    %1226 = vmatprep.subr.mxu0 0.0
    %1227 = vmatpush1.msra.mxu0 0.0
    %1228 = vmatprep.subr.mxu0 0.0
    %1229 = vmatpush1.msra.mxu0 0.0
    %1230 = vmatprep.subr.mxu0 0.0
    %1231 = vmatpush1.msra.mxu0 0.0
    %1232 = vmatprep.subr.mxu0 0.0
    %1233 = vmatpush1.msra.mxu0 0.0
    %1234 = vmatprep.subr.mxu0 0.0
    %1235 = vmatpush1.msra.mxu0 0.0
    %1236 = vmatprep.subr.mxu0 0.0
    %1237 = vmatpush1.msra.mxu0 0.0
    %1238 = vmatprep.subr.mxu0 0.0
    %1239 = vmatpush1.msra.mxu0 0.0
    %1240 = vmatprep.subr.mxu0 0.0
    %1241 = vmatpush1.msra.mxu0 0.0
    %1242 = vmatprep.subr.mxu0 0.0
    %1243 = vmatpush1.msra.mxu0 0.0
    %1244 = vmatprep.subr.mxu0 0.0
    %1245 = vmatpush1.msra.mxu0 0.0
    %1246 = vmatprep.subr.mxu0 0.0
    %1247 = vmatpush1.msra.mxu0 0.0
    %1248 = vmatprep.subr.mxu0 0.0
    %1249 = vmatpush1.msra.mxu0 0.0
    %1250 = vmatprep.subr.mxu0 0.0
    %1251 = vmatpush1.msra.mxu0 0.0
    %1252 = vmatprep.subr.mxu0 0.0
    %1253 = vmatpush1.msra.mxu0 0.0
    %1254 = vmatprep.subr.mxu0 0.0
    %1255 = vmatpush1.msra.mxu0 0.0
    %1256 = vmatprep.subr.mxu0 0.0
    %1257 = vmatpush1.msra.mxu0 0.0
    %1258 = vmatprep.subr.mxu0 0.0
    %1259 = vmatpush1.msra.mxu0 0.0
    %1260 = vmatprep.subr.mxu0 0.0
    %1261 = vmatpush1.msra.mxu0 0.0
    %1262 = vmatprep.subr.mxu0 0.0
    %1263 = vmatpush1.msra.mxu0 0.0
    %1264 = vmatprep.mubr.f32.mxu0 0.0
    %1265 = vmatmul.mubr.f32.gmra.mrb[0].mxu0 %v1153
    %v1266 = vpop.f32.mrb[0].mxu0
    %v1267 = vadd.f32 0.0, %v1266
    %v1268 = vpop.f32.mrb[0].mxu0
    %1269 = vmatprep.mubr.f32.mxu0 0.0
    %1270 = vmatmul.mubr.f32.gmra.mrb[0].mxu0 %v1156
    %v1271 = vpop.f32.mrb[0].mxu0
    %v1272 = vadd.f32 0.0, %v1271
    %v1273 = vpop.f32.mrb[0].mxu0
    %1274 = vmatprep.mubr.f32.mxu0 0.0
    %1275 = vmatmul.mubr.f32.gmra.mrb[0].mxu0 %v1159
    %v1276 = vpop.f32.mrb[0].mxu0
    %v1277 = vadd.f32 0.0, %v1276
    %v1278 = vpop.f32.mrb[0].mxu0
    %1279 = vmatprep.mubr.f32.mxu0 0.0
    %1280 = vmatmul.mubr.f32.gmra.mrb[0].mxu0 %v1162
    %v1281 = vpop.f32.mrb[0].mxu0
    %v1282 = vadd.f32 0.0, %v1281
    %v1283 = vpop.f32.mrb[0].mxu0
    %1284 = vmatprep.mubr.f32.mxu0 0.0
    %1285 = vmatmul.mubr.f32.gmra.mrb[0].mxu0 %v1165
    %v1286 = vpop.f32.mrb[0].mxu0
    %v1287 = vadd.f32 0.0, %v1286
    %v1288 = vpop.f32.mrb[0].mxu0
    %1289 = vmatprep.mubr.f32.mxu0 0.0
    %1290 = vmatmul.mubr.f32.gmra.mrb[0].mxu0 %v1168
    %v1291 = vpop.f32.mrb[0].mxu0
    %v1292 = vadd.f32 0.0, %v1291
    %v1293 = vpop.f32.mrb[0].mxu0
    %1294 = vmatprep.mubr.f32.mxu0 0.0
    %1295 = vmatmul.mubr.f32.gmra.mrb[0].mxu0 %v1171
    %v1296 = vpop.f32.mrb[0].mxu0
    %v1297 = vadd.f32 0.0, %v1296
    %v1298 = vpop.f32.mrb[0].mxu0
    %1299 = vmatprep.mubr.f32.mxu0 0.0
    %1300 = vmatmul.mubr.f32.gmra.mrb[0].mxu0 %v1174
    %v1301 = vpop.f32.mrb[0].mxu0
    %v1302 = vadd.f32 0.0, %v1301
    %v1303 = vpop.f32.mrb[0].mxu0
    %1304 = vmatprep.mubr.f32.mxu0 0.0
    %1305 = vmatmul.mubr.f32.gmra.mrb[0].mxu0 %v1177
    %v1306 = vpop.f32.mrb[0].mxu0
    %v1307 = vadd.f32 0.0, %v1306
    %v1308 = vpop.f32.mrb[0].mxu0
    %1309 = vmatprep.mubr.f32.mxu0 0.0
    %1310 = vmatmul.mubr.f32.gmra.mrb[0].mxu0 %v1180
    %v1311 = vpop.f32.mrb[0].mxu0
    %v1312 = vadd.f32 0.0, %v1311
    %v1313 = vpop.f32.mrb[0].mxu0
    %1314 = vmatprep.mubr.f32.mxu0 0.0
    %1315 = vmatmul.mubr.f32.gmra.mrb[0].mxu0 %v1183
    %v1316 = vpop.f32.mrb[0].mxu0
    %v1317 = vadd.f32 0.0, %v1316
    %v1318 = vpop.f32.mrb[0].mxu0
    %1319 = vmatprep.mubr.f32.mxu0 0.0
    %1320 = vmatmul.mubr.f32.gmra.mrb[0].mxu0 %v1186
    %v1321 = vpop.f32.mrb[0].mxu0
    %v1322 = vadd.f32 0.0, %v1321
    %v1323 = vpop.f32.mrb[0].mxu0
    %1324 = vmatprep.mubr.f32.mxu0 0.0
    %1325 = vmatmul.mubr.f32.gmra.mrb[0].mxu0 %v1189
    %v1326 = vpop.f32.mrb[0].mxu0
    %v1327 = vadd.f32 0.0, %v1326
    %v1328 = vpop.f32.mrb[0].mxu0
    %1329 = vmatprep.mubr.f32.mxu0 0.0
    %1330 = vmatmul.mubr.f32.gmra.mrb[0].mxu0 %v1192
    %v1331 = vpop.f32.mrb[0].mxu0
    %v1332 = vadd.f32 0.0, %v1331
    %v1333 = vpop.f32.mrb[0].mxu0
    %1334 = vmatprep.mubr.f32.mxu0 0.0
    %1335 = vmatmul.mubr.f32.gmra.mrb[0].mxu0 %v1195
    %v1336 = vpop.f32.mrb[0].mxu0
    %v1337 = vadd.f32 0.0, %v1336
    %v1338 = vpop.f32.mrb[0].mxu0
    %1339 = vmatprep.mubr.f32.mxu0 0.0
    %1340 = vmatmul.mubr.f32.gmra.mrb[0].mxu0 %v1198
    %v1341 = vpop.f32.mrb[0].mxu0
    %v1342 = vadd.f32 0.0, %v1341
    %v1343 = vpop.f32.mrb[0].mxu0
    %1344 = vdwg.mxu0
    %v1345 = vmul.f32 %v1267, %v397
    %v1346 = vmul.f32 %v1272, %v403
    %v1347 = vmul.f32 %v1277, %v409
    %v1348 = vmul.f32 %v1282, %v415
    %v1349 = vmul.f32 %v1287, %v421
    %v1350 = vmul.f32 %v1292, %v427
    %v1351 = vmul.f32 %v1297, %v433
    %v1352 = vmul.f32 %v1302, %v439
    %v1353 = vmul.f32 %v1307, %v445
    %v1354 = vmul.f32 %v1312, %v451
    %v1355 = vmul.f32 %v1317, %v457
    %v1356 = vmul.f32 %v1322, %v463
    %v1357 = vmul.f32 %v1327, %v469
    %v1358 = vmul.f32 %v1332, %v475
    %v1359 = vmul.f32 %v1337, %v481
    %v1360 = vmul.f32 %v1342, %v487
    %v1361 = vrot.slane %v1345, 4
    %v1362 = vadd.f32 %v1345, %v1361
    %v1363 = vrot.slane %v1362, 2
    %v1364 = vadd.f32 %v1362, %v1363
    %v1365 = vrot.slane %v1364, 1
    %v1366 = vadd.f32 %v1364, %v1365
    %v1367 = vrot.slane %v1346, 4
    %v1368 = vadd.f32 %v1346, %v1367
    %v1369 = vrot.slane %v1368, 2
    %v1370 = vadd.f32 %v1368, %v1369
    %v1371 = vrot.slane %v1370, 1
    %v1372 = vadd.f32 %v1370, %v1371
    %v1373 = vrot.slane %v1347, 4
    %v1374 = vadd.f32 %v1347, %v1373
    %v1375 = vrot.slane %v1374, 2
    %v1376 = vadd.f32 %v1374, %v1375
    %v1377 = vrot.slane %v1376, 1
    %v1378 = vadd.f32 %v1376, %v1377
    %v1379 = vrot.slane %v1348, 4
    %v1380 = vadd.f32 %v1348, %v1379
    %v1381 = vrot.slane %v1380, 2
    %v1382 = vadd.f32 %v1380, %v1381
    %v1383 = vrot.slane %v1382, 1
    %v1384 = vadd.f32 %v1382, %v1383
    %v1385 = vrot.slane %v1349, 4
    %v1386 = vadd.f32 %v1349, %v1385
    %v1387 = vrot.slane %v1386, 2
    %v1388 = vadd.f32 %v1386, %v1387
    %v1389 = vrot.slane %v1388, 1
    %v1390 = vadd.f32 %v1388, %v1389
    %v1391 = vrot.slane %v1350, 4
    %v1392 = vadd.f32 %v1350, %v1391
    %v1393 = vrot.slane %v1392, 2
    %v1394 = vadd.f32 %v1392, %v1393
    %v1395 = vrot.slane %v1394, 1
    %v1396 = vadd.f32 %v1394, %v1395
    %v1397 = vrot.slane %v1351, 4
    %v1398 = vadd.f32 %v1351, %v1397
    %v1399 = vrot.slane %v1398, 2
    %v1400 = vadd.f32 %v1398, %v1399
    %v1401 = vrot.slane %v1400, 1
    %v1402 = vadd.f32 %v1400, %v1401
    %v1403 = vrot.slane %v1352, 4
    %v1404 = vadd.f32 %v1352, %v1403
    %v1405 = vrot.slane %v1404, 2
    %v1406 = vadd.f32 %v1404, %v1405
    %v1407 = vrot.slane %v1406, 1
    %v1408 = vadd.f32 %v1406, %v1407
    %v1409 = vrot.slane %v1353, 4
    %v1410 = vadd.f32 %v1353, %v1409
    %v1411 = vrot.slane %v1410, 2
    %v1412 = vadd.f32 %v1410, %v1411
    %v1413 = vrot.slane %v1412, 1
    %v1414 = vadd.f32 %v1412, %v1413
    %v1415 = vrot.slane %v1354, 4
    %v1416 = vadd.f32 %v1354, %v1415
    %v1417 = vrot.slane %v1416, 2
    %v1418 = vadd.f32 %v1416, %v1417
    %v1419 = vrot.slane %v1418, 1
    %v1420 = vadd.f32 %v1418, %v1419
    %v1421 = vrot.slane %v1355, 4
    %v1422 = vadd.f32 %v1355, %v1421
    %v1423 = vrot.slane %v1422, 2
    %v1424 = vadd.f32 %v1422, %v1423
    %v1425 = vrot.slane %v1424, 1
    %v1426 = vadd.f32 %v1424, %v1425
    %v1427 = vrot.slane %v1356, 4
    %v1428 = vadd.f32 %v1356, %v1427
    %v1429 = vrot.slane %v1428, 2
    %v1430 = vadd.f32 %v1428, %v1429
    %v1431 = vrot.slane %v1430, 1
    %v1432 = vadd.f32 %v1430, %v1431
    %v1433 = vrot.slane %v1357, 4
    %v1434 = vadd.f32 %v1357, %v1433
    %v1435 = vrot.slane %v1434, 2
    %v1436 = vadd.f32 %v1434, %v1435
    %v1437 = vrot.slane %v1436, 1
    %v1438 = vadd.f32 %v1436, %v1437
    %v1439 = vrot.slane %v1358, 4
    %v1440 = vadd.f32 %v1358, %v1439
    %v1441 = vrot.slane %v1440, 2
    %v1442 = vadd.f32 %v1440, %v1441
    %v1443 = vrot.slane %v1442, 1
    %v1444 = vadd.f32 %v1442, %v1443
    %v1445 = vrot.slane %v1359, 4
    %v1446 = vadd.f32 %v1359, %v1445
    %v1447 = vrot.slane %v1446, 2
    %v1448 = vadd.f32 %v1446, %v1447
    %v1449 = vrot.slane %v1448, 1
    %v1450 = vadd.f32 %v1448, %v1449
    %v1451 = vrot.slane %v1360, 4
    %v1452 = vadd.f32 %v1360, %v1451
    %v1453 = vrot.slane %v1452, 2
    %v1454 = vadd.f32 %v1452, %v1453
    %v1455 = vrot.slane %v1454, 1
    %v1456 = vadd.f32 %v1454, %v1455
    %v1457 = vld [vmem:[#allocation8] sm:$0xff]
    %v1458 = vld [vmem:[#allocation8 + $0x8] sm:$0xff]
    %v1459 = vld [vmem:[#allocation8 + $0x10] sm:$0xff]
    %v1460 = vld [vmem:[#allocation8 + $0x18] sm:$0xff]
    %v1461 = vld [vmem:[#allocation8 + $0x20] sm:$0xff]
    %v1462 = vld [vmem:[#allocation8 + $0x28] sm:$0xff]
    %v1463 = vld [vmem:[#allocation8 + $0x30] sm:$0xff]
    %v1464 = vld [vmem:[#allocation8 + $0x38] sm:$0xff]
    %v1465 = vld [vmem:[#allocation8 + $0x40] sm:$0xff]
    %v1466 = vld [vmem:[#allocation8 + $0x48] sm:$0xff]
    %v1467 = vld [vmem:[#allocation8 + $0x50] sm:$0xff]
    %v1468 = vld [vmem:[#allocation8 + $0x58] sm:$0xff]
    %v1469 = vld [vmem:[#allocation8 + $0x60] sm:$0xff]
    %v1470 = vld [vmem:[#allocation8 + $0x68] sm:$0xff]
    %v1471 = vld [vmem:[#allocation8 + $0x70] sm:$0xff]
    %v1472 = vld [vmem:[#allocation8 + $0x78] sm:$0xff]
    %v1473 = vld [vmem:[#allocation10] sm:$0x1]
    %v1475 = vlaneseq
    %v1476 = vshrl.u32 %v1475, 7
    %v1477 = vsub.s32 0, %v1476
    %v1478 = vrot.slane %v1473, %v1477
    %v1496 = vsel %vm167, %v1372, %v1366
    %v1497 = vsel %vm170, %v1378, %v1496
    %v1498 = vsel %vm173, %v1384, %v1497
    %v1499 = vsel %vm176, %v1390, %v1498
    %v1500 = vsel %vm179, %v1396, %v1499
    %v1501 = vsel %vm182, %v1402, %v1500
    %v1502 = vsel %vm185, %v1408, %v1501
    %v1503 = vsel %vm167, %v1420, %v1414
    %v1504 = vsel %vm170, %v1426, %v1503
    %v1505 = vsel %vm173, %v1432, %v1504
    %v1506 = vsel %vm176, %v1438, %v1505
    %v1507 = vsel %vm179, %v1444, %v1506
    %v1508 = vsel %vm182, %v1450, %v1507
    %v1509 = vsel %vm185, %v1456, %v1508
    %1512 = vmatprep.subr.mxu0 0.0
    %1513 = vmatpush1.msra.mxu0 %v1457
    %1514 = vmatprep.subr.mxu0 0.0
    %1515 = vmatpush1.msra.mxu0 %v1458
    %1516 = vmatprep.subr.mxu0 0.0
    %1517 = vmatpush1.msra.mxu0 %v1459
    %1518 = vmatprep.subr.mxu0 0.0
    %1519 = vmatpush1.msra.mxu0 %v1460
    %1520 = vmatprep.subr.mxu0 0.0
    %1521 = vmatpush1.msra.mxu0 %v1461
    %1522 = vmatprep.subr.mxu0 0.0
    %1523 = vmatpush1.msra.mxu0 %v1462
    %1524 = vmatprep.subr.mxu0 0.0
    %1525 = vmatpush1.msra.mxu0 %v1463
    %1526 = vmatprep.subr.mxu0 0.0
    %1527 = vmatpush1.msra.mxu0 %v1464
    %1528 = vmatprep.subr.mxu0 0.0
    %1529 = vmatpush1.msra.mxu0 %v1465
    %1530 = vmatprep.subr.mxu0 0.0
    %1531 = vmatpush1.msra.mxu0 %v1466
    %1532 = vmatprep.subr.mxu0 0.0
    %1533 = vmatpush1.msra.mxu0 %v1467
    %1534 = vmatprep.subr.mxu0 0.0
    %1535 = vmatpush1.msra.mxu0 %v1468
    %1536 = vmatprep.subr.mxu0 0.0
    %1537 = vmatpush1.msra.mxu0 %v1469
    %1538 = vmatprep.subr.mxu0 0.0
    %1539 = vmatpush1.msra.mxu0 %v1470
    %1540 = vmatprep.subr.mxu0 0.0
    %1541 = vmatpush1.msra.mxu0 %v1471
    %1542 = vmatprep.subr.mxu0 0.0
    %1543 = vmatpush1.msra.mxu0 %v1472
    %1544 = vmatprep.subr.mxu0 0.0
    %1545 = vmatpush1.msra.mxu0 0.0
    %1546 = vmatprep.subr.mxu0 0.0
    %1547 = vmatpush1.msra.mxu0 0.0
    %1548 = vmatprep.subr.mxu0 0.0
    %1549 = vmatpush1.msra.mxu0 0.0
    %1550 = vmatprep.subr.mxu0 0.0
    %1551 = vmatpush1.msra.mxu0 0.0
    %1552 = vmatprep.subr.mxu0 0.0
    %1553 = vmatpush1.msra.mxu0 0.0
    %1554 = vmatprep.subr.mxu0 0.0
    %1555 = vmatpush1.msra.mxu0 0.0
    %1556 = vmatprep.subr.mxu0 0.0
    %1557 = vmatpush1.msra.mxu0 0.0
    %1558 = vmatprep.subr.mxu0 0.0
    %1559 = vmatpush1.msra.mxu0 0.0
    %1560 = vmatprep.subr.mxu0 0.0
    %1561 = vmatpush1.msra.mxu0 0.0
    %1562 = vmatprep.subr.mxu0 0.0
    %1563 = vmatpush1.msra.mxu0 0.0
    %1564 = vmatprep.subr.mxu0 0.0
    %1565 = vmatpush1.msra.mxu0 0.0
    %1566 = vmatprep.subr.mxu0 0.0
    %1567 = vmatpush1.msra.mxu0 0.0
    %1568 = vmatprep.subr.mxu0 0.0
    %1569 = vmatpush1.msra.mxu0 0.0
    %1570 = vmatprep.subr.mxu0 0.0
    %1571 = vmatpush1.msra.mxu0 0.0
    %1572 = vmatprep.subr.mxu0 0.0
    %1573 = vmatpush1.msra.mxu0 0.0
    %1574 = vmatprep.subr.mxu0 0.0
    %1575 = vmatpush1.msra.mxu0 0.0
    %1576 = vmatprep.mubr.f32.mxu0 0.0
    %1577 = vmatmul.mubr.f32.gmra.mrb[0].mxu0 %v1502
    %v1578 = vpop.f32.mrb[0].mxu0
    %v1579 = vadd.f32 %v1478, %v1578
    %v1580 = vpop.f32.mrb[0].mxu0
    %1581 = vmatprep.mubr.f32.mxu0 0.0
    %1582 = vmatmul.mubr.f32.gmra.mrb[0].mxu0 %v1509
    %v1583 = vpop.f32.mrb[0].mxu0
    %v1584 = vadd.f32 %v1478, %v1583
    %v1585 = vpop.f32.mrb[0].mxu0
    %1586 = vdwg.mxu0
    %1587 = vst [vmem:[#allocation14] sm:$0xff] %v1579
    %1588 = vst [vmem:[#allocation14 + $0x8] sm:$0xff] %v1584
    // Predicated region
    $region58: #{tpu_custom_call.1} parent=1 // pred_check
      _
    $region59: #{tpu_custom_call.1} parent=1 // pred_check_branch
      %1590 = sbr.rel (0) target = $region61
    $region60: #{tpu_custom_call.1} parent=1 // pred_region
      %s1592 = ssub.s32 256, 256
      %1593 = vsyncadd [#allocation4], %s1592
      %s1594 = sshll.u32 [#allocation14], 4
      %s1595 = int_to_ptr.vmem [resolvable:$true] %s1594
      %1600 = dma.vmem_to_hbm [thread:$0]  %s1595, 256, %s7, [#allocation4], 128, 128, 8
    $region61: #{tpu_custom_call.1} parent=1 // pred_fallthru
      _
    // Predicated region
    $region62: #{tpu_custom_call.1} parent=1 // pred_check
      _
    $region63: #{tpu_custom_call.1} parent=1 // pred_check_branch
      %1602 = sbr.rel (0) target = $region65
    $region64: #{tpu_custom_call.1} parent=1 // pred_region
      %1603 = dma.done [#allocation4], 256
    $region65: #{tpu_custom_call.1} parent=1 // pred_fallthru
      _
    %1604 = vsyncpa [#allocation3], 1
    %1605 = vsyncpa [#allocation6], 1
    %1606 = vsyncpa [#allocation9], 1
    %1607 = vsyncpa [#allocation12], 1
    %1608 = vsyncpa [#allocation4], 1

</llo_original>
